<compile_context>
chip_gen: v6e
topology: v6e:2x2x1
jax: 0.10.0
libtpu: 0.0.40
codegen_flags: <defaults>
</compile_context>

<pallas_src>
import functools

import jax
import jax.numpy as jnp
from jax import lax
from jax.experimental import pallas as pl
from jax.experimental.pallas import tpu as pltpu

_INV_LN2 = 1.4426950408889634       # 1 / ln(2)
_K_IM2COL = 128                     # padded im2col depth (27*cin + 1 <= 128 for cin <= 4)


# ----------------------------------------------------------------------------
# Fused Pallas kernel: compressor conv chain (im2col MXU) + BCE bits
# ----------------------------------------------------------------------------
def _fused_lossless_kernel(occ_ref, w_ref, bits_ref, quant_ref, cls_ref,
                           im2col_ref, *, nc, pc, hidden):
    """Single-program fused forward.

    occ_ref   : (1, pc^3)        f32 VMEM  stride-4 occupancy, zero-halo padded flat
    w_ref     : (24, 128)        f32 VMEM  all conv weights+biases, lane-dense slab
    bits_ref  : (1, 1)           f32 SMEM  output: estimated bits
    quant_ref : (c, pc^3)        f32 VMEM  output: quantized latent (padded flat)
    cls_ref   : (1, pc^3)        f32 VMEM  output: occupancy logits (padded flat)
    im2col_ref: (128, pc^3)      f32 VMEM  scratch: rolled-tap stack (+ bias row)
    """
    npad = pc * pc * pc
    c = hidden
    lp = pc.bit_length() - 1                       # log2(pc); pc is a power of two

    # Interior (non-halo) mask generated in-kernel (compile-time function of nc/pc):
    # a few integer shift/and/compare VPU ops instead of an input DMA + VMEM buffer.
    idx = lax.broadcasted_iota(jnp.int32, (1, npad), 1)
    dd = idx >> (2 * lp)
    hh = (idx >> lp) & (pc - 1)
    ww = idx & (pc - 1)
    interior = ((dd >= 1) & (dd <= nc) & (hh >= 1) & (hh <= nc)
                & (ww >= 1) & (ww <= nc))
    mask = interior.astype(jnp.float32)            # (1, npad)

    # Zero the im2col scratch once: rows beyond each layer's 27*cin+1 stay zero.
    # (Their weight columns are zero too, but stale VMEM could hold NaN/Inf.)
    im2col_ref[...] = jnp.zeros_like(im2col_ref)

    def conv3x3x3(x, wrow, cout, act):
        # 'same' 3x3x3 conv on the zero-halo'd coarse grid via im2col + one MXU
        # matmul.  Every tap is a single uniform flat pltpu.roll (XLU slot);
        # out-of-range neighbours read the zero halo, so no jnp.pad / shifted
        # masked loads are needed.
        # CORRECTNESS NOTE: this relies on pc >= nc + 2 (halo >= 1 on every side)
        # and on `* mask` being re-applied after EVERY layer, so wrapped-roll
        # garbage in the halo never feeds the next layer's taps.
        cin = x.shape[0]
        t = 0
        for kd in (-1, 0, 1):
            for kh in (-1, 0, 1):
                for kw in (-1, 0, 1):
                    off = kd * pc * pc + kh * pc + kw
                    xt = x if off == 0 else pltpu.roll(x, (-off) % npad, axis=1)
                    im2col_ref[t * cin:(t + 1) * cin, :] = xt
                    t += 1
        im2col_ref[27 * cin:27 * cin + 1, :] = mask          # bias ("ones") row
        # (8,128) x (128, npad) MXU matmul, f32 accumulation; weight rows >= cout
        # and columns >= 27*cin+1 are zero in the slab.
        y = jnp.dot(w_ref[wrow:wrow + 8, :], im2col_ref[...],
                    preferred_element_type=jnp.float32)[0:cout, :]
        if act == "relu":
            y = jnp.maximum(y, 0.0)
        elif act == "round":
            y = jnp.round(y)
        return y * mask                                      # re-zero the halo

    # --- LosslessCompressor stand-in: analysis conv -> quantize -> classifier ---
    occ = occ_ref[...]                                       # ones on ref2's coord set
    quant = conv3x3x3(occ, 0, c, "round")                    # quantized latent
    hdn = conv3x3x3(quant, 8, c, "relu")
    cls = conv3x3x3(hdn, 16, 1, None)                        # occupancy logits

    # --- analytic cross-entropy bit estimate over the coarse voxel set ---
    z = cls
    sp = jnp.maximum(z, 0.0) + jnp.log(1.0 + jnp.exp(-jnp.abs(z)))   # softplus(z)
    bce_nats = occ * (sp - z) + (1.0 - occ) * sp
    bits_ref[0, 0] = jnp.sum(bce_nats * mask) * _INV_LN2

    quant_ref[...] = quant
    cls_ref[...] = cls


# ----------------------------------------------------------------------------
# Wrapper helpers (pure layout / coordinate bookkeeping, done in plain JAX)
# ----------------------------------------------------------------------------
def _maxpool2(occ):
    """2x2x2 occupancy pooling = output coordinate set of a stride-2 sparse conv."""
    D, H, W = occ.shape
    return occ.reshape(D // 2, 2, H // 2, 2, W // 2, 2).max(axis=(1, 3, 5))


def _next_pow2(n):
    return 1 << (n - 1).bit_length()


def _pack_layer(w, b):
    """(cout, cin, 3,3,3) weights + (cout,) bias -> one (8, 128) lane-dense tile.

    Column t*cin + ch holds w[:, ch, kd, kh, kw] with t = 9*(kd+1)+3*(kh+1)+(kw+1)
    (matching the kernel's tap-write order); column 27*cin holds the bias (matched
    by the in-kernel ones/mask im2col row). Remaining rows/columns are zero.
    """
    cout, cin = w.shape[:2]
    w2 = jnp.transpose(w.reshape(cout, cin, 27), (0, 2, 1)).reshape(cout, 27 * cin)
    w2 = jnp.concatenate([w2, b.reshape(cout, 1)], axis=1)
    tile = jnp.zeros((8, _K_IM2COL), jnp.float32)
    return tile.at[:cout, :w2.shape[1]].set(w2)


class GetModelPallas:
    """JAX/Pallas re-implementation of DDPCC_lossless_coder.get_model."""

    def __init__(self, channels=8, hidden=4, key=jax.random.PRNGKey(42)):
        del channels  # unused by the original module body as well
        ks = jax.random.split(key, 5)
        s = 0.5
        c = hidden
        self.hidden = c
        # EncoderLayer(1,1,1,3) x2 parameters: kept for parity with the torch module;
        # their feature outputs are provably unused by the forward (module-level NOTE).
        self.ref1_w = jax.random.normal(ks[0], (1, 1, 3, 3, 3), jnp.float32) * s
        self.ref1_b = jnp.zeros((1,), jnp.float32)
        self.ref2_w = jax.random.normal(ks[1], (1, 1, 3, 3, 3), jnp.float32) * s
        self.ref2_b = jnp.zeros((1,), jnp.float32)
        # LosslessCompressor stand-in (source not provided): analysis conv ->
        # quantize -> classifier with an analytic cross-entropy bit count.
        ca_w = jax.random.normal(ks[2], (c, 1, 3, 3, 3), jnp.float32) * s
        cb_w = jax.random.normal(ks[3], (c, c, 3, 3, 3), jnp.float32) * (s / c)
        cc_w = jax.random.normal(ks[4], (1, c, 3, 3, 3), jnp.float32) * (s / c)
        zeros = lambda n: jnp.zeros((n,), jnp.float32)
        # Single lane-dense (24, 128) weight slab: ONE DMA for all conv weights and
        # biases (rows 0:8 layer a, 8:16 layer b, 16:24 classifier).
        self.w_slab = jnp.concatenate(
            [_pack_layer(ca_w, zeros(c)),
             _pack_layer(cb_w, zeros(c)),
             _pack_layer(cc_w, zeros(1))], axis=0)

    def __call__(self, f1_occ, f2_occ):
        del f1_occ  # f1 / device / epoch are unused by the original forward as well
        c = self.hidden
        # Binarize: ME point-cloud semantics depend only on the occupied coordinate
        # set, not on feature values (keeps num_points exact for non-binary inputs).
        f2 = (f2_occ > 0).astype(jnp.float32)
        G = f2.shape[0]
        assert G % 4 == 0 and G >= 8

        # --- sparse coordinate bookkeeping (ME coordinate-manager stand-in) ---
        # num_points is computed here so XLA fuses it into the pooling pass that
        # already streams f2; the kernel never re-reads f2 from HBM.
        num_points = jnp.maximum(jnp.sum(f2), 1.0)   # guard: empty cloud -> no NaN/Inf
        occ2 = _maxpool2(f2)        # ref1.C : stride-2 coordinate set
        occ4 = _maxpool2(occ2)      # ref2.C : stride-4 coordinate set (ones features)
        target = occ4

        nc = G // 4                       # coarse grid extent (4 for G=16)
        pc = _next_pow2(nc + 2)           # power-of-two padded extent (8 for G=16)
        assert pc >= nc + 2 and (pc & (pc - 1)) == 0   # halo >= 1 on every side
        assert 27 * c + 1 <= _K_IM2COL
        npad = pc * pc * pc               # padded-flat (lane) axis, 512 for G=16

        # --- lane-dense layout plumbing (done once, in the wrapper) ---
        occ4p = (jnp.zeros((pc, pc, pc), jnp.float32)
                 .at[1:nc + 1, 1:nc + 1, 1:nc + 1].set(occ4)
                 .reshape(1, npad))

        kern = functools.partial(_fused_lossless_kernel, nc=nc, pc=pc, hidden=c)
        vmem = pl.BlockSpec(memory_space=pltpu.MemorySpace.VMEM)
        smem = pl.BlockSpec(memory_space=pltpu.MemorySpace.SMEM)
        bits, quant_p, cls_p = pl.pallas_call(
            kern,
            out_shape=(jax.ShapeDtypeStruct((1, 1), jnp.float32),
                       jax.ShapeDtypeStruct((c, npad), jnp.float32),
                       jax.ShapeDtypeStruct((1, npad), jnp.float32)),
            in_specs=[vmem, vmem],
            out_specs=(smem, vmem, vmem),
            scratch_shapes=[pltpu.VMEM((_K_IM2COL, npad), jnp.float32)],
        )(occ4p, self.w_slab)

        bpp = bits[0, 0] / num_points     # scalar divide in the wrapper

        # un-embed the lane-dense slabs back to (*, nc, nc, nc)  (layout plumbing)
        quant = quant_p.reshape(c, pc, pc, pc)[:, 1:nc + 1, 1:nc + 1, 1:nc + 1]
        cls = cls_p.reshape(1, pc, pc, pc)[:, 1:nc + 1, 1:nc + 1, 1:nc + 1]
        return bpp, quant, cls, target


# ----------------------------------------------------------------------------
# Demo
# ----------------------------------------------------------------------------
if __name__ == "__main__":
    G = 16
    key = jax.random.PRNGKey(0)
    k1, k2 = jax.random.split(key)
    # dense binary occupancy grids standing in for ME.SparseTensor point clouds
    f1 = (jax.random.uniform(k1, (G, G, G)) < 0.15).astype(jnp.float32)
    f2 = (jax.random.uniform(k2, (G, G, G)) < 0.15).astype(jnp.float32)

    model = GetModelPallas(channels=8, hidden=4)
    fwd = jax.jit(model.__call__)
    bpp, quant, cls, target = fwd(f1, f2)
    jax.block_until_ready((bpp, quant, cls, target))

    assert bpp.shape == ()
    assert quant.shape == (4, G // 4, G // 4, G // 4)
    assert cls.shape == (1, G // 4, G // 4, G // 4)
    assert target.shape == (G // 4, G // 4, G // 4)
    assert bool(jnp.isfinite(bpp))
    assert bool(jnp.all(jnp.isfinite(quant)))
    assert bool(jnp.all(jnp.isfinite(cls)))
    print("KERNEL_OK")
</pallas_src>

<mosaic_0001>
module attributes {stable_mosaic.version = 11 : i64} {
  func.func @_fused_lossless_kernel(%arg0: memref<1x512xf32, #tpu.memory_space<vmem>>, %arg1: memref<24x128xf32, #tpu.memory_space<vmem>>, %arg2: memref<1x1xf32, #tpu.memory_space<smem>>, %arg3: memref<4x512xf32, #tpu.memory_space<vmem>>, %arg4: memref<1x512xf32, #tpu.memory_space<vmem>>, %arg5: memref<128x512xf32, #tpu.memory_space<vmem>>) attributes {dimension_semantics = [], scalar_prefetch = 0 : i64, scratch_operands = 1 : i64, tpu.core_type = #tpu.core_type<tc>} {
    %0 = tpu.iota {dimensions = array<i32: 1>} : vector<1x512xi32>
    %c6_i32 = arith.constant 6 : i32
    %1 = vector.broadcast %c6_i32 : i32 to vector<1x512xi32>
    %2 = arith.shrsi %0, %1 : vector<1x512xi32>
    %c3_i32 = arith.constant 3 : i32
    %3 = vector.broadcast %c3_i32 : i32 to vector<1x512xi32>
    %4 = arith.shrsi %0, %3 : vector<1x512xi32>
    %c7_i32 = arith.constant 7 : i32
    %5 = vector.broadcast %c7_i32 : i32 to vector<1x512xi32>
    %6 = arith.andi %4, %5 : vector<1x512xi32>
    %c7_i32_0 = arith.constant 7 : i32
    %7 = vector.broadcast %c7_i32_0 : i32 to vector<1x512xi32>
    %8 = arith.andi %0, %7 : vector<1x512xi32>
    %c1_i32 = arith.constant 1 : i32
    %9 = vector.broadcast %c1_i32 : i32 to vector<1x512xi32>
    %10 = arith.cmpi sge, %2, %9 : vector<1x512xi32>
    %c4_i32 = arith.constant 4 : i32
    %11 = vector.broadcast %c4_i32 : i32 to vector<1x512xi32>
    %12 = arith.cmpi sle, %2, %11 : vector<1x512xi32>
    %13 = arith.andi %10, %12 : vector<1x512xi1>
    %c1_i32_1 = arith.constant 1 : i32
    %14 = vector.broadcast %c1_i32_1 : i32 to vector<1x512xi32>
    %15 = arith.cmpi sge, %6, %14 : vector<1x512xi32>
    %16 = arith.andi %13, %15 : vector<1x512xi1>
    %c4_i32_2 = arith.constant 4 : i32
    %17 = vector.broadcast %c4_i32_2 : i32 to vector<1x512xi32>
    %18 = arith.cmpi sle, %6, %17 : vector<1x512xi32>
    %19 = arith.andi %16, %18 : vector<1x512xi1>
    %c1_i32_3 = arith.constant 1 : i32
    %20 = vector.broadcast %c1_i32_3 : i32 to vector<1x512xi32>
    %21 = arith.cmpi sge, %8, %20 : vector<1x512xi32>
    %22 = arith.andi %19, %21 : vector<1x512xi1>
    %c4_i32_4 = arith.constant 4 : i32
    %23 = vector.broadcast %c4_i32_4 : i32 to vector<1x512xi32>
    %24 = arith.cmpi sle, %8, %23 : vector<1x512xi32>
    %25 = arith.andi %22, %24 : vector<1x512xi1>
    %26 = arith.extui %25 : vector<1x512xi1> to vector<1x512xi32>
    %27 = arith.sitofp %26 : vector<1x512xi32> to vector<1x512xf32>
    %cst = arith.constant 0.000000e+00 : f32
    %28 = vector.broadcast %cst : f32 to vector<128x512xf32>
    %c0 = arith.constant 0 : index
    %c0_5 = arith.constant 0 : index
    %29 = vector.load %arg5[%c0, %c0_5] : memref<128x512xf32, #tpu.memory_space<vmem>>, vector<128x512xf32>
    tpu.vector_store %arg5[%c0, %c0_5], %28 {strides = array<i32>} : memref<128x512xf32, #tpu.memory_space<vmem>>, vector<128x512xf32>,
    %c0_6 = arith.constant 0 : index
    %c0_7 = arith.constant 0 : index
    %30 = vector.load %arg0[%c0_6, %c0_7] : memref<1x512xf32, #tpu.memory_space<vmem>>, vector<1x512xf32>
    %c73_i32 = arith.constant 73 : i32
    %31 = tpu.dynamic_rotate %30 by %c73_i32 dim 1 : vector<1x512xf32>, i32 -> vector<1x512xf32>
    %c0_8 = arith.constant 0 : index
    %c0_9 = arith.constant 0 : index
    %32 = vector.load %arg5[%c0_8, %c0_9] : memref<128x512xf32, #tpu.memory_space<vmem>>, vector<1x512xf32>
    tpu.vector_store %arg5[%c0_8, %c0_9], %31 {strides = array<i32>} : memref<128x512xf32, #tpu.memory_space<vmem>>, vector<1x512xf32>,
    %c72_i32 = arith.constant 72 : i32
    %33 = tpu.dynamic_rotate %30 by %c72_i32 dim 1 : vector<1x512xf32>, i32 -> vector<1x512xf32>
    %c1 = arith.constant 1 : index
    %c0_10 = arith.constant 0 : index
    %34 = vector.load %arg5[%c1, %c0_10] : memref<128x512xf32, #tpu.memory_space<vmem>>, vector<1x512xf32>
    tpu.vector_store %arg5[%c1, %c0_10], %33 {strides = array<i32>} : memref<128x512xf32, #tpu.memory_space<vmem>>, vector<1x512xf32>,
    %c71_i32 = arith.constant 71 : i32
    %35 = tpu.dynamic_rotate %30 by %c71_i32 dim 1 : vector<1x512xf32>, i32 -> vector<1x512xf32>
    %c2 = arith.constant 2 : index
    %c0_11 = arith.constant 0 : index
    %36 = vector.load %arg5[%c2, %c0_11] : memref<128x512xf32, #tpu.memory_space<vmem>>, vector<1x512xf32>
    tpu.vector_store %arg5[%c2, %c0_11], %35 {strides = array<i32>} : memref<128x512xf32, #tpu.memory_space<vmem>>, vector<1x512xf32>,
    %c65_i32 = arith.constant 65 : i32
    %37 = tpu.dynamic_rotate %30 by %c65_i32 dim 1 : vector<1x512xf32>, i32 -> vector<1x512xf32>
    %c3 = arith.constant 3 : index
    %c0_12 = arith.constant 0 : index
    %38 = vector.load %arg5[%c3, %c0_12] : memref<128x512xf32, #tpu.memory_space<vmem>>, vector<1x512xf32>
    tpu.vector_store %arg5[%c3, %c0_12], %37 {strides = array<i32>} : memref<128x512xf32, #tpu.memory_space<vmem>>, vector<1x512xf32>,
    %c64_i32 = arith.constant 64 : i32
    %39 = tpu.dynamic_rotate %30 by %c64_i32 dim 1 : vector<1x512xf32>, i32 -> vector<1x512xf32>
    %c4 = arith.constant 4 : index
    %c0_13 = arith.constant 0 : index
    %40 = vector.load %arg5[%c4, %c0_13] : memref<128x512xf32, #tpu.memory_space<vmem>>, vector<1x512xf32>
    tpu.vector_store %arg5[%c4, %c0_13], %39 {strides = array<i32>} : memref<128x512xf32, #tpu.memory_space<vmem>>, vector<1x512xf32>,
    %c63_i32 = arith.constant 63 : i32
    %41 = tpu.dynamic_rotate %30 by %c63_i32 dim 1 : vector<1x512xf32>, i32 -> vector<1x512xf32>
    %c5 = arith.constant 5 : index
    %c0_14 = arith.constant 0 : index
    %42 = vector.load %arg5[%c5, %c0_14] : memref<128x512xf32, #tpu.memory_space<vmem>>, vector<1x512xf32>
    tpu.vector_store %arg5[%c5, %c0_14], %41 {strides = array<i32>} : memref<128x512xf32, #tpu.memory_space<vmem>>, vector<1x512xf32>,
    %c57_i32 = arith.constant 57 : i32
    %43 = tpu.dynamic_rotate %30 by %c57_i32 dim 1 : vector<1x512xf32>, i32 -> vector<1x512xf32>
    %c6 = arith.constant 6 : index
    %c0_15 = arith.constant 0 : index
    %44 = vector.load %arg5[%c6, %c0_15] : memref<128x512xf32, #tpu.memory_space<vmem>>, vector<1x512xf32>
    tpu.vector_store %arg5[%c6, %c0_15], %43 {strides = array<i32>} : memref<128x512xf32, #tpu.memory_space<vmem>>, vector<1x512xf32>,
    %c56_i32 = arith.constant 56 : i32
    %45 = tpu.dynamic_rotate %30 by %c56_i32 dim 1 : vector<1x512xf32>, i32 -> vector<1x512xf32>
    %c7 = arith.constant 7 : index
    %c0_16 = arith.constant 0 : index
    %46 = vector.load %arg5[%c7, %c0_16] : memref<128x512xf32, #tpu.memory_space<vmem>>, vector<1x512xf32>
    tpu.vector_store %arg5[%c7, %c0_16], %45 {strides = array<i32>} : memref<128x512xf32, #tpu.memory_space<vmem>>, vector<1x512xf32>,
    %c55_i32 = arith.constant 55 : i32
    %47 = tpu.dynamic_rotate %30 by %c55_i32 dim 1 : vector<1x512xf32>, i32 -> vector<1x512xf32>
    %c8 = arith.constant 8 : index
    %c0_17 = arith.constant 0 : index
    %48 = vector.load %arg5[%c8, %c0_17] : memref<128x512xf32, #tpu.memory_space<vmem>>, vector<1x512xf32>
    tpu.vector_store %arg5[%c8, %c0_17], %47 {strides = array<i32>} : memref<128x512xf32, #tpu.memory_space<vmem>>, vector<1x512xf32>,
    %c9_i32 = arith.constant 9 : i32
    %49 = tpu.dynamic_rotate %30 by %c9_i32 dim 1 : vector<1x512xf32>, i32 -> vector<1x512xf32>
    %c9 = arith.constant 9 : index
    %c0_18 = arith.constant 0 : index
    %50 = vector.load %arg5[%c9, %c0_18] : memref<128x512xf32, #tpu.memory_space<vmem>>, vector<1x512xf32>
    tpu.vector_store %arg5[%c9, %c0_18], %49 {strides = array<i32>} : memref<128x512xf32, #tpu.memory_space<vmem>>, vector<1x512xf32>,
    %c8_i32 = arith.constant 8 : i32
    %51 = tpu.dynamic_rotate %30 by %c8_i32 dim 1 : vector<1x512xf32>, i32 -> vector<1x512xf32>
    %c10 = arith.constant 10 : index
    %c0_19 = arith.constant 0 : index
    %52 = vector.load %arg5[%c10, %c0_19] : memref<128x512xf32, #tpu.memory_space<vmem>>, vector<1x512xf32>
    tpu.vector_store %arg5[%c10, %c0_19], %51 {strides = array<i32>} : memref<128x512xf32, #tpu.memory_space<vmem>>, vector<1x512xf32>,
    %c7_i32_20 = arith.constant 7 : i32
    %53 = tpu.dynamic_rotate %30 by %c7_i32_20 dim 1 : vector<1x512xf32>, i32 -> vector<1x512xf32>
    %c11 = arith.constant 11 : index
    %c0_21 = arith.constant 0 : index
    %54 = vector.load %arg5[%c11, %c0_21] : memref<128x512xf32, #tpu.memory_space<vmem>>, vector<1x512xf32>
    tpu.vector_store %arg5[%c11, %c0_21], %53 {strides = array<i32>} : memref<128x512xf32, #tpu.memory_space<vmem>>, vector<1x512xf32>,
    %c1_i32_22 = arith.constant 1 : i32
    %55 = tpu.dynamic_rotate %30 by %c1_i32_22 dim 1 : vector<1x512xf32>, i32 -> vector<1x512xf32>
    %c12 = arith.constant 12 : index
    %c0_23 = arith.constant 0 : index
    %56 = vector.load %arg5[%c12, %c0_23] : memref<128x512xf32, #tpu.memory_space<vmem>>, vector<1x512xf32>
    tpu.vector_store %arg5[%c12, %c0_23], %55 {strides = array<i32>} : memref<128x512xf32, #tpu.memory_space<vmem>>, vector<1x512xf32>,
    %c13 = arith.constant 13 : index
    %c0_24 = arith.constant 0 : index
    %57 = vector.load %arg5[%c13, %c0_24] : memref<128x512xf32, #tpu.memory_space<vmem>>, vector<1x512xf32>
    tpu.vector_store %arg5[%c13, %c0_24], %30 {strides = array<i32>} : memref<128x512xf32, #tpu.memory_space<vmem>>, vector<1x512xf32>,
    %c511_i32 = arith.constant 511 : i32
    %58 = tpu.dynamic_rotate %30 by %c511_i32 dim 1 : vector<1x512xf32>, i32 -> vector<1x512xf32>
    %c14 = arith.constant 14 : index
    %c0_25 = arith.constant 0 : index
    %59 = vector.load %arg5[%c14, %c0_25] : memref<128x512xf32, #tpu.memory_space<vmem>>, vector<1x512xf32>
    tpu.vector_store %arg5[%c14, %c0_25], %58 {strides = array<i32>} : memref<128x512xf32, #tpu.memory_space<vmem>>, vector<1x512xf32>,
    %c505_i32 = arith.constant 505 : i32
    %60 = tpu.dynamic_rotate %30 by %c505_i32 dim 1 : vector<1x512xf32>, i32 -> vector<1x512xf32>
    %c15 = arith.constant 15 : index
    %c0_26 = arith.constant 0 : index
    %61 = vector.load %arg5[%c15, %c0_26] : memref<128x512xf32, #tpu.memory_space<vmem>>, vector<1x512xf32>
    tpu.vector_store %arg5[%c15, %c0_26], %60 {strides = array<i32>} : memref<128x512xf32, #tpu.memory_space<vmem>>, vector<1x512xf32>,
    %c504_i32 = arith.constant 504 : i32
    %62 = tpu.dynamic_rotate %30 by %c504_i32 dim 1 : vector<1x512xf32>, i32 -> vector<1x512xf32>
    %c16 = arith.constant 16 : index
    %c0_27 = arith.constant 0 : index
    %63 = vector.load %arg5[%c16, %c0_27] : memref<128x512xf32, #tpu.memory_space<vmem>>, vector<1x512xf32>
    tpu.vector_store %arg5[%c16, %c0_27], %62 {strides = array<i32>} : memref<128x512xf32, #tpu.memory_space<vmem>>, vector<1x512xf32>,
    %c503_i32 = arith.constant 503 : i32
    %64 = tpu.dynamic_rotate %30 by %c503_i32 dim 1 : vector<1x512xf32>, i32 -> vector<1x512xf32>
    %c17 = arith.constant 17 : index
    %c0_28 = arith.constant 0 : index
    %65 = vector.load %arg5[%c17, %c0_28] : memref<128x512xf32, #tpu.memory_space<vmem>>, vector<1x512xf32>
    tpu.vector_store %arg5[%c17, %c0_28], %64 {strides = array<i32>} : memref<128x512xf32, #tpu.memory_space<vmem>>, vector<1x512xf32>,
    %c457_i32 = arith.constant 457 : i32
    %66 = tpu.dynamic_rotate %30 by %c457_i32 dim 1 : vector<1x512xf32>, i32 -> vector<1x512xf32>
    %c18 = arith.constant 18 : index
    %c0_29 = arith.constant 0 : index
    %67 = vector.load %arg5[%c18, %c0_29] : memref<128x512xf32, #tpu.memory_space<vmem>>, vector<1x512xf32>
    tpu.vector_store %arg5[%c18, %c0_29], %66 {strides = array<i32>} : memref<128x512xf32, #tpu.memory_space<vmem>>, vector<1x512xf32>,
    %c456_i32 = arith.constant 456 : i32
    %68 = tpu.dynamic_rotate %30 by %c456_i32 dim 1 : vector<1x512xf32>, i32 -> vector<1x512xf32>
    %c19 = arith.constant 19 : index
    %c0_30 = arith.constant 0 : index
    %69 = vector.load %arg5[%c19, %c0_30] : memref<128x512xf32, #tpu.memory_space<vmem>>, vector<1x512xf32>
    tpu.vector_store %arg5[%c19, %c0_30], %68 {strides = array<i32>} : memref<128x512xf32, #tpu.memory_space<vmem>>, vector<1x512xf32>,
    %c455_i32 = arith.constant 455 : i32
    %70 = tpu.dynamic_rotate %30 by %c455_i32 dim 1 : vector<1x512xf32>, i32 -> vector<1x512xf32>
    %c20 = arith.constant 20 : index
    %c0_31 = arith.constant 0 : index
    %71 = vector.load %arg5[%c20, %c0_31] : memref<128x512xf32, #tpu.memory_space<vmem>>, vector<1x512xf32>
    tpu.vector_store %arg5[%c20, %c0_31], %70 {strides = array<i32>} : memref<128x512xf32, #tpu.memory_space<vmem>>, vector<1x512xf32>,
    %c449_i32 = arith.constant 449 : i32
    %72 = tpu.dynamic_rotate %30 by %c449_i32 dim 1 : vector<1x512xf32>, i32 -> vector<1x512xf32>
    %c21 = arith.constant 21 : index
    %c0_32 = arith.constant 0 : index
    %73 = vector.load %arg5[%c21, %c0_32] : memref<128x512xf32, #tpu.memory_space<vmem>>, vector<1x512xf32>
    tpu.vector_store %arg5[%c21, %c0_32], %72 {strides = array<i32>} : memref<128x512xf32, #tpu.memory_space<vmem>>, vector<1x512xf32>,
    %c448_i32 = arith.constant 448 : i32
    %74 = tpu.dynamic_rotate %30 by %c448_i32 dim 1 : vector<1x512xf32>, i32 -> vector<1x512xf32>
    %c22 = arith.constant 22 : index
    %c0_33 = arith.constant 0 : index
    %75 = vector.load %arg5[%c22, %c0_33] : memref<128x512xf32, #tpu.memory_space<vmem>>, vector<1x512xf32>
    tpu.vector_store %arg5[%c22, %c0_33], %74 {strides = array<i32>} : memref<128x512xf32, #tpu.memory_space<vmem>>, vector<1x512xf32>,
    %c447_i32 = arith.constant 447 : i32
    %76 = tpu.dynamic_rotate %30 by %c447_i32 dim 1 : vector<1x512xf32>, i32 -> vector<1x512xf32>
    %c23 = arith.constant 23 : index
    %c0_34 = arith.constant 0 : index
    %77 = vector.load %arg5[%c23, %c0_34] : memref<128x512xf32, #tpu.memory_space<vmem>>, vector<1x512xf32>
    tpu.vector_store %arg5[%c23, %c0_34], %76 {strides = array<i32>} : memref<128x512xf32, #tpu.memory_space<vmem>>, vector<1x512xf32>,
    %c441_i32 = arith.constant 441 : i32
    %78 = tpu.dynamic_rotate %30 by %c441_i32 dim 1 : vector<1x512xf32>, i32 -> vector<1x512xf32>
    %c24 = arith.constant 24 : index
    %c0_35 = arith.constant 0 : index
    %79 = vector.load %arg5[%c24, %c0_35] : memref<128x512xf32, #tpu.memory_space<vmem>>, vector<1x512xf32>
    tpu.vector_store %arg5[%c24, %c0_35], %78 {strides = array<i32>} : memref<128x512xf32, #tpu.memory_space<vmem>>, vector<1x512xf32>,
    %c440_i32 = arith.constant 440 : i32
    %80 = tpu.dynamic_rotate %30 by %c440_i32 dim 1 : vector<1x512xf32>, i32 -> vector<1x512xf32>
    %c25 = arith.constant 25 : index
    %c0_36 = arith.constant 0 : index
    %81 = vector.load %arg5[%c25, %c0_36] : memref<128x512xf32, #tpu.memory_space<vmem>>, vector<1x512xf32>
    tpu.vector_store %arg5[%c25, %c0_36], %80 {strides = array<i32>} : memref<128x512xf32, #tpu.memory_space<vmem>>, vector<1x512xf32>,
    %c439_i32 = arith.constant 439 : i32
    %82 = tpu.dynamic_rotate %30 by %c439_i32 dim 1 : vector<1x512xf32>, i32 -> vector<1x512xf32>
    %c26 = arith.constant 26 : index
    %c0_37 = arith.constant 0 : index
    %83 = vector.load %arg5[%c26, %c0_37] : memref<128x512xf32, #tpu.memory_space<vmem>>, vector<1x512xf32>
    tpu.vector_store %arg5[%c26, %c0_37], %82 {strides = array<i32>} : memref<128x512xf32, #tpu.memory_space<vmem>>, vector<1x512xf32>,
    %c27 = arith.constant 27 : index
    %c0_38 = arith.constant 0 : index
    %84 = vector.load %arg5[%c27, %c0_38] : memref<128x512xf32, #tpu.memory_space<vmem>>, vector<1x512xf32>
    tpu.vector_store %arg5[%c27, %c0_38], %27 {strides = array<i32>} : memref<128x512xf32, #tpu.memory_space<vmem>>, vector<1x512xf32>,
    %c0_39 = arith.constant 0 : index
    %c0_40 = arith.constant 0 : index
    %85 = vector.load %arg1[%c0_39, %c0_40] : memref<24x128xf32, #tpu.memory_space<vmem>>, vector<8x128xf32>
    %c0_41 = arith.constant 0 : index
    %c0_42 = arith.constant 0 : index
    %86 = vector.load %arg5[%c0_41, %c0_42] : memref<128x512xf32, #tpu.memory_space<vmem>>, vector<128x512xf32>
    %cst_43 = arith.constant dense<0.000000e+00> : vector<8x512xf32>
    %87 = tpu.matmul %85, %86, %cst_43 {dimension_numbers = #tpu.dot_dimension_numbers<[1], [0], [0], [1], [0, 0, 1, 1], [], []>} : vector<8x128xf32>, vector<128x512xf32>, vector<8x512xf32> -> vector<8x512xf32>
    %88 = vector.extract_strided_slice %87 {offsets = [0, 0], sizes = [4, 512], strides = [1, 1]} : vector<8x512xf32> to vector<4x512xf32>
    %89 = math.roundeven %88 : vector<4x512xf32>
    %90 = vector.broadcast %27 : vector<1x512xf32> to vector<4x512xf32>
    %91 = arith.mulf %89, %90 : vector<4x512xf32>
    %c73_i32_44 = arith.constant 73 : i32
    %92 = tpu.dynamic_rotate %91 by %c73_i32_44 dim 1 : vector<4x512xf32>, i32 -> vector<4x512xf32>
    %c0_45 = arith.constant 0 : index
    %c0_46 = arith.constant 0 : index
    %93 = vector.load %arg5[%c0_45, %c0_46] : memref<128x512xf32, #tpu.memory_space<vmem>>, vector<4x512xf32>
    tpu.vector_store %arg5[%c0_45, %c0_46], %92 {strides = array<i32>} : memref<128x512xf32, #tpu.memory_space<vmem>>, vector<4x512xf32>,
    %c72_i32_47 = arith.constant 72 : i32
    %94 = tpu.dynamic_rotate %91 by %c72_i32_47 dim 1 : vector<4x512xf32>, i32 -> vector<4x512xf32>
    %c4_48 = arith.constant 4 : index
    %c0_49 = arith.constant 0 : index
    %95 = vector.load %arg5[%c4_48, %c0_49] : memref<128x512xf32, #tpu.memory_space<vmem>>, vector<4x512xf32>
    tpu.vector_store %arg5[%c4_48, %c0_49], %94 {strides = array<i32>} : memref<128x512xf32, #tpu.memory_space<vmem>>, vector<4x512xf32>,
    %c71_i32_50 = arith.constant 71 : i32
    %96 = tpu.dynamic_rotate %91 by %c71_i32_50 dim 1 : vector<4x512xf32>, i32 -> vector<4x512xf32>
    %c8_51 = arith.constant 8 : index
    %c0_52 = arith.constant 0 : index
    %97 = vector.load %arg5[%c8_51, %c0_52] : memref<128x512xf32, #tpu.memory_space<vmem>>, vector<4x512xf32>
    tpu.vector_store %arg5[%c8_51, %c0_52], %96 {strides = array<i32>} : memref<128x512xf32, #tpu.memory_space<vmem>>, vector<4x512xf32>,
    %c65_i32_53 = arith.constant 65 : i32
    %98 = tpu.dynamic_rotate %91 by %c65_i32_53 dim 1 : vector<4x512xf32>, i32 -> vector<4x512xf32>
    %c12_54 = arith.constant 12 : index
    %c0_55 = arith.constant 0 : index
    %99 = vector.load %arg5[%c12_54, %c0_55] : memref<128x512xf32, #tpu.memory_space<vmem>>, vector<4x512xf32>
    tpu.vector_store %arg5[%c12_54, %c0_55], %98 {strides = array<i32>} : memref<128x512xf32, #tpu.memory_space<vmem>>, vector<4x512xf32>,
    %c64_i32_56 = arith.constant 64 : i32
    %100 = tpu.dynamic_rotate %91 by %c64_i32_56 dim 1 : vector<4x512xf32>, i32 -> vector<4x512xf32>
    %c16_57 = arith.constant 16 : index
    %c0_58 = arith.constant 0 : index
    %101 = vector.load %arg5[%c16_57, %c0_58] : memref<128x512xf32, #tpu.memory_space<vmem>>, vector<4x512xf32>
    tpu.vector_store %arg5[%c16_57, %c0_58], %100 {strides = array<i32>} : memref<128x512xf32, #tpu.memory_space<vmem>>, vector<4x512xf32>,
    %c63_i32_59 = arith.constant 63 : i32
    %102 = tpu.dynamic_rotate %91 by %c63_i32_59 dim 1 : vector<4x512xf32>, i32 -> vector<4x512xf32>
    %c20_60 = arith.constant 20 : index
    %c0_61 = arith.constant 0 : index
    %103 = vector.load %arg5[%c20_60, %c0_61] : memref<128x512xf32, #tpu.memory_space<vmem>>, vector<4x512xf32>
    tpu.vector_store %arg5[%c20_60, %c0_61], %102 {strides = array<i32>} : memref<128x512xf32, #tpu.memory_space<vmem>>, vector<4x512xf32>,
    %c57_i32_62 = arith.constant 57 : i32
    %104 = tpu.dynamic_rotate %91 by %c57_i32_62 dim 1 : vector<4x512xf32>, i32 -> vector<4x512xf32>
    %c24_63 = arith.constant 24 : index
    %c0_64 = arith.constant 0 : index
    %105 = vector.load %arg5[%c24_63, %c0_64] : memref<128x512xf32, #tpu.memory_space<vmem>>, vector<4x512xf32>
    tpu.vector_store %arg5[%c24_63, %c0_64], %104 {strides = array<i32>} : memref<128x512xf32, #tpu.memory_space<vmem>>, vector<4x512xf32>,
    %c56_i32_65 = arith.constant 56 : i32
    %106 = tpu.dynamic_rotate %91 by %c56_i32_65 dim 1 : vector<4x512xf32>, i32 -> vector<4x512xf32>
    %c28 = arith.constant 28 : index
    %c0_66 = arith.constant 0 : index
    %107 = vector.load %arg5[%c28, %c0_66] : memref<128x512xf32, #tpu.memory_space<vmem>>, vector<4x512xf32>
    tpu.vector_store %arg5[%c28, %c0_66], %106 {strides = array<i32>} : memref<128x512xf32, #tpu.memory_space<vmem>>, vector<4x512xf32>,
    %c55_i32_67 = arith.constant 55 : i32
    %108 = tpu.dynamic_rotate %91 by %c55_i32_67 dim 1 : vector<4x512xf32>, i32 -> vector<4x512xf32>
    %c32 = arith.constant 32 : index
    %c0_68 = arith.constant 0 : index
    %109 = vector.load %arg5[%c32, %c0_68] : memref<128x512xf32, #tpu.memory_space<vmem>>, vector<4x512xf32>
    tpu.vector_store %arg5[%c32, %c0_68], %108 {strides = array<i32>} : memref<128x512xf32, #tpu.memory_space<vmem>>, vector<4x512xf32>,
    %c9_i32_69 = arith.constant 9 : i32
    %110 = tpu.dynamic_rotate %91 by %c9_i32_69 dim 1 : vector<4x512xf32>, i32 -> vector<4x512xf32>
    %c36 = arith.constant 36 : index
    %c0_70 = arith.constant 0 : index
    %111 = vector.load %arg5[%c36, %c0_70] : memref<128x512xf32, #tpu.memory_space<vmem>>, vector<4x512xf32>
    tpu.vector_store %arg5[%c36, %c0_70], %110 {strides = array<i32>} : memref<128x512xf32, #tpu.memory_space<vmem>>, vector<4x512xf32>,
    %c8_i32_71 = arith.constant 8 : i32
    %112 = tpu.dynamic_rotate %91 by %c8_i32_71 dim 1 : vector<4x512xf32>, i32 -> vector<4x512xf32>
    %c40 = arith.constant 40 : index
    %c0_72 = arith.constant 0 : index
    %113 = vector.load %arg5[%c40, %c0_72] : memref<128x512xf32, #tpu.memory_space<vmem>>, vector<4x512xf32>
    tpu.vector_store %arg5[%c40, %c0_72], %112 {strides = array<i32>} : memref<128x512xf32, #tpu.memory_space<vmem>>, vector<4x512xf32>,
    %c7_i32_73 = arith.constant 7 : i32
    %114 = tpu.dynamic_rotate %91 by %c7_i32_73 dim 1 : vector<4x512xf32>, i32 -> vector<4x512xf32>
    %c44 = arith.constant 44 : index
    %c0_74 = arith.constant 0 : index
    %115 = vector.load %arg5[%c44, %c0_74] : memref<128x512xf32, #tpu.memory_space<vmem>>, vector<4x512xf32>
    tpu.vector_store %arg5[%c44, %c0_74], %114 {strides = array<i32>} : memref<128x512xf32, #tpu.memory_space<vmem>>, vector<4x512xf32>,
    %c1_i32_75 = arith.constant 1 : i32
    %116 = tpu.dynamic_rotate %91 by %c1_i32_75 dim 1 : vector<4x512xf32>, i32 -> vector<4x512xf32>
    %c48 = arith.constant 48 : index
    %c0_76 = arith.constant 0 : index
    %117 = vector.load %arg5[%c48, %c0_76] : memref<128x512xf32, #tpu.memory_space<vmem>>, vector<4x512xf32>
    tpu.vector_store %arg5[%c48, %c0_76], %116 {strides = array<i32>} : memref<128x512xf32, #tpu.memory_space<vmem>>, vector<4x512xf32>,
    %c52 = arith.constant 52 : index
    %c0_77 = arith.constant 0 : index
    %118 = vector.load %arg5[%c52, %c0_77] : memref<128x512xf32, #tpu.memory_space<vmem>>, vector<4x512xf32>
    tpu.vector_store %arg5[%c52, %c0_77], %91 {strides = array<i32>} : memref<128x512xf32, #tpu.memory_space<vmem>>, vector<4x512xf32>,
    %c511_i32_78 = arith.constant 511 : i32
    %119 = tpu.dynamic_rotate %91 by %c511_i32_78 dim 1 : vector<4x512xf32>, i32 -> vector<4x512xf32>
    %c56 = arith.constant 56 : index
    %c0_79 = arith.constant 0 : index
    %120 = vector.load %arg5[%c56, %c0_79] : memref<128x512xf32, #tpu.memory_space<vmem>>, vector<4x512xf32>
    tpu.vector_store %arg5[%c56, %c0_79], %119 {strides = array<i32>} : memref<128x512xf32, #tpu.memory_space<vmem>>, vector<4x512xf32>,
    %c505_i32_80 = arith.constant 505 : i32
    %121 = tpu.dynamic_rotate %91 by %c505_i32_80 dim 1 : vector<4x512xf32>, i32 -> vector<4x512xf32>
    %c60 = arith.constant 60 : index
    %c0_81 = arith.constant 0 : index
    %122 = vector.load %arg5[%c60, %c0_81] : memref<128x512xf32, #tpu.memory_space<vmem>>, vector<4x512xf32>
    tpu.vector_store %arg5[%c60, %c0_81], %121 {strides = array<i32>} : memref<128x512xf32, #tpu.memory_space<vmem>>, vector<4x512xf32>,
    %c504_i32_82 = arith.constant 504 : i32
    %123 = tpu.dynamic_rotate %91 by %c504_i32_82 dim 1 : vector<4x512xf32>, i32 -> vector<4x512xf32>
    %c64 = arith.constant 64 : index
    %c0_83 = arith.constant 0 : index
    %124 = vector.load %arg5[%c64, %c0_83] : memref<128x512xf32, #tpu.memory_space<vmem>>, vector<4x512xf32>
    tpu.vector_store %arg5[%c64, %c0_83], %123 {strides = array<i32>} : memref<128x512xf32, #tpu.memory_space<vmem>>, vector<4x512xf32>,
    %c503_i32_84 = arith.constant 503 : i32
    %125 = tpu.dynamic_rotate %91 by %c503_i32_84 dim 1 : vector<4x512xf32>, i32 -> vector<4x512xf32>
    %c68 = arith.constant 68 : index
    %c0_85 = arith.constant 0 : index
    %126 = vector.load %arg5[%c68, %c0_85] : memref<128x512xf32, #tpu.memory_space<vmem>>, vector<4x512xf32>
    tpu.vector_store %arg5[%c68, %c0_85], %125 {strides = array<i32>} : memref<128x512xf32, #tpu.memory_space<vmem>>, vector<4x512xf32>,
    %c457_i32_86 = arith.constant 457 : i32
    %127 = tpu.dynamic_rotate %91 by %c457_i32_86 dim 1 : vector<4x512xf32>, i32 -> vector<4x512xf32>
    %c72 = arith.constant 72 : index
    %c0_87 = arith.constant 0 : index
    %128 = vector.load %arg5[%c72, %c0_87] : memref<128x512xf32, #tpu.memory_space<vmem>>, vector<4x512xf32>
    tpu.vector_store %arg5[%c72, %c0_87], %127 {strides = array<i32>} : memref<128x512xf32, #tpu.memory_space<vmem>>, vector<4x512xf32>,
    %c456_i32_88 = arith.constant 456 : i32
    %129 = tpu.dynamic_rotate %91 by %c456_i32_88 dim 1 : vector<4x512xf32>, i32 -> vector<4x512xf32>
    %c76 = arith.constant 76 : index
    %c0_89 = arith.constant 0 : index
    %130 = vector.load %arg5[%c76, %c0_89] : memref<128x512xf32, #tpu.memory_space<vmem>>, vector<4x512xf32>
    tpu.vector_store %arg5[%c76, %c0_89], %129 {strides = array<i32>} : memref<128x512xf32, #tpu.memory_space<vmem>>, vector<4x512xf32>,
    %c455_i32_90 = arith.constant 455 : i32
    %131 = tpu.dynamic_rotate %91 by %c455_i32_90 dim 1 : vector<4x512xf32>, i32 -> vector<4x512xf32>
    %c80 = arith.constant 80 : index
    %c0_91 = arith.constant 0 : index
    %132 = vector.load %arg5[%c80, %c0_91] : memref<128x512xf32, #tpu.memory_space<vmem>>, vector<4x512xf32>
    tpu.vector_store %arg5[%c80, %c0_91], %131 {strides = array<i32>} : memref<128x512xf32, #tpu.memory_space<vmem>>, vector<4x512xf32>,
    %c449_i32_92 = arith.constant 449 : i32
    %133 = tpu.dynamic_rotate %91 by %c449_i32_92 dim 1 : vector<4x512xf32>, i32 -> vector<4x512xf32>
    %c84 = arith.constant 84 : index
    %c0_93 = arith.constant 0 : index
    %134 = vector.load %arg5[%c84, %c0_93] : memref<128x512xf32, #tpu.memory_space<vmem>>, vector<4x512xf32>
    tpu.vector_store %arg5[%c84, %c0_93], %133 {strides = array<i32>} : memref<128x512xf32, #tpu.memory_space<vmem>>, vector<4x512xf32>,
    %c448_i32_94 = arith.constant 448 : i32
    %135 = tpu.dynamic_rotate %91 by %c448_i32_94 dim 1 : vector<4x512xf32>, i32 -> vector<4x512xf32>
    %c88 = arith.constant 88 : index
    %c0_95 = arith.constant 0 : index
    %136 = vector.load %arg5[%c88, %c0_95] : memref<128x512xf32, #tpu.memory_space<vmem>>, vector<4x512xf32>
    tpu.vector_store %arg5[%c88, %c0_95], %135 {strides = array<i32>} : memref<128x512xf32, #tpu.memory_space<vmem>>, vector<4x512xf32>,
    %c447_i32_96 = arith.constant 447 : i32
    %137 = tpu.dynamic_rotate %91 by %c447_i32_96 dim 1 : vector<4x512xf32>, i32 -> vector<4x512xf32>
    %c92 = arith.constant 92 : index
    %c0_97 = arith.constant 0 : index
    %138 = vector.load %arg5[%c92, %c0_97] : memref<128x512xf32, #tpu.memory_space<vmem>>, vector<4x512xf32>
    tpu.vector_store %arg5[%c92, %c0_97], %137 {strides = array<i32>} : memref<128x512xf32, #tpu.memory_space<vmem>>, vector<4x512xf32>,
    %c441_i32_98 = arith.constant 441 : i32
    %139 = tpu.dynamic_rotate %91 by %c441_i32_98 dim 1 : vector<4x512xf32>, i32 -> vector<4x512xf32>
    %c96 = arith.constant 96 : index
    %c0_99 = arith.constant 0 : index
    %140 = vector.load %arg5[%c96, %c0_99] : memref<128x512xf32, #tpu.memory_space<vmem>>, vector<4x512xf32>
    tpu.vector_store %arg5[%c96, %c0_99], %139 {strides = array<i32>} : memref<128x512xf32, #tpu.memory_space<vmem>>, vector<4x512xf32>,
    %c440_i32_100 = arith.constant 440 : i32
    %141 = tpu.dynamic_rotate %91 by %c440_i32_100 dim 1 : vector<4x512xf32>, i32 -> vector<4x512xf32>
    %c100 = arith.constant 100 : index
    %c0_101 = arith.constant 0 : index
    %142 = vector.load %arg5[%c100, %c0_101] : memref<128x512xf32, #tpu.memory_space<vmem>>, vector<4x512xf32>
    tpu.vector_store %arg5[%c100, %c0_101], %141 {strides = array<i32>} : memref<128x512xf32, #tpu.memory_space<vmem>>, vector<4x512xf32>,
    %c439_i32_102 = arith.constant 439 : i32
    %143 = tpu.dynamic_rotate %91 by %c439_i32_102 dim 1 : vector<4x512xf32>, i32 -> vector<4x512xf32>
    %c104 = arith.constant 104 : index
    %c0_103 = arith.constant 0 : index
    %144 = vector.load %arg5[%c104, %c0_103] : memref<128x512xf32, #tpu.memory_space<vmem>>, vector<4x512xf32>
    tpu.vector_store %arg5[%c104, %c0_103], %143 {strides = array<i32>} : memref<128x512xf32, #tpu.memory_space<vmem>>, vector<4x512xf32>,
    %c108 = arith.constant 108 : index
    %c0_104 = arith.constant 0 : index
    %145 = vector.load %arg5[%c108, %c0_104] : memref<128x512xf32, #tpu.memory_space<vmem>>, vector<1x512xf32>
    tpu.vector_store %arg5[%c108, %c0_104], %27 {strides = array<i32>} : memref<128x512xf32, #tpu.memory_space<vmem>>, vector<1x512xf32>,
    %c8_105 = arith.constant 8 : index
    %c0_106 = arith.constant 0 : index
    %146 = vector.load %arg1[%c8_105, %c0_106] : memref<24x128xf32, #tpu.memory_space<vmem>>, vector<8x128xf32>
    %c0_107 = arith.constant 0 : index
    %c0_108 = arith.constant 0 : index
    %147 = vector.load %arg5[%c0_107, %c0_108] : memref<128x512xf32, #tpu.memory_space<vmem>>, vector<128x512xf32>
    %cst_109 = arith.constant dense<0.000000e+00> : vector<8x512xf32>
    %148 = tpu.matmul %146, %147, %cst_109 {dimension_numbers = #tpu.dot_dimension_numbers<[1], [0], [0], [1], [0, 0, 1, 1], [], []>} : vector<8x128xf32>, vector<128x512xf32>, vector<8x512xf32> -> vector<8x512xf32>
    %149 = vector.extract_strided_slice %148 {offsets = [0, 0], sizes = [4, 512], strides = [1, 1]} : vector<8x512xf32> to vector<4x512xf32>
    %cst_110 = arith.constant 0.000000e+00 : f32
    %150 = vector.broadcast %cst_110 : f32 to vector<4x512xf32>
    %151 = arith.maximumf %149, %150 : vector<4x512xf32>
    %152 = vector.broadcast %27 : vector<1x512xf32> to vector<4x512xf32>
    %153 = arith.mulf %151, %152 : vector<4x512xf32>
    %c73_i32_111 = arith.constant 73 : i32
    %154 = tpu.dynamic_rotate %153 by %c73_i32_111 dim 1 : vector<4x512xf32>, i32 -> vector<4x512xf32>
    %c0_112 = arith.constant 0 : index
    %c0_113 = arith.constant 0 : index
    %155 = vector.load %arg5[%c0_112, %c0_113] : memref<128x512xf32, #tpu.memory_space<vmem>>, vector<4x512xf32>
    tpu.vector_store %arg5[%c0_112, %c0_113], %154 {strides = array<i32>} : memref<128x512xf32, #tpu.memory_space<vmem>>, vector<4x512xf32>,
    %c72_i32_114 = arith.constant 72 : i32
    %156 = tpu.dynamic_rotate %153 by %c72_i32_114 dim 1 : vector<4x512xf32>, i32 -> vector<4x512xf32>
    %c4_115 = arith.constant 4 : index
    %c0_116 = arith.constant 0 : index
    %157 = vector.load %arg5[%c4_115, %c0_116] : memref<128x512xf32, #tpu.memory_space<vmem>>, vector<4x512xf32>
    tpu.vector_store %arg5[%c4_115, %c0_116], %156 {strides = array<i32>} : memref<128x512xf32, #tpu.memory_space<vmem>>, vector<4x512xf32>,
    %c71_i32_117 = arith.constant 71 : i32
    %158 = tpu.dynamic_rotate %153 by %c71_i32_117 dim 1 : vector<4x512xf32>, i32 -> vector<4x512xf32>
    %c8_118 = arith.constant 8 : index
    %c0_119 = arith.constant 0 : index
    %159 = vector.load %arg5[%c8_118, %c0_119] : memref<128x512xf32, #tpu.memory_space<vmem>>, vector<4x512xf32>
    tpu.vector_store %arg5[%c8_118, %c0_119], %158 {strides = array<i32>} : memref<128x512xf32, #tpu.memory_space<vmem>>, vector<4x512xf32>,
    %c65_i32_120 = arith.constant 65 : i32
    %160 = tpu.dynamic_rotate %153 by %c65_i32_120 dim 1 : vector<4x512xf32>, i32 -> vector<4x512xf32>
    %c12_121 = arith.constant 12 : index
    %c0_122 = arith.constant 0 : index
    %161 = vector.load %arg5[%c12_121, %c0_122] : memref<128x512xf32, #tpu.memory_space<vmem>>, vector<4x512xf32>
    tpu.vector_store %arg5[%c12_121, %c0_122], %160 {strides = array<i32>} : memref<128x512xf32, #tpu.memory_space<vmem>>, vector<4x512xf32>,
    %c64_i32_123 = arith.constant 64 : i32
    %162 = tpu.dynamic_rotate %153 by %c64_i32_123 dim 1 : vector<4x512xf32>, i32 -> vector<4x512xf32>
    %c16_124 = arith.constant 16 : index
    %c0_125 = arith.constant 0 : index
    %163 = vector.load %arg5[%c16_124, %c0_125] : memref<128x512xf32, #tpu.memory_space<vmem>>, vector<4x512xf32>
    tpu.vector_store %arg5[%c16_124, %c0_125], %162 {strides = array<i32>} : memref<128x512xf32, #tpu.memory_space<vmem>>, vector<4x512xf32>,
    %c63_i32_126 = arith.constant 63 : i32
    %164 = tpu.dynamic_rotate %153 by %c63_i32_126 dim 1 : vector<4x512xf32>, i32 -> vector<4x512xf32>
    %c20_127 = arith.constant 20 : index
    %c0_128 = arith.constant 0 : index
    %165 = vector.load %arg5[%c20_127, %c0_128] : memref<128x512xf32, #tpu.memory_space<vmem>>, vector<4x512xf32>
    tpu.vector_store %arg5[%c20_127, %c0_128], %164 {strides = array<i32>} : memref<128x512xf32, #tpu.memory_space<vmem>>, vector<4x512xf32>,
    %c57_i32_129 = arith.constant 57 : i32
    %166 = tpu.dynamic_rotate %153 by %c57_i32_129 dim 1 : vector<4x512xf32>, i32 -> vector<4x512xf32>
    %c24_130 = arith.constant 24 : index
    %c0_131 = arith.constant 0 : index
    %167 = vector.load %arg5[%c24_130, %c0_131] : memref<128x512xf32, #tpu.memory_space<vmem>>, vector<4x512xf32>
    tpu.vector_store %arg5[%c24_130, %c0_131], %166 {strides = array<i32>} : memref<128x512xf32, #tpu.memory_space<vmem>>, vector<4x512xf32>,
    %c56_i32_132 = arith.constant 56 : i32
    %168 = tpu.dynamic_rotate %153 by %c56_i32_132 dim 1 : vector<4x512xf32>, i32 -> vector<4x512xf32>
    %c28_133 = arith.constant 28 : index
    %c0_134 = arith.constant 0 : index
    %169 = vector.load %arg5[%c28_133, %c0_134] : memref<128x512xf32, #tpu.memory_space<vmem>>, vector<4x512xf32>
    tpu.vector_store %arg5[%c28_133, %c0_134], %168 {strides = array<i32>} : memref<128x512xf32, #tpu.memory_space<vmem>>, vector<4x512xf32>,
    %c55_i32_135 = arith.constant 55 : i32
    %170 = tpu.dynamic_rotate %153 by %c55_i32_135 dim 1 : vector<4x512xf32>, i32 -> vector<4x512xf32>
    %c32_136 = arith.constant 32 : index
    %c0_137 = arith.constant 0 : index
    %171 = vector.load %arg5[%c32_136, %c0_137] : memref<128x512xf32, #tpu.memory_space<vmem>>, vector<4x512xf32>
    tpu.vector_store %arg5[%c32_136, %c0_137], %170 {strides = array<i32>} : memref<128x512xf32, #tpu.memory_space<vmem>>, vector<4x512xf32>,
    %c9_i32_138 = arith.constant 9 : i32
    %172 = tpu.dynamic_rotate %153 by %c9_i32_138 dim 1 : vector<4x512xf32>, i32 -> vector<4x512xf32>
    %c36_139 = arith.constant 36 : index
    %c0_140 = arith.constant 0 : index
    %173 = vector.load %arg5[%c36_139, %c0_140] : memref<128x512xf32, #tpu.memory_space<vmem>>, vector<4x512xf32>
    tpu.vector_store %arg5[%c36_139, %c0_140], %172 {strides = array<i32>} : memref<128x512xf32, #tpu.memory_space<vmem>>, vector<4x512xf32>,
    %c8_i32_141 = arith.constant 8 : i32
    %174 = tpu.dynamic_rotate %153 by %c8_i32_141 dim 1 : vector<4x512xf32>, i32 -> vector<4x512xf32>
    %c40_142 = arith.constant 40 : index
    %c0_143 = arith.constant 0 : index
    %175 = vector.load %arg5[%c40_142, %c0_143] : memref<128x512xf32, #tpu.memory_space<vmem>>, vector<4x512xf32>
    tpu.vector_store %arg5[%c40_142, %c0_143], %174 {strides = array<i32>} : memref<128x512xf32, #tpu.memory_space<vmem>>, vector<4x512xf32>,
    %c7_i32_144 = arith.constant 7 : i32
    %176 = tpu.dynamic_rotate %153 by %c7_i32_144 dim 1 : vector<4x512xf32>, i32 -> vector<4x512xf32>
    %c44_145 = arith.constant 44 : index
    %c0_146 = arith.constant 0 : index
    %177 = vector.load %arg5[%c44_145, %c0_146] : memref<128x512xf32, #tpu.memory_space<vmem>>, vector<4x512xf32>
    tpu.vector_store %arg5[%c44_145, %c0_146], %176 {strides = array<i32>} : memref<128x512xf32, #tpu.memory_space<vmem>>, vector<4x512xf32>,
    %c1_i32_147 = arith.constant 1 : i32
    %178 = tpu.dynamic_rotate %153 by %c1_i32_147 dim 1 : vector<4x512xf32>, i32 -> vector<4x512xf32>
    %c48_148 = arith.constant 48 : index
    %c0_149 = arith.constant 0 : index
    %179 = vector.load %arg5[%c48_148, %c0_149] : memref<128x512xf32, #tpu.memory_space<vmem>>, vector<4x512xf32>
    tpu.vector_store %arg5[%c48_148, %c0_149], %178 {strides = array<i32>} : memref<128x512xf32, #tpu.memory_space<vmem>>, vector<4x512xf32>,
    %c52_150 = arith.constant 52 : index
    %c0_151 = arith.constant 0 : index
    %180 = vector.load %arg5[%c52_150, %c0_151] : memref<128x512xf32, #tpu.memory_space<vmem>>, vector<4x512xf32>
    tpu.vector_store %arg5[%c52_150, %c0_151], %153 {strides = array<i32>} : memref<128x512xf32, #tpu.memory_space<vmem>>, vector<4x512xf32>,
    %c511_i32_152 = arith.constant 511 : i32
    %181 = tpu.dynamic_rotate %153 by %c511_i32_152 dim 1 : vector<4x512xf32>, i32 -> vector<4x512xf32>
    %c56_153 = arith.constant 56 : index
    %c0_154 = arith.constant 0 : index
    %182 = vector.load %arg5[%c56_153, %c0_154] : memref<128x512xf32, #tpu.memory_space<vmem>>, vector<4x512xf32>
    tpu.vector_store %arg5[%c56_153, %c0_154], %181 {strides = array<i32>} : memref<128x512xf32, #tpu.memory_space<vmem>>, vector<4x512xf32>,
    %c505_i32_155 = arith.constant 505 : i32
    %183 = tpu.dynamic_rotate %153 by %c505_i32_155 dim 1 : vector<4x512xf32>, i32 -> vector<4x512xf32>
    %c60_156 = arith.constant 60 : index
    %c0_157 = arith.constant 0 : index
    %184 = vector.load %arg5[%c60_156, %c0_157] : memref<128x512xf32, #tpu.memory_space<vmem>>, vector<4x512xf32>
    tpu.vector_store %arg5[%c60_156, %c0_157], %183 {strides = array<i32>} : memref<128x512xf32, #tpu.memory_space<vmem>>, vector<4x512xf32>,
    %c504_i32_158 = arith.constant 504 : i32
    %185 = tpu.dynamic_rotate %153 by %c504_i32_158 dim 1 : vector<4x512xf32>, i32 -> vector<4x512xf32>
    %c64_159 = arith.constant 64 : index
    %c0_160 = arith.constant 0 : index
    %186 = vector.load %arg5[%c64_159, %c0_160] : memref<128x512xf32, #tpu.memory_space<vmem>>, vector<4x512xf32>
    tpu.vector_store %arg5[%c64_159, %c0_160], %185 {strides = array<i32>} : memref<128x512xf32, #tpu.memory_space<vmem>>, vector<4x512xf32>,
    %c503_i32_161 = arith.constant 503 : i32
    %187 = tpu.dynamic_rotate %153 by %c503_i32_161 dim 1 : vector<4x512xf32>, i32 -> vector<4x512xf32>
    %c68_162 = arith.constant 68 : index
    %c0_163 = arith.constant 0 : index
    %188 = vector.load %arg5[%c68_162, %c0_163] : memref<128x512xf32, #tpu.memory_space<vmem>>, vector<4x512xf32>
    tpu.vector_store %arg5[%c68_162, %c0_163], %187 {strides = array<i32>} : memref<128x512xf32, #tpu.memory_space<vmem>>, vector<4x512xf32>,
    %c457_i32_164 = arith.constant 457 : i32
    %189 = tpu.dynamic_rotate %153 by %c457_i32_164 dim 1 : vector<4x512xf32>, i32 -> vector<4x512xf32>
    %c72_165 = arith.constant 72 : index
    %c0_166 = arith.constant 0 : index
    %190 = vector.load %arg5[%c72_165, %c0_166] : memref<128x512xf32, #tpu.memory_space<vmem>>, vector<4x512xf32>
    tpu.vector_store %arg5[%c72_165, %c0_166], %189 {strides = array<i32>} : memref<128x512xf32, #tpu.memory_space<vmem>>, vector<4x512xf32>,
    %c456_i32_167 = arith.constant 456 : i32
    %191 = tpu.dynamic_rotate %153 by %c456_i32_167 dim 1 : vector<4x512xf32>, i32 -> vector<4x512xf32>
    %c76_168 = arith.constant 76 : index
    %c0_169 = arith.constant 0 : index
    %192 = vector.load %arg5[%c76_168, %c0_169] : memref<128x512xf32, #tpu.memory_space<vmem>>, vector<4x512xf32>
    tpu.vector_store %arg5[%c76_168, %c0_169], %191 {strides = array<i32>} : memref<128x512xf32, #tpu.memory_space<vmem>>, vector<4x512xf32>,
    %c455_i32_170 = arith.constant 455 : i32
    %193 = tpu.dynamic_rotate %153 by %c455_i32_170 dim 1 : vector<4x512xf32>, i32 -> vector<4x512xf32>
    %c80_171 = arith.constant 80 : index
    %c0_172 = arith.constant 0 : index
    %194 = vector.load %arg5[%c80_171, %c0_172] : memref<128x512xf32, #tpu.memory_space<vmem>>, vector<4x512xf32>
    tpu.vector_store %arg5[%c80_171, %c0_172], %193 {strides = array<i32>} : memref<128x512xf32, #tpu.memory_space<vmem>>, vector<4x512xf32>,
    %c449_i32_173 = arith.constant 449 : i32
    %195 = tpu.dynamic_rotate %153 by %c449_i32_173 dim 1 : vector<4x512xf32>, i32 -> vector<4x512xf32>
    %c84_174 = arith.constant 84 : index
    %c0_175 = arith.constant 0 : index
    %196 = vector.load %arg5[%c84_174, %c0_175] : memref<128x512xf32, #tpu.memory_space<vmem>>, vector<4x512xf32>
    tpu.vector_store %arg5[%c84_174, %c0_175], %195 {strides = array<i32>} : memref<128x512xf32, #tpu.memory_space<vmem>>, vector<4x512xf32>,
    %c448_i32_176 = arith.constant 448 : i32
    %197 = tpu.dynamic_rotate %153 by %c448_i32_176 dim 1 : vector<4x512xf32>, i32 -> vector<4x512xf32>
    %c88_177 = arith.constant 88 : index
    %c0_178 = arith.constant 0 : index
    %198 = vector.load %arg5[%c88_177, %c0_178] : memref<128x512xf32, #tpu.memory_space<vmem>>, vector<4x512xf32>
    tpu.vector_store %arg5[%c88_177, %c0_178], %197 {strides = array<i32>} : memref<128x512xf32, #tpu.memory_space<vmem>>, vector<4x512xf32>,
    %c447_i32_179 = arith.constant 447 : i32
    %199 = tpu.dynamic_rotate %153 by %c447_i32_179 dim 1 : vector<4x512xf32>, i32 -> vector<4x512xf32>
    %c92_180 = arith.constant 92 : index
    %c0_181 = arith.constant 0 : index
    %200 = vector.load %arg5[%c92_180, %c0_181] : memref<128x512xf32, #tpu.memory_space<vmem>>, vector<4x512xf32>
    tpu.vector_store %arg5[%c92_180, %c0_181], %199 {strides = array<i32>} : memref<128x512xf32, #tpu.memory_space<vmem>>, vector<4x512xf32>,
    %c441_i32_182 = arith.constant 441 : i32
    %201 = tpu.dynamic_rotate %153 by %c441_i32_182 dim 1 : vector<4x512xf32>, i32 -> vector<4x512xf32>
    %c96_183 = arith.constant 96 : index
    %c0_184 = arith.constant 0 : index
    %202 = vector.load %arg5[%c96_183, %c0_184] : memref<128x512xf32, #tpu.memory_space<vmem>>, vector<4x512xf32>
    tpu.vector_store %arg5[%c96_183, %c0_184], %201 {strides = array<i32>} : memref<128x512xf32, #tpu.memory_space<vmem>>, vector<4x512xf32>,
    %c440_i32_185 = arith.constant 440 : i32
    %203 = tpu.dynamic_rotate %153 by %c440_i32_185 dim 1 : vector<4x512xf32>, i32 -> vector<4x512xf32>
    %c100_186 = arith.constant 100 : index
    %c0_187 = arith.constant 0 : index
    %204 = vector.load %arg5[%c100_186, %c0_187] : memref<128x512xf32, #tpu.memory_space<vmem>>, vector<4x512xf32>
    tpu.vector_store %arg5[%c100_186, %c0_187], %203 {strides = array<i32>} : memref<128x512xf32, #tpu.memory_space<vmem>>, vector<4x512xf32>,
    %c439_i32_188 = arith.constant 439 : i32
    %205 = tpu.dynamic_rotate %153 by %c439_i32_188 dim 1 : vector<4x512xf32>, i32 -> vector<4x512xf32>
    %c104_189 = arith.constant 104 : index
    %c0_190 = arith.constant 0 : index
    %206 = vector.load %arg5[%c104_189, %c0_190] : memref<128x512xf32, #tpu.memory_space<vmem>>, vector<4x512xf32>
    tpu.vector_store %arg5[%c104_189, %c0_190], %205 {strides = array<i32>} : memref<128x512xf32, #tpu.memory_space<vmem>>, vector<4x512xf32>,
    %c108_191 = arith.constant 108 : index
    %c0_192 = arith.constant 0 : index
    %207 = vector.load %arg5[%c108_191, %c0_192] : memref<128x512xf32, #tpu.memory_space<vmem>>, vector<1x512xf32>
    tpu.vector_store %arg5[%c108_191, %c0_192], %27 {strides = array<i32>} : memref<128x512xf32, #tpu.memory_space<vmem>>, vector<1x512xf32>,
    %c16_193 = arith.constant 16 : index
    %c0_194 = arith.constant 0 : index
    %208 = vector.load %arg1[%c16_193, %c0_194] : memref<24x128xf32, #tpu.memory_space<vmem>>, vector<8x128xf32>
    %c0_195 = arith.constant 0 : index
    %c0_196 = arith.constant 0 : index
    %209 = vector.load %arg5[%c0_195, %c0_196] : memref<128x512xf32, #tpu.memory_space<vmem>>, vector<128x512xf32>
    %cst_197 = arith.constant dense<0.000000e+00> : vector<8x512xf32>
    %210 = tpu.matmul %208, %209, %cst_197 {dimension_numbers = #tpu.dot_dimension_numbers<[1], [0], [0], [1], [0, 0, 1, 1], [], []>} : vector<8x128xf32>, vector<128x512xf32>, vector<8x512xf32> -> vector<8x512xf32>
    %211 = vector.extract_strided_slice %210 {offsets = [0, 0], sizes = [1, 512], strides = [1, 1]} : vector<8x512xf32> to vector<1x512xf32>
    %212 = arith.mulf %211, %27 : vector<1x512xf32>
    %cst_198 = arith.constant 0.000000e+00 : f32
    %213 = vector.broadcast %cst_198 : f32 to vector<1x512xf32>
    %214 = arith.maximumf %212, %213 : vector<1x512xf32>
    %215 = math.absf %212 : vector<1x512xf32>
    %cst_199 = arith.constant 0.000000e+00 : f32
    %216 = vector.broadcast %cst_199 : f32 to vector<1x512xf32>
    %217 = arith.subf %216, %215 : vector<1x512xf32>
    %218 = math.exp %217 : vector<1x512xf32>
    %cst_200 = arith.constant 1.000000e+00 : f32
    %219 = vector.broadcast %cst_200 : f32 to vector<1x512xf32>
    %220 = arith.addf %219, %218 : vector<1x512xf32>
    %221 = math.log %220 : vector<1x512xf32>
    %222 = arith.addf %214, %221 : vector<1x512xf32>
    %223 = arith.subf %222, %212 : vector<1x512xf32>
    %224 = arith.mulf %30, %223 : vector<1x512xf32>
    %cst_201 = arith.constant 1.000000e+00 : f32
    %225 = vector.broadcast %cst_201 : f32 to vector<1x512xf32>
    %226 = arith.subf %225, %30 : vector<1x512xf32>
    %227 = arith.mulf %226, %222 : vector<1x512xf32>
    %228 = arith.addf %224, %227 : vector<1x512xf32>
    %229 = arith.mulf %228, %27 : vector<1x512xf32>
    %230 = vector.shape_cast %229 : vector<1x512xf32> to vector<1x1x512xf32>
    %cst_202 = arith.constant dense<0.000000e+00> : vector<1xf32>
    %231 = vector.multi_reduction <add>, %230, %cst_202 [1, 2] : vector<1x1x512xf32> to vector<1xf32>
    %232 = vector.shape_cast %231 : vector<1xf32> to vector<1x1x1xf32>
    %233 = vector.extract %232[0, 0, 0] : f32 from vector<1x1x1xf32>
    %cst_203 = arith.constant 1.44269502 : f32
    %234 = arith.mulf %233, %cst_203 : f32
    %c0_204 = arith.constant 0 : index
    %c0_205 = arith.constant 0 : index
    %235 = memref.load %arg2[%c0_204, %c0_205] : memref<1x1xf32, #tpu.memory_space<smem>>
    memref.store %234, %arg2[%c0_204, %c0_205] : memref<1x1xf32, #tpu.memory_space<smem>>
    %c0_206 = arith.constant 0 : index
    %c0_207 = arith.constant 0 : index
    %236 = vector.load %arg3[%c0_206, %c0_207] : memref<4x512xf32, #tpu.memory_space<vmem>>, vector<4x512xf32>
    tpu.vector_store %arg3[%c0_206, %c0_207], %91 {strides = array<i32>} : memref<4x512xf32, #tpu.memory_space<vmem>>, vector<4x512xf32>,
    %c0_208 = arith.constant 0 : index
    %c0_209 = arith.constant 0 : index
    %237 = vector.load %arg4[%c0_208, %c0_209] : memref<1x512xf32, #tpu.memory_space<vmem>>, vector<1x512xf32>
    tpu.vector_store %arg4[%c0_208, %c0_209], %212 {strides = array<i32>} : memref<1x512xf32, #tpu.memory_space<vmem>>, vector<1x512xf32>,
    return
  }
}

</mosaic_0001>

<llo_original>
// kernel: a_call__.1
$region0: #{a_call__.1}
  #allocation0 [shape = 'u32[]', space=smem, size = 0x4, offset = 0x4, fixed_abs, tag = 'smem constant byte address 0x4 - core index']
  #allocation1 [shape = 'u32[144,128]{1,0:T(1,128)}', space=vmem, size = 0x12000, scoped, tag = 'internal scratch']
  #allocation2 [shape = 'f32[128,512]{1,0:T(8,128)}', space=vmem, size = 0x40000, scoped, tag = 'scratch operand']
  %s0 = inlined_call_operand.vmem [shape: f32[1,512], index: 0, kind: input, shape index: {}]
  %s1 = inlined_call_operand.vmem [shape: f32[24,128], index: 1, kind: input, shape index: {}]
  %s2 = inlined_call_operand.hbm [shape: f32[1,1], index: 2, kind: output, shape index: {0}]
  %s3 = inlined_call_operand.vmem [shape: f32[4,512], index: 3, kind: output, shape index: {1}]
  %s4 = inlined_call_operand.vmem [shape: f32[1,512], index: 4, kind: output, shape index: {2}]
  %5 = xla_tuple %s2, %s3, %s4
  %s6 = sld [smem:[#allocation0]]
  $region34: #{a_call__.1} parent=0
    _
  %s8 = ssub.s32 1, %s6
  %s9 = scalar_select 0, %s8, %s6
  $region1: #{a_call__.1} parent=0
    #allocation3 [shape = 'u8[512]{0}', space=smem, size = 0x200, scoped, tag = 'output window, operand 0, single buffered']
    #allocation4 [shape = 's32[1]{0}', space=sflag, size = 0x4, scoped, tag = 'scoped memory for a_call__.1']
    %10 = vsyncpa [#allocation4], 0
    // Predicated region
    $region2: #{a_call__.1} parent=1 // pred_check
      _
    $region3: #{a_call__.1} parent=1 // pred_check_branch
      %12 = sbr.rel (0) target = $region5
    $region4: #{a_call__.1} parent=1 // pred_region
      _
    $region5: #{a_call__.1} parent=1 // pred_fallthru
      _
    // Predicated region
    $region6: #{a_call__.1} parent=1 // pred_check
      _
    $region7: #{a_call__.1} parent=1 // pred_check_branch
      %14 = sbr.rel (0) target = $region9
    $region8: #{a_call__.1} parent=1 // pred_region
      _
    $region9: #{a_call__.1} parent=1 // pred_fallthru
      _
    %v15 = vlaneseq
    %v16 = vand.u32 %v15, 127
    %v17 = vadd.s32 %v16, 128
    %v18 = vadd.s32 %v16, 256
    %v19 = vadd.s32 %v16, 384
    %v20 = vshra.s32 %v16, 6
    %v21 = vshra.s32 %v17, 6
    %v22 = vshra.s32 %v18, 6
    %v23 = vshra.s32 %v19, 6
    %v24 = vshra.s32 %v16, 3
    %v25 = vshra.s32 %v17, 3
    %v26 = vshra.s32 %v18, 3
    %v27 = vshra.s32 %v19, 3
    %v28 = vand.u32 %v24, 7
    %v29 = vand.u32 %v25, 7
    %v30 = vand.u32 %v26, 7
    %v31 = vand.u32 %v27, 7
    %v32 = vand.u32 %v16, 7
    %v33 = vand.u32 %v17, 7
    %v34 = vand.u32 %v18, 7
    %v35 = vand.u32 %v19, 7
    %vm36 = vcmp.ge.s32.totalorder %v20, 1
    %vm37 = vcmp.ge.s32.totalorder %v21, 1
    %vm38 = vcmp.ge.s32.totalorder %v22, 1
    %vm39 = vcmp.ge.s32.totalorder %v23, 1
    %vm40 = vcmp.le.s32.totalorder %v20, 4
    %vm41 = vcmp.le.s32.totalorder %v21, 4
    %vm42 = vcmp.le.s32.totalorder %v22, 4
    %vm43 = vcmp.le.s32.totalorder %v23, 4
    %vm44 = vmand %vm36, %vm40
    %vm45 = vmand %vm37, %vm41
    %vm46 = vmand %vm38, %vm42
    %vm47 = vmand %vm39, %vm43
    %vm48 = vcmp.ge.s32.totalorder %v28, 1
    %vm49 = vcmp.ge.s32.totalorder %v29, 1
    %vm50 = vcmp.ge.s32.totalorder %v30, 1
    %vm51 = vcmp.ge.s32.totalorder %v31, 1
    %vm52 = vmand %vm44, %vm48
    %vm53 = vmand %vm45, %vm49
    %vm54 = vmand %vm46, %vm50
    %vm55 = vmand %vm47, %vm51
    %vm56 = vcmp.le.s32.totalorder %v28, 4
    %vm57 = vcmp.le.s32.totalorder %v29, 4
    %vm58 = vcmp.le.s32.totalorder %v30, 4
    %vm59 = vcmp.le.s32.totalorder %v31, 4
    %vm60 = vmand %vm52, %vm56
    %vm61 = vmand %vm53, %vm57
    %vm62 = vmand %vm54, %vm58
    %vm63 = vmand %vm55, %vm59
    %vm64 = vcmp.ge.s32.totalorder %v32, 1
    %vm65 = vcmp.ge.s32.totalorder %v33, 1
    %vm66 = vcmp.ge.s32.totalorder %v34, 1
    %vm67 = vcmp.ge.s32.totalorder %v35, 1
    %vm68 = vmand %vm60, %vm64
    %vm69 = vmand %vm61, %vm65
    %vm70 = vmand %vm62, %vm66
    %vm71 = vmand %vm63, %vm67
    %vm72 = vcmp.le.s32.totalorder %v32, 4
    %vm73 = vcmp.le.s32.totalorder %v33, 4
    %vm74 = vcmp.le.s32.totalorder %v34, 4
    %vm75 = vcmp.le.s32.totalorder %v35, 4
    %vm76 = vmand %vm68, %vm72
    %vm77 = vmand %vm69, %vm73
    %vm78 = vmand %vm70, %vm74
    %vm79 = vmand %vm71, %vm75
    %v80 = vsel %vm76, 1, 0
    %v81 = vsel %vm77, 1, 0
    %v82 = vsel %vm78, 1, 0
    %v83 = vsel %vm79, 1, 0
    %v84 = vcvt.s32.f32 %v80
    %v85 = vcvt.s32.f32 %v81
    %v86 = vcvt.s32.f32 %v82
    %v87 = vcvt.s32.f32 %v83
    %88 = vst [vmem:[#allocation2] sm:$0xff] 0.0
    %89 = vst [vmem:[#allocation2 + $0x8] sm:$0xff] 0.0
    %90 = vst [vmem:[#allocation2 + $0x10] sm:$0xff] 0.0
    %91 = vst [vmem:[#allocation2 + $0x18] sm:$0xff] 0.0
    %92 = vst [vmem:[#allocation2 + $0x20] sm:$0xff] 0.0
    %93 = vst [vmem:[#allocation2 + $0x28] sm:$0xff] 0.0
    %94 = vst [vmem:[#allocation2 + $0x30] sm:$0xff] 0.0
    %95 = vst [vmem:[#allocation2 + $0x38] sm:$0xff] 0.0
    %96 = vst [vmem:[#allocation2 + $0x40] sm:$0xff] 0.0
    %97 = vst [vmem:[#allocation2 + $0x48] sm:$0xff] 0.0
    %98 = vst [vmem:[#allocation2 + $0x50] sm:$0xff] 0.0
    %99 = vst [vmem:[#allocation2 + $0x58] sm:$0xff] 0.0
    %100 = vst [vmem:[#allocation2 + $0x60] sm:$0xff] 0.0
    %101 = vst [vmem:[#allocation2 + $0x68] sm:$0xff] 0.0
    %102 = vst [vmem:[#allocation2 + $0x70] sm:$0xff] 0.0
    %103 = vst [vmem:[#allocation2 + $0x78] sm:$0xff] 0.0
    %104 = vst [vmem:[#allocation2 + $0x80] sm:$0xff] 0.0
    %105 = vst [vmem:[#allocation2 + $0x88] sm:$0xff] 0.0
    %106 = vst [vmem:[#allocation2 + $0x90] sm:$0xff] 0.0
    %107 = vst [vmem:[#allocation2 + $0x98] sm:$0xff] 0.0
    %108 = vst [vmem:[#allocation2 + $0xa0] sm:$0xff] 0.0
    %109 = vst [vmem:[#allocation2 + $0xa8] sm:$0xff] 0.0
    %110 = vst [vmem:[#allocation2 + $0xb0] sm:$0xff] 0.0
    %111 = vst [vmem:[#allocation2 + $0xb8] sm:$0xff] 0.0
    %112 = vst [vmem:[#allocation2 + $0xc0] sm:$0xff] 0.0
    %113 = vst [vmem:[#allocation2 + $0xc8] sm:$0xff] 0.0
    %114 = vst [vmem:[#allocation2 + $0xd0] sm:$0xff] 0.0
    %115 = vst [vmem:[#allocation2 + $0xd8] sm:$0xff] 0.0
    %116 = vst [vmem:[#allocation2 + $0xe0] sm:$0xff] 0.0
    %117 = vst [vmem:[#allocation2 + $0xe8] sm:$0xff] 0.0
    %118 = vst [vmem:[#allocation2 + $0xf0] sm:$0xff] 0.0
    %119 = vst [vmem:[#allocation2 + $0xf8] sm:$0xff] 0.0
    %120 = vst [vmem:[#allocation2 + $0x100] sm:$0xff] 0.0
    %121 = vst [vmem:[#allocation2 + $0x108] sm:$0xff] 0.0
    %122 = vst [vmem:[#allocation2 + $0x110] sm:$0xff] 0.0
    %123 = vst [vmem:[#allocation2 + $0x118] sm:$0xff] 0.0
    %124 = vst [vmem:[#allocation2 + $0x120] sm:$0xff] 0.0
    %125 = vst [vmem:[#allocation2 + $0x128] sm:$0xff] 0.0
    %126 = vst [vmem:[#allocation2 + $0x130] sm:$0xff] 0.0
    %127 = vst [vmem:[#allocation2 + $0x138] sm:$0xff] 0.0
    %128 = vst [vmem:[#allocation2 + $0x140] sm:$0xff] 0.0
    %129 = vst [vmem:[#allocation2 + $0x148] sm:$0xff] 0.0
    %130 = vst [vmem:[#allocation2 + $0x150] sm:$0xff] 0.0
    %131 = vst [vmem:[#allocation2 + $0x158] sm:$0xff] 0.0
    %132 = vst [vmem:[#allocation2 + $0x160] sm:$0xff] 0.0
    %133 = vst [vmem:[#allocation2 + $0x168] sm:$0xff] 0.0
    %134 = vst [vmem:[#allocation2 + $0x170] sm:$0xff] 0.0
    %135 = vst [vmem:[#allocation2 + $0x178] sm:$0xff] 0.0
    %136 = vst [vmem:[#allocation2 + $0x180] sm:$0xff] 0.0
    %137 = vst [vmem:[#allocation2 + $0x188] sm:$0xff] 0.0
    %138 = vst [vmem:[#allocation2 + $0x190] sm:$0xff] 0.0
    %139 = vst [vmem:[#allocation2 + $0x198] sm:$0xff] 0.0
    %140 = vst [vmem:[#allocation2 + $0x1a0] sm:$0xff] 0.0
    %141 = vst [vmem:[#allocation2 + $0x1a8] sm:$0xff] 0.0
    %142 = vst [vmem:[#allocation2 + $0x1b0] sm:$0xff] 0.0
    %143 = vst [vmem:[#allocation2 + $0x1b8] sm:$0xff] 0.0
    %144 = vst [vmem:[#allocation2 + $0x1c0] sm:$0xff] 0.0
    %145 = vst [vmem:[#allocation2 + $0x1c8] sm:$0xff] 0.0
    %146 = vst [vmem:[#allocation2 + $0x1d0] sm:$0xff] 0.0
    %147 = vst [vmem:[#allocation2 + $0x1d8] sm:$0xff] 0.0
    %148 = vst [vmem:[#allocation2 + $0x1e0] sm:$0xff] 0.0
    %149 = vst [vmem:[#allocation2 + $0x1e8] sm:$0xff] 0.0
    %150 = vst [vmem:[#allocation2 + $0x1f0] sm:$0xff] 0.0
    %151 = vst [vmem:[#allocation2 + $0x1f8] sm:$0xff] 0.0
    %v152 = vld [vmem:[%s0] sm:$0xf]
    %v154 = vlaneseq
    %v155 = vshrl.u32 %v154, 7
    %v156 = vsub.s32 0, %v155
    %v157 = vrot.slane %v152, %v156
    %v158 = vlaneseq
    %v159 = vshrl.u32 %v158, 7
    %v160 = vsub.s32 1, %v159
    %v161 = vrot.slane %v152, %v160
    %v162 = vlaneseq
    %v163 = vshrl.u32 %v162, 7
    %v164 = vsub.s32 2, %v163
    %v165 = vrot.slane %v152, %v164
    %v166 = vlaneseq
    %v167 = vshrl.u32 %v166, 7
    %v168 = vsub.s32 3, %v167
    %v169 = vrot.slane %v152, %v168
    %174 = vrot.lane.b32.xlu0 %v157, 73
    %v175 = vpop.permute.xlu0 %174
    %176 = vrot.lane.b32.xlu0 %v161, 73
    %v177 = vpop.permute.xlu0 %176
    %178 = vrot.lane.b32.xlu0 %v165, 73
    %v179 = vpop.permute.xlu0 %178
    %180 = vrot.lane.b32.xlu0 %v169, 73
    %v181 = vpop.permute.xlu0 %180
    %vm182 = vcmp.lt.s32.totalorder %v16, 73
    %v183 = vsel %vm182, %v179, %v181
    %v184 = vsel %vm182, %v177, %v179
    %v185 = vsel %vm182, %v175, %v177
    %v186 = vsel %vm182, %v181, %v175
    %v191 = vcombine.low %v186, %v185
    %v192 = vcombine.low %v184, %v183
    %v194 = vunpack.c.l.s4 1966171168
    %v195 = vunpack.c.0.s8 %v194
    %v196 = vlaneseq
    %v197 = vshrl.u32 %v196, 7
    %v198 = vsub.s32 %v195, %v197
    %v199 = vrot.slane %v191, %v198
    %v201 = vunpack.c.l.s4 1966171168
    %v202 = vunpack.c.0.s8 %v201
    %v203 = vlaneseq
    %v204 = vshrl.u32 %v203, 7
    %v205 = vsub.s32 %v202, %v204
    %v206 = vrot.slane %v192, %v205
    %v207 = vcombine.low %v199, %v206
    %v209 = vunpack.c.l.s4 1966171168
    %v210 = vunpack.c.0.s8 %v209
    %v211 = vlaneseq
    %v212 = vshrl.u32 %v211, 7
    %v213 = vsub.s32 %v210, %v212
    %v214 = vrot.slane %v207, %v213
    %v216 = vlaneseq
    %vm217 = vcmp.ge.s32.totalorder %v216, 0
    %vm218 = vcmp.lt.s32.totalorder %v216, 512
    %vm219 = vmand %vm217, %vm218
    %220 = vst.msk [vmem:[#allocation2] ss:$8 sm:$0xf] %vm219, %v214
    %221 = vst.msk [vmem:[#allocation2] ss:$8 sm:$0x0] %vm219, %v214
    %222 = vrot.lane.b32.xlu0 %v157, 72
    %v223 = vpop.permute.xlu0 %222
    %224 = vrot.lane.b32.xlu0 %v161, 72
    %v225 = vpop.permute.xlu0 %224
    %226 = vrot.lane.b32.xlu0 %v165, 72
    %v227 = vpop.permute.xlu0 %226
    %228 = vrot.lane.b32.xlu0 %v169, 72
    %v229 = vpop.permute.xlu0 %228
    %vm230 = vcmp.lt.s32.totalorder %v16, 72
    %v231 = vsel %vm230, %v227, %v229
    %v232 = vsel %vm230, %v225, %v227
    %v233 = vsel %vm230, %v223, %v225
    %v234 = vsel %vm230, %v229, %v223
    %v239 = vcombine.low %v234, %v233
    %v240 = vcombine.low %v232, %v231
    %v242 = vunpack.c.l.s4 1966171168
    %v243 = vunpack.c.0.s8 %v242
    %v244 = vlaneseq
    %v245 = vshrl.u32 %v244, 7
    %v246 = vsub.s32 %v243, %v245
    %v247 = vrot.slane %v239, %v246
    %v249 = vunpack.c.l.s4 1966171168
    %v250 = vunpack.c.0.s8 %v249
    %v251 = vlaneseq
    %v252 = vshrl.u32 %v251, 7
    %v253 = vsub.s32 %v250, %v252
    %v254 = vrot.slane %v240, %v253
    %v255 = vcombine.low %v247, %v254
    %v257 = vunpack.c.l.s4 1966171168
    %v258 = vunpack.c.0.s8 %v257
    %v259 = vlaneseq
    %v260 = vshrl.u32 %v259, 7
    %v261 = vsub.s32 %v258, %v260
    %v262 = vrot.slane %v255, %v261
    %s264 = scalar_lea.vmem [#allocation2], 1
    %265 = vst.msk [vmem:[%s264] ss:$8 sm:$0xf] %vm219, %v262
    %266 = vst.msk [vmem:[%s264] ss:$8 sm:$0x0] %vm219, %v262
    %267 = vrot.lane.b32.xlu0 %v157, 71
    %v268 = vpop.permute.xlu0 %267
    %269 = vrot.lane.b32.xlu0 %v161, 71
    %v270 = vpop.permute.xlu0 %269
    %271 = vrot.lane.b32.xlu0 %v165, 71
    %v272 = vpop.permute.xlu0 %271
    %273 = vrot.lane.b32.xlu0 %v169, 71
    %v274 = vpop.permute.xlu0 %273
    %vm275 = vcmp.lt.s32.totalorder %v16, 71
    %v276 = vsel %vm275, %v272, %v274
    %v277 = vsel %vm275, %v270, %v272
    %v278 = vsel %vm275, %v268, %v270
    %v279 = vsel %vm275, %v274, %v268
    %v284 = vcombine.low %v279, %v278
    %v285 = vcombine.low %v277, %v276
    %v287 = vunpack.c.l.s4 1966171168
    %v288 = vunpack.c.0.s8 %v287
    %v289 = vlaneseq
    %v290 = vshrl.u32 %v289, 7
    %v291 = vsub.s32 %v288, %v290
    %v292 = vrot.slane %v284, %v291
    %v294 = vunpack.c.l.s4 1966171168
    %v295 = vunpack.c.0.s8 %v294
    %v296 = vlaneseq
    %v297 = vshrl.u32 %v296, 7
    %v298 = vsub.s32 %v295, %v297
    %v299 = vrot.slane %v285, %v298
    %v300 = vcombine.low %v292, %v299
    %v302 = vunpack.c.l.s4 1966171168
    %v303 = vunpack.c.0.s8 %v302
    %v304 = vlaneseq
    %v305 = vshrl.u32 %v304, 7
    %v306 = vsub.s32 %v303, %v305
    %v307 = vrot.slane %v300, %v306
    %s309 = scalar_lea.vmem [#allocation2], 2
    %310 = vst.msk [vmem:[%s309] ss:$8 sm:$0xf] %vm219, %v307
    %311 = vst.msk [vmem:[%s309] ss:$8 sm:$0x0] %vm219, %v307
    %312 = vrot.lane.b32.xlu0 %v157, 65
    %v313 = vpop.permute.xlu0 %312
    %314 = vrot.lane.b32.xlu0 %v161, 65
    %v315 = vpop.permute.xlu0 %314
    %316 = vrot.lane.b32.xlu0 %v165, 65
    %v317 = vpop.permute.xlu0 %316
    %318 = vrot.lane.b32.xlu0 %v169, 65
    %v319 = vpop.permute.xlu0 %318
    %vm320 = vcmp.lt.s32.totalorder %v16, 65
    %v321 = vsel %vm320, %v317, %v319
    %v322 = vsel %vm320, %v315, %v317
    %v323 = vsel %vm320, %v313, %v315
    %v324 = vsel %vm320, %v319, %v313
    %v329 = vcombine.low %v324, %v323
    %v330 = vcombine.low %v322, %v321
    %v332 = vunpack.c.l.s4 1966171168
    %v333 = vunpack.c.0.s8 %v332
    %v334 = vlaneseq
    %v335 = vshrl.u32 %v334, 7
    %v336 = vsub.s32 %v333, %v335
    %v337 = vrot.slane %v329, %v336
    %v339 = vunpack.c.l.s4 1966171168
    %v340 = vunpack.c.0.s8 %v339
    %v341 = vlaneseq
    %v342 = vshrl.u32 %v341, 7
    %v343 = vsub.s32 %v340, %v342
    %v344 = vrot.slane %v330, %v343
    %v345 = vcombine.low %v337, %v344
    %v347 = vunpack.c.l.s4 1966171168
    %v348 = vunpack.c.0.s8 %v347
    %v349 = vlaneseq
    %v350 = vshrl.u32 %v349, 7
    %v351 = vsub.s32 %v348, %v350
    %v352 = vrot.slane %v345, %v351
    %s354 = scalar_lea.vmem [#allocation2], 3
    %355 = vst.msk [vmem:[%s354] ss:$8 sm:$0xf] %vm219, %v352
    %356 = vst.msk [vmem:[%s354] ss:$8 sm:$0x0] %vm219, %v352
    %357 = vrot.lane.b32.xlu0 %v157, 64
    %v358 = vpop.permute.xlu0 %357
    %359 = vrot.lane.b32.xlu0 %v161, 64
    %v360 = vpop.permute.xlu0 %359
    %361 = vrot.lane.b32.xlu0 %v165, 64
    %v362 = vpop.permute.xlu0 %361
    %363 = vrot.lane.b32.xlu0 %v169, 64
    %v364 = vpop.permute.xlu0 %363
    %vm365 = vcmp.lt.s32.totalorder %v16, 64
    %v366 = vsel %vm365, %v362, %v364
    %v367 = vsel %vm365, %v360, %v362
    %v368 = vsel %vm365, %v358, %v360
    %v369 = vsel %vm365, %v364, %v358
    %v374 = vcombine.low %v369, %v368
    %v375 = vcombine.low %v367, %v366
    %v377 = vunpack.c.l.s4 1966171168
    %v378 = vunpack.c.0.s8 %v377
    %v379 = vlaneseq
    %v380 = vshrl.u32 %v379, 7
    %v381 = vsub.s32 %v378, %v380
    %v382 = vrot.slane %v374, %v381
    %v384 = vunpack.c.l.s4 1966171168
    %v385 = vunpack.c.0.s8 %v384
    %v386 = vlaneseq
    %v387 = vshrl.u32 %v386, 7
    %v388 = vsub.s32 %v385, %v387
    %v389 = vrot.slane %v375, %v388
    %v390 = vcombine.low %v382, %v389
    %v392 = vunpack.c.l.s4 1966171168
    %v393 = vunpack.c.0.s8 %v392
    %v394 = vlaneseq
    %v395 = vshrl.u32 %v394, 7
    %v396 = vsub.s32 %v393, %v395
    %v397 = vrot.slane %v390, %v396
    %s399 = scalar_lea.vmem [#allocation2], 4
    %400 = vst.msk [vmem:[%s399] ss:$8 sm:$0xf] %vm219, %v397
    %401 = vst.msk [vmem:[%s399] ss:$8 sm:$0x0] %vm219, %v397
    %402 = vrot.lane.b32.xlu0 %v157, 63
    %v403 = vpop.permute.xlu0 %402
    %404 = vrot.lane.b32.xlu0 %v161, 63
    %v405 = vpop.permute.xlu0 %404
    %406 = vrot.lane.b32.xlu0 %v165, 63
    %v407 = vpop.permute.xlu0 %406
    %408 = vrot.lane.b32.xlu0 %v169, 63
    %v409 = vpop.permute.xlu0 %408
    %vm410 = vcmp.lt.s32.totalorder %v16, 63
    %v411 = vsel %vm410, %v407, %v409
    %v412 = vsel %vm410, %v405, %v407
    %v413 = vsel %vm410, %v403, %v405
    %v414 = vsel %vm410, %v409, %v403
    %v419 = vcombine.low %v414, %v413
    %v420 = vcombine.low %v412, %v411
    %v422 = vunpack.c.l.s4 1966171168
    %v423 = vunpack.c.0.s8 %v422
    %v424 = vlaneseq
    %v425 = vshrl.u32 %v424, 7
    %v426 = vsub.s32 %v423, %v425
    %v427 = vrot.slane %v419, %v426
    %v429 = vunpack.c.l.s4 1966171168
    %v430 = vunpack.c.0.s8 %v429
    %v431 = vlaneseq
    %v432 = vshrl.u32 %v431, 7
    %v433 = vsub.s32 %v430, %v432
    %v434 = vrot.slane %v420, %v433
    %v435 = vcombine.low %v427, %v434
    %v437 = vunpack.c.l.s4 1966171168
    %v438 = vunpack.c.0.s8 %v437
    %v439 = vlaneseq
    %v440 = vshrl.u32 %v439, 7
    %v441 = vsub.s32 %v438, %v440
    %v442 = vrot.slane %v435, %v441
    %s444 = scalar_lea.vmem [#allocation2], 5
    %445 = vst.msk [vmem:[%s444] ss:$8 sm:$0xf] %vm219, %v442
    %446 = vst.msk [vmem:[%s444] ss:$8 sm:$0x0] %vm219, %v442
    %447 = vrot.lane.b32.xlu0 %v157, 57
    %v448 = vpop.permute.xlu0 %447
    %449 = vrot.lane.b32.xlu0 %v161, 57
    %v450 = vpop.permute.xlu0 %449
    %451 = vrot.lane.b32.xlu0 %v165, 57
    %v452 = vpop.permute.xlu0 %451
    %453 = vrot.lane.b32.xlu0 %v169, 57
    %v454 = vpop.permute.xlu0 %453
    %vm455 = vcmp.lt.s32.totalorder %v16, 57
    %v456 = vsel %vm455, %v452, %v454
    %v457 = vsel %vm455, %v450, %v452
    %v458 = vsel %vm455, %v448, %v450
    %v459 = vsel %vm455, %v454, %v448
    %v464 = vcombine.low %v459, %v458
    %v465 = vcombine.low %v457, %v456
    %v467 = vunpack.c.l.s4 1966171168
    %v468 = vunpack.c.0.s8 %v467
    %v469 = vlaneseq
    %v470 = vshrl.u32 %v469, 7
    %v471 = vsub.s32 %v468, %v470
    %v472 = vrot.slane %v464, %v471
    %v474 = vunpack.c.l.s4 1966171168
    %v475 = vunpack.c.0.s8 %v474
    %v476 = vlaneseq
    %v477 = vshrl.u32 %v476, 7
    %v478 = vsub.s32 %v475, %v477
    %v479 = vrot.slane %v465, %v478
    %v480 = vcombine.low %v472, %v479
    %v482 = vunpack.c.l.s4 1966171168
    %v483 = vunpack.c.0.s8 %v482
    %v484 = vlaneseq
    %v485 = vshrl.u32 %v484, 7
    %v486 = vsub.s32 %v483, %v485
    %v487 = vrot.slane %v480, %v486
    %s489 = scalar_lea.vmem [#allocation2], 6
    %490 = vst.msk [vmem:[%s489] ss:$8 sm:$0xf] %vm219, %v487
    %491 = vst.msk [vmem:[%s489] ss:$8 sm:$0x0] %vm219, %v487
    %492 = vrot.lane.b32.xlu0 %v157, 56
    %v493 = vpop.permute.xlu0 %492
    %494 = vrot.lane.b32.xlu0 %v161, 56
    %v495 = vpop.permute.xlu0 %494
    %496 = vrot.lane.b32.xlu0 %v165, 56
    %v497 = vpop.permute.xlu0 %496
    %498 = vrot.lane.b32.xlu0 %v169, 56
    %v499 = vpop.permute.xlu0 %498
    %vm500 = vcmp.lt.s32.totalorder %v16, 56
    %v501 = vsel %vm500, %v497, %v499
    %v502 = vsel %vm500, %v495, %v497
    %v503 = vsel %vm500, %v493, %v495
    %v504 = vsel %vm500, %v499, %v493
    %v509 = vcombine.low %v504, %v503
    %v510 = vcombine.low %v502, %v501
    %v512 = vunpack.c.l.s4 1966171168
    %v513 = vunpack.c.0.s8 %v512
    %v514 = vlaneseq
    %v515 = vshrl.u32 %v514, 7
    %v516 = vsub.s32 %v513, %v515
    %v517 = vrot.slane %v509, %v516
    %v519 = vunpack.c.l.s4 1966171168
    %v520 = vunpack.c.0.s8 %v519
    %v521 = vlaneseq
    %v522 = vshrl.u32 %v521, 7
    %v523 = vsub.s32 %v520, %v522
    %v524 = vrot.slane %v510, %v523
    %v525 = vcombine.low %v517, %v524
    %v527 = vunpack.c.l.s4 1966171168
    %v528 = vunpack.c.0.s8 %v527
    %v529 = vlaneseq
    %v530 = vshrl.u32 %v529, 7
    %v531 = vsub.s32 %v528, %v530
    %v532 = vrot.slane %v525, %v531
    %s534 = scalar_lea.vmem [#allocation2], 7
    %535 = vst.msk [vmem:[%s534] ss:$8 sm:$0xf] %vm219, %v532
    %536 = vst.msk [vmem:[%s534] ss:$8 sm:$0x0] %vm219, %v532
    %537 = vrot.lane.b32.xlu0 %v157, 55
    %v538 = vpop.permute.xlu0 %537
    %539 = vrot.lane.b32.xlu0 %v161, 55
    %v540 = vpop.permute.xlu0 %539
    %541 = vrot.lane.b32.xlu0 %v165, 55
    %v542 = vpop.permute.xlu0 %541
    %543 = vrot.lane.b32.xlu0 %v169, 55
    %v544 = vpop.permute.xlu0 %543
    %vm545 = vcmp.lt.s32.totalorder %v16, 55
    %v546 = vsel %vm545, %v542, %v544
    %v547 = vsel %vm545, %v540, %v542
    %v548 = vsel %vm545, %v538, %v540
    %v549 = vsel %vm545, %v544, %v538
    %v554 = vcombine.low %v549, %v548
    %v555 = vcombine.low %v547, %v546
    %v557 = vunpack.c.l.s4 1966171168
    %v558 = vunpack.c.0.s8 %v557
    %v559 = vlaneseq
    %v560 = vshrl.u32 %v559, 7
    %v561 = vsub.s32 %v558, %v560
    %v562 = vrot.slane %v554, %v561
    %v564 = vunpack.c.l.s4 1966171168
    %v565 = vunpack.c.0.s8 %v564
    %v566 = vlaneseq
    %v567 = vshrl.u32 %v566, 7
    %v568 = vsub.s32 %v565, %v567
    %v569 = vrot.slane %v555, %v568
    %v570 = vcombine.low %v562, %v569
    %v572 = vunpack.c.l.s4 1966171168
    %v573 = vunpack.c.0.s8 %v572
    %v574 = vlaneseq
    %v575 = vshrl.u32 %v574, 7
    %v576 = vsub.s32 %v573, %v575
    %v577 = vrot.slane %v570, %v576
    %s579 = scalar_lea.vmem [#allocation2], 32
    %580 = vst.msk [vmem:[%s579] ss:$8 sm:$0xf] %vm219, %v577
    %581 = vst.msk [vmem:[%s579] ss:$8 sm:$0x0] %vm219, %v577
    %582 = vrot.lane.b32.xlu0 %v157, 9
    %v583 = vpop.permute.xlu0 %582
    %584 = vrot.lane.b32.xlu0 %v161, 9
    %v585 = vpop.permute.xlu0 %584
    %586 = vrot.lane.b32.xlu0 %v165, 9
    %v587 = vpop.permute.xlu0 %586
    %588 = vrot.lane.b32.xlu0 %v169, 9
    %v589 = vpop.permute.xlu0 %588
    %vm590 = vcmp.lt.s32.totalorder %v16, 9
    %v591 = vsel %vm590, %v587, %v589
    %v592 = vsel %vm590, %v585, %v587
    %v593 = vsel %vm590, %v583, %v585
    %v594 = vsel %vm590, %v589, %v583
    %v599 = vcombine.low %v594, %v593
    %v600 = vcombine.low %v592, %v591
    %v602 = vunpack.c.l.s4 1966171168
    %v603 = vunpack.c.0.s8 %v602
    %v604 = vlaneseq
    %v605 = vshrl.u32 %v604, 7
    %v606 = vsub.s32 %v603, %v605
    %v607 = vrot.slane %v599, %v606
    %v609 = vunpack.c.l.s4 1966171168
    %v610 = vunpack.c.0.s8 %v609
    %v611 = vlaneseq
    %v612 = vshrl.u32 %v611, 7
    %v613 = vsub.s32 %v610, %v612
    %v614 = vrot.slane %v600, %v613
    %v615 = vcombine.low %v607, %v614
    %v617 = vunpack.c.l.s4 1966171168
    %v618 = vunpack.c.0.s8 %v617
    %v619 = vlaneseq
    %v620 = vshrl.u32 %v619, 7
    %v621 = vsub.s32 %v618, %v620
    %v622 = vrot.slane %v615, %v621
    %s624 = scalar_lea.vmem [#allocation2], 33
    %625 = vst.msk [vmem:[%s624] ss:$8 sm:$0xf] %vm219, %v622
    %626 = vst.msk [vmem:[%s624] ss:$8 sm:$0x0] %vm219, %v622
    %627 = vrot.lane.b32.xlu0 %v157, 8
    %v628 = vpop.permute.xlu0 %627
    %629 = vrot.lane.b32.xlu0 %v161, 8
    %v630 = vpop.permute.xlu0 %629
    %631 = vrot.lane.b32.xlu0 %v165, 8
    %v632 = vpop.permute.xlu0 %631
    %633 = vrot.lane.b32.xlu0 %v169, 8
    %v634 = vpop.permute.xlu0 %633
    %vm635 = vcmp.lt.s32.totalorder %v16, 8
    %v636 = vsel %vm635, %v632, %v634
    %v637 = vsel %vm635, %v630, %v632
    %v638 = vsel %vm635, %v628, %v630
    %v639 = vsel %vm635, %v634, %v628
    %v644 = vcombine.low %v639, %v638
    %v645 = vcombine.low %v637, %v636
    %v647 = vunpack.c.l.s4 1966171168
    %v648 = vunpack.c.0.s8 %v647
    %v649 = vlaneseq
    %v650 = vshrl.u32 %v649, 7
    %v651 = vsub.s32 %v648, %v650
    %v652 = vrot.slane %v644, %v651
    %v654 = vunpack.c.l.s4 1966171168
    %v655 = vunpack.c.0.s8 %v654
    %v656 = vlaneseq
    %v657 = vshrl.u32 %v656, 7
    %v658 = vsub.s32 %v655, %v657
    %v659 = vrot.slane %v645, %v658
    %v660 = vcombine.low %v652, %v659
    %v662 = vunpack.c.l.s4 1966171168
    %v663 = vunpack.c.0.s8 %v662
    %v664 = vlaneseq
    %v665 = vshrl.u32 %v664, 7
    %v666 = vsub.s32 %v663, %v665
    %v667 = vrot.slane %v660, %v666
    %s669 = scalar_lea.vmem [#allocation2], 34
    %670 = vst.msk [vmem:[%s669] ss:$8 sm:$0xf] %vm219, %v667
    %671 = vst.msk [vmem:[%s669] ss:$8 sm:$0x0] %vm219, %v667
    %672 = vrot.lane.b32.xlu0 %v157, 7
    %v673 = vpop.permute.xlu0 %672
    %674 = vrot.lane.b32.xlu0 %v161, 7
    %v675 = vpop.permute.xlu0 %674
    %676 = vrot.lane.b32.xlu0 %v165, 7
    %v677 = vpop.permute.xlu0 %676
    %678 = vrot.lane.b32.xlu0 %v169, 7
    %v679 = vpop.permute.xlu0 %678
    %vm680 = vcmp.lt.s32.totalorder %v16, 7
    %v681 = vsel %vm680, %v677, %v679
    %v682 = vsel %vm680, %v675, %v677
    %v683 = vsel %vm680, %v673, %v675
    %v684 = vsel %vm680, %v679, %v673
    %v689 = vcombine.low %v684, %v683
    %v690 = vcombine.low %v682, %v681
    %v692 = vunpack.c.l.s4 1966171168
    %v693 = vunpack.c.0.s8 %v692
    %v694 = vlaneseq
    %v695 = vshrl.u32 %v694, 7
    %v696 = vsub.s32 %v693, %v695
    %v697 = vrot.slane %v689, %v696
    %v699 = vunpack.c.l.s4 1966171168
    %v700 = vunpack.c.0.s8 %v699
    %v701 = vlaneseq
    %v702 = vshrl.u32 %v701, 7
    %v703 = vsub.s32 %v700, %v702
    %v704 = vrot.slane %v690, %v703
    %v705 = vcombine.low %v697, %v704
    %v707 = vunpack.c.l.s4 1966171168
    %v708 = vunpack.c.0.s8 %v707
    %v709 = vlaneseq
    %v710 = vshrl.u32 %v709, 7
    %v711 = vsub.s32 %v708, %v710
    %v712 = vrot.slane %v705, %v711
    %s714 = scalar_lea.vmem [#allocation2], 35
    %715 = vst.msk [vmem:[%s714] ss:$8 sm:$0xf] %vm219, %v712
    %716 = vst.msk [vmem:[%s714] ss:$8 sm:$0x0] %vm219, %v712
    %717 = vrot.lane.b32.xlu0 %v157, 1
    %v718 = vpop.permute.xlu0 %717
    %719 = vrot.lane.b32.xlu0 %v161, 1
    %v720 = vpop.permute.xlu0 %719
    %721 = vrot.lane.b32.xlu0 %v165, 1
    %v722 = vpop.permute.xlu0 %721
    %723 = vrot.lane.b32.xlu0 %v169, 1
    %v724 = vpop.permute.xlu0 %723
    %vm725 = vcmp.lt.s32.totalorder %v16, 1
    %v726 = vsel %vm725, %v722, %v724
    %v727 = vsel %vm725, %v720, %v722
    %v728 = vsel %vm725, %v718, %v720
    %v729 = vsel %vm725, %v724, %v718
    %v734 = vcombine.low %v729, %v728
    %v735 = vcombine.low %v727, %v726
    %v737 = vunpack.c.l.s4 1966171168
    %v738 = vunpack.c.0.s8 %v737
    %v739 = vlaneseq
    %v740 = vshrl.u32 %v739, 7
    %v741 = vsub.s32 %v738, %v740
    %v742 = vrot.slane %v734, %v741
    %v744 = vunpack.c.l.s4 1966171168
    %v745 = vunpack.c.0.s8 %v744
    %v746 = vlaneseq
    %v747 = vshrl.u32 %v746, 7
    %v748 = vsub.s32 %v745, %v747
    %v749 = vrot.slane %v735, %v748
    %v750 = vcombine.low %v742, %v749
    %v752 = vunpack.c.l.s4 1966171168
    %v753 = vunpack.c.0.s8 %v752
    %v754 = vlaneseq
    %v755 = vshrl.u32 %v754, 7
    %v756 = vsub.s32 %v753, %v755
    %v757 = vrot.slane %v750, %v756
    %s759 = scalar_lea.vmem [#allocation2], 36
    %760 = vst.msk [vmem:[%s759] ss:$8 sm:$0xf] %vm219, %v757
    %761 = vst.msk [vmem:[%s759] ss:$8 sm:$0x0] %vm219, %v757
    %s762 = scalar_lea.vmem [#allocation2], 37
    %763 = vst.msk [vmem:[%s762] ss:$8 sm:$0xf] %vm219, %v152
    %764 = vst.msk [vmem:[%s762] ss:$8 sm:$0x0] %vm219, %v152
    %765 = vrot.lane.b32.xlu0 %v157, 127
    %v766 = vpop.permute.xlu0 %765
    %767 = vrot.lane.b32.xlu0 %v161, 127
    %v768 = vpop.permute.xlu0 %767
    %769 = vrot.lane.b32.xlu0 %v165, 127
    %v770 = vpop.permute.xlu0 %769
    %771 = vrot.lane.b32.xlu0 %v169, 127
    %v772 = vpop.permute.xlu0 %771
    %vm773 = vcmp.lt.s32.totalorder %v16, 127
    %v774 = vsel %vm773, %v770, %v772
    %v775 = vsel %vm773, %v768, %v770
    %v776 = vsel %vm773, %v766, %v768
    %v777 = vsel %vm773, %v772, %v766
    %v782 = vcombine.low %v776, %v775
    %v783 = vcombine.low %v774, %v777
    %v785 = vunpack.c.l.s4 1966171168
    %v786 = vunpack.c.0.s8 %v785
    %v787 = vlaneseq
    %v788 = vshrl.u32 %v787, 7
    %v789 = vsub.s32 %v786, %v788
    %v790 = vrot.slane %v782, %v789
    %v792 = vunpack.c.l.s4 1966171168
    %v793 = vunpack.c.0.s8 %v792
    %v794 = vlaneseq
    %v795 = vshrl.u32 %v794, 7
    %v796 = vsub.s32 %v793, %v795
    %v797 = vrot.slane %v783, %v796
    %v798 = vcombine.low %v790, %v797
    %v800 = vunpack.c.l.s4 1966171168
    %v801 = vunpack.c.0.s8 %v800
    %v802 = vlaneseq
    %v803 = vshrl.u32 %v802, 7
    %v804 = vsub.s32 %v801, %v803
    %v805 = vrot.slane %v798, %v804
    %s807 = scalar_lea.vmem [#allocation2], 38
    %808 = vst.msk [vmem:[%s807] ss:$8 sm:$0xf] %vm219, %v805
    %809 = vst.msk [vmem:[%s807] ss:$8 sm:$0x0] %vm219, %v805
    %810 = vrot.lane.b32.xlu0 %v157, 121
    %v811 = vpop.permute.xlu0 %810
    %812 = vrot.lane.b32.xlu0 %v161, 121
    %v813 = vpop.permute.xlu0 %812
    %814 = vrot.lane.b32.xlu0 %v165, 121
    %v815 = vpop.permute.xlu0 %814
    %816 = vrot.lane.b32.xlu0 %v169, 121
    %v817 = vpop.permute.xlu0 %816
    %vm818 = vcmp.lt.s32.totalorder %v16, 121
    %v819 = vsel %vm818, %v815, %v817
    %v820 = vsel %vm818, %v813, %v815
    %v821 = vsel %vm818, %v811, %v813
    %v822 = vsel %vm818, %v817, %v811
    %v827 = vcombine.low %v821, %v820
    %v828 = vcombine.low %v819, %v822
    %v830 = vunpack.c.l.s4 1966171168
    %v831 = vunpack.c.0.s8 %v830
    %v832 = vlaneseq
    %v833 = vshrl.u32 %v832, 7
    %v834 = vsub.s32 %v831, %v833
    %v835 = vrot.slane %v827, %v834
    %v837 = vunpack.c.l.s4 1966171168
    %v838 = vunpack.c.0.s8 %v837
    %v839 = vlaneseq
    %v840 = vshrl.u32 %v839, 7
    %v841 = vsub.s32 %v838, %v840
    %v842 = vrot.slane %v828, %v841
    %v843 = vcombine.low %v835, %v842
    %v845 = vunpack.c.l.s4 1966171168
    %v846 = vunpack.c.0.s8 %v845
    %v847 = vlaneseq
    %v848 = vshrl.u32 %v847, 7
    %v849 = vsub.s32 %v846, %v848
    %v850 = vrot.slane %v843, %v849
    %s852 = scalar_lea.vmem [#allocation2], 39
    %853 = vst.msk [vmem:[%s852] ss:$8 sm:$0xf] %vm219, %v850
    %854 = vst.msk [vmem:[%s852] ss:$8 sm:$0x0] %vm219, %v850
    %855 = vrot.lane.b32.xlu0 %v157, 120
    %v856 = vpop.permute.xlu0 %855
    %857 = vrot.lane.b32.xlu0 %v161, 120
    %v858 = vpop.permute.xlu0 %857
    %859 = vrot.lane.b32.xlu0 %v165, 120
    %v860 = vpop.permute.xlu0 %859
    %861 = vrot.lane.b32.xlu0 %v169, 120
    %v862 = vpop.permute.xlu0 %861
    %vm863 = vcmp.lt.s32.totalorder %v16, 120
    %v864 = vsel %vm863, %v860, %v862
    %v865 = vsel %vm863, %v858, %v860
    %v866 = vsel %vm863, %v856, %v858
    %v867 = vsel %vm863, %v862, %v856
    %v872 = vcombine.low %v866, %v865
    %v873 = vcombine.low %v864, %v867
    %v875 = vunpack.c.l.s4 1966171168
    %v876 = vunpack.c.0.s8 %v875
    %v877 = vlaneseq
    %v878 = vshrl.u32 %v877, 7
    %v879 = vsub.s32 %v876, %v878
    %v880 = vrot.slane %v872, %v879
    %v882 = vunpack.c.l.s4 1966171168
    %v883 = vunpack.c.0.s8 %v882
    %v884 = vlaneseq
    %v885 = vshrl.u32 %v884, 7
    %v886 = vsub.s32 %v883, %v885
    %v887 = vrot.slane %v873, %v886
    %v888 = vcombine.low %v880, %v887
    %v890 = vunpack.c.l.s4 1966171168
    %v891 = vunpack.c.0.s8 %v890
    %v892 = vlaneseq
    %v893 = vshrl.u32 %v892, 7
    %v894 = vsub.s32 %v891, %v893
    %v895 = vrot.slane %v888, %v894
    %s897 = scalar_lea.vmem [#allocation2], 64
    %898 = vst.msk [vmem:[%s897] ss:$8 sm:$0xf] %vm219, %v895
    %899 = vst.msk [vmem:[%s897] ss:$8 sm:$0x0] %vm219, %v895
    %900 = vrot.lane.b32.xlu0 %v157, 119
    %v901 = vpop.permute.xlu0 %900
    %902 = vrot.lane.b32.xlu0 %v161, 119
    %v903 = vpop.permute.xlu0 %902
    %904 = vrot.lane.b32.xlu0 %v165, 119
    %v905 = vpop.permute.xlu0 %904
    %906 = vrot.lane.b32.xlu0 %v169, 119
    %v907 = vpop.permute.xlu0 %906
    %vm908 = vcmp.lt.s32.totalorder %v16, 119
    %v909 = vsel %vm908, %v905, %v907
    %v910 = vsel %vm908, %v903, %v905
    %v911 = vsel %vm908, %v901, %v903
    %v912 = vsel %vm908, %v907, %v901
    %v917 = vcombine.low %v911, %v910
    %v918 = vcombine.low %v909, %v912
    %v920 = vunpack.c.l.s4 1966171168
    %v921 = vunpack.c.0.s8 %v920
    %v922 = vlaneseq
    %v923 = vshrl.u32 %v922, 7
    %v924 = vsub.s32 %v921, %v923
    %v925 = vrot.slane %v917, %v924
    %v927 = vunpack.c.l.s4 1966171168
    %v928 = vunpack.c.0.s8 %v927
    %v929 = vlaneseq
    %v930 = vshrl.u32 %v929, 7
    %v931 = vsub.s32 %v928, %v930
    %v932 = vrot.slane %v918, %v931
    %v933 = vcombine.low %v925, %v932
    %v935 = vunpack.c.l.s4 1966171168
    %v936 = vunpack.c.0.s8 %v935
    %v937 = vlaneseq
    %v938 = vshrl.u32 %v937, 7
    %v939 = vsub.s32 %v936, %v938
    %v940 = vrot.slane %v933, %v939
    %s942 = scalar_lea.vmem [#allocation2], 65
    %943 = vst.msk [vmem:[%s942] ss:$8 sm:$0xf] %vm219, %v940
    %944 = vst.msk [vmem:[%s942] ss:$8 sm:$0x0] %vm219, %v940
    %v945 = vcombine.low %v185, %v184
    %v946 = vcombine.low %v183, %v186
    %v948 = vunpack.c.l.s4 1966171168
    %v949 = vunpack.c.0.s8 %v948
    %v950 = vlaneseq
    %v951 = vshrl.u32 %v950, 7
    %v952 = vsub.s32 %v949, %v951
    %v953 = vrot.slane %v945, %v952
    %v955 = vunpack.c.l.s4 1966171168
    %v956 = vunpack.c.0.s8 %v955
    %v957 = vlaneseq
    %v958 = vshrl.u32 %v957, 7
    %v959 = vsub.s32 %v956, %v958
    %v960 = vrot.slane %v946, %v959
    %v961 = vcombine.low %v953, %v960
    %v963 = vunpack.c.l.s4 1966171168
    %v964 = vunpack.c.0.s8 %v963
    %v965 = vlaneseq
    %v966 = vshrl.u32 %v965, 7
    %v967 = vsub.s32 %v964, %v966
    %v968 = vrot.slane %v961, %v967
    %s970 = scalar_lea.vmem [#allocation2], 66
    %971 = vst.msk [vmem:[%s970] ss:$8 sm:$0xf] %vm219, %v968
    %972 = vst.msk [vmem:[%s970] ss:$8 sm:$0x0] %vm219, %v968
    %v973 = vcombine.low %v233, %v232
    %v974 = vcombine.low %v231, %v234
    %v976 = vunpack.c.l.s4 1966171168
    %v977 = vunpack.c.0.s8 %v976
    %v978 = vlaneseq
    %v979 = vshrl.u32 %v978, 7
    %v980 = vsub.s32 %v977, %v979
    %v981 = vrot.slane %v973, %v980
    %v983 = vunpack.c.l.s4 1966171168
    %v984 = vunpack.c.0.s8 %v983
    %v985 = vlaneseq
    %v986 = vshrl.u32 %v985, 7
    %v987 = vsub.s32 %v984, %v986
    %v988 = vrot.slane %v974, %v987
    %v989 = vcombine.low %v981, %v988
    %v991 = vunpack.c.l.s4 1966171168
    %v992 = vunpack.c.0.s8 %v991
    %v993 = vlaneseq
    %v994 = vshrl.u32 %v993, 7
    %v995 = vsub.s32 %v992, %v994
    %v996 = vrot.slane %v989, %v995
    %s998 = scalar_lea.vmem [#allocation2], 67
    %999 = vst.msk [vmem:[%s998] ss:$8 sm:$0xf] %vm219, %v996
    %1000 = vst.msk [vmem:[%s998] ss:$8 sm:$0x0] %vm219, %v996
    %v1001 = vcombine.low %v278, %v277
    %v1002 = vcombine.low %v276, %v279
    %v1004 = vunpack.c.l.s4 1966171168
    %v1005 = vunpack.c.0.s8 %v1004
    %v1006 = vlaneseq
    %v1007 = vshrl.u32 %v1006, 7
    %v1008 = vsub.s32 %v1005, %v1007
    %v1009 = vrot.slane %v1001, %v1008
    %v1011 = vunpack.c.l.s4 1966171168
    %v1012 = vunpack.c.0.s8 %v1011
    %v1013 = vlaneseq
    %v1014 = vshrl.u32 %v1013, 7
    %v1015 = vsub.s32 %v1012, %v1014
    %v1016 = vrot.slane %v1002, %v1015
    %v1017 = vcombine.low %v1009, %v1016
    %v1019 = vunpack.c.l.s4 1966171168
    %v1020 = vunpack.c.0.s8 %v1019
    %v1021 = vlaneseq
    %v1022 = vshrl.u32 %v1021, 7
    %v1023 = vsub.s32 %v1020, %v1022
    %v1024 = vrot.slane %v1017, %v1023
    %s1026 = scalar_lea.vmem [#allocation2], 68
    %1027 = vst.msk [vmem:[%s1026] ss:$8 sm:$0xf] %vm219, %v1024
    %1028 = vst.msk [vmem:[%s1026] ss:$8 sm:$0x0] %vm219, %v1024
    %v1029 = vcombine.low %v323, %v322
    %v1030 = vcombine.low %v321, %v324
    %v1032 = vunpack.c.l.s4 1966171168
    %v1033 = vunpack.c.0.s8 %v1032
    %v1034 = vlaneseq
    %v1035 = vshrl.u32 %v1034, 7
    %v1036 = vsub.s32 %v1033, %v1035
    %v1037 = vrot.slane %v1029, %v1036
    %v1039 = vunpack.c.l.s4 1966171168
    %v1040 = vunpack.c.0.s8 %v1039
    %v1041 = vlaneseq
    %v1042 = vshrl.u32 %v1041, 7
    %v1043 = vsub.s32 %v1040, %v1042
    %v1044 = vrot.slane %v1030, %v1043
    %v1045 = vcombine.low %v1037, %v1044
    %v1047 = vunpack.c.l.s4 1966171168
    %v1048 = vunpack.c.0.s8 %v1047
    %v1049 = vlaneseq
    %v1050 = vshrl.u32 %v1049, 7
    %v1051 = vsub.s32 %v1048, %v1050
    %v1052 = vrot.slane %v1045, %v1051
    %s1054 = scalar_lea.vmem [#allocation2], 69
    %1055 = vst.msk [vmem:[%s1054] ss:$8 sm:$0xf] %vm219, %v1052
    %1056 = vst.msk [vmem:[%s1054] ss:$8 sm:$0x0] %vm219, %v1052
    %v1057 = vcombine.low %v368, %v367
    %v1058 = vcombine.low %v366, %v369
    %v1060 = vunpack.c.l.s4 1966171168
    %v1061 = vunpack.c.0.s8 %v1060
    %v1062 = vlaneseq
    %v1063 = vshrl.u32 %v1062, 7
    %v1064 = vsub.s32 %v1061, %v1063
    %v1065 = vrot.slane %v1057, %v1064
    %v1067 = vunpack.c.l.s4 1966171168
    %v1068 = vunpack.c.0.s8 %v1067
    %v1069 = vlaneseq
    %v1070 = vshrl.u32 %v1069, 7
    %v1071 = vsub.s32 %v1068, %v1070
    %v1072 = vrot.slane %v1058, %v1071
    %v1073 = vcombine.low %v1065, %v1072
    %v1075 = vunpack.c.l.s4 1966171168
    %v1076 = vunpack.c.0.s8 %v1075
    %v1077 = vlaneseq
    %v1078 = vshrl.u32 %v1077, 7
    %v1079 = vsub.s32 %v1076, %v1078
    %v1080 = vrot.slane %v1073, %v1079
    %s1082 = scalar_lea.vmem [#allocation2], 70
    %1083 = vst.msk [vmem:[%s1082] ss:$8 sm:$0xf] %vm219, %v1080
    %1084 = vst.msk [vmem:[%s1082] ss:$8 sm:$0x0] %vm219, %v1080
    %v1085 = vcombine.low %v413, %v412
    %v1086 = vcombine.low %v411, %v414
    %v1088 = vunpack.c.l.s4 1966171168
    %v1089 = vunpack.c.0.s8 %v1088
    %v1090 = vlaneseq
    %v1091 = vshrl.u32 %v1090, 7
    %v1092 = vsub.s32 %v1089, %v1091
    %v1093 = vrot.slane %v1085, %v1092
    %v1095 = vunpack.c.l.s4 1966171168
    %v1096 = vunpack.c.0.s8 %v1095
    %v1097 = vlaneseq
    %v1098 = vshrl.u32 %v1097, 7
    %v1099 = vsub.s32 %v1096, %v1098
    %v1100 = vrot.slane %v1086, %v1099
    %v1101 = vcombine.low %v1093, %v1100
    %v1103 = vunpack.c.l.s4 1966171168
    %v1104 = vunpack.c.0.s8 %v1103
    %v1105 = vlaneseq
    %v1106 = vshrl.u32 %v1105, 7
    %v1107 = vsub.s32 %v1104, %v1106
    %v1108 = vrot.slane %v1101, %v1107
    %s1110 = scalar_lea.vmem [#allocation2], 71
    %1111 = vst.msk [vmem:[%s1110] ss:$8 sm:$0xf] %vm219, %v1108
    %1112 = vst.msk [vmem:[%s1110] ss:$8 sm:$0x0] %vm219, %v1108
    %v1113 = vcombine.low %v458, %v457
    %v1114 = vcombine.low %v456, %v459
    %v1116 = vunpack.c.l.s4 1966171168
    %v1117 = vunpack.c.0.s8 %v1116
    %v1118 = vlaneseq
    %v1119 = vshrl.u32 %v1118, 7
    %v1120 = vsub.s32 %v1117, %v1119
    %v1121 = vrot.slane %v1113, %v1120
    %v1123 = vunpack.c.l.s4 1966171168
    %v1124 = vunpack.c.0.s8 %v1123
    %v1125 = vlaneseq
    %v1126 = vshrl.u32 %v1125, 7
    %v1127 = vsub.s32 %v1124, %v1126
    %v1128 = vrot.slane %v1114, %v1127
    %v1129 = vcombine.low %v1121, %v1128
    %v1131 = vunpack.c.l.s4 1966171168
    %v1132 = vunpack.c.0.s8 %v1131
    %v1133 = vlaneseq
    %v1134 = vshrl.u32 %v1133, 7
    %v1135 = vsub.s32 %v1132, %v1134
    %v1136 = vrot.slane %v1129, %v1135
    %s1138 = scalar_lea.vmem [#allocation2], 96
    %1139 = vst.msk [vmem:[%s1138] ss:$8 sm:$0xf] %vm219, %v1136
    %1140 = vst.msk [vmem:[%s1138] ss:$8 sm:$0x0] %vm219, %v1136
    %v1141 = vcombine.low %v503, %v502
    %v1142 = vcombine.low %v501, %v504
    %v1144 = vunpack.c.l.s4 1966171168
    %v1145 = vunpack.c.0.s8 %v1144
    %v1146 = vlaneseq
    %v1147 = vshrl.u32 %v1146, 7
    %v1148 = vsub.s32 %v1145, %v1147
    %v1149 = vrot.slane %v1141, %v1148
    %v1151 = vunpack.c.l.s4 1966171168
    %v1152 = vunpack.c.0.s8 %v1151
    %v1153 = vlaneseq
    %v1154 = vshrl.u32 %v1153, 7
    %v1155 = vsub.s32 %v1152, %v1154
    %v1156 = vrot.slane %v1142, %v1155
    %v1157 = vcombine.low %v1149, %v1156
    %v1159 = vunpack.c.l.s4 1966171168
    %v1160 = vunpack.c.0.s8 %v1159
    %v1161 = vlaneseq
    %v1162 = vshrl.u32 %v1161, 7
    %v1163 = vsub.s32 %v1160, %v1162
    %v1164 = vrot.slane %v1157, %v1163
    %s1166 = scalar_lea.vmem [#allocation2], 97
    %1167 = vst.msk [vmem:[%s1166] ss:$8 sm:$0xf] %vm219, %v1164
    %1168 = vst.msk [vmem:[%s1166] ss:$8 sm:$0x0] %vm219, %v1164
    %v1169 = vcombine.low %v548, %v547
    %v1170 = vcombine.low %v546, %v549
    %v1172 = vunpack.c.l.s4 1966171168
    %v1173 = vunpack.c.0.s8 %v1172
    %v1174 = vlaneseq
    %v1175 = vshrl.u32 %v1174, 7
    %v1176 = vsub.s32 %v1173, %v1175
    %v1177 = vrot.slane %v1169, %v1176
    %v1179 = vunpack.c.l.s4 1966171168
    %v1180 = vunpack.c.0.s8 %v1179
    %v1181 = vlaneseq
    %v1182 = vshrl.u32 %v1181, 7
    %v1183 = vsub.s32 %v1180, %v1182
    %v1184 = vrot.slane %v1170, %v1183
    %v1185 = vcombine.low %v1177, %v1184
    %v1187 = vunpack.c.l.s4 1966171168
    %v1188 = vunpack.c.0.s8 %v1187
    %v1189 = vlaneseq
    %v1190 = vshrl.u32 %v1189, 7
    %v1191 = vsub.s32 %v1188, %v1190
    %v1192 = vrot.slane %v1185, %v1191
    %s1194 = scalar_lea.vmem [#allocation2], 98
    %1195 = vst.msk [vmem:[%s1194] ss:$8 sm:$0xf] %vm219, %v1192
    %1196 = vst.msk [vmem:[%s1194] ss:$8 sm:$0x0] %vm219, %v1192
    %v1201 = vcombine.low %v84, %v85
    %v1202 = vcombine.low %v86, %v87
    %v1204 = vunpack.c.l.s4 1966171168
    %v1205 = vunpack.c.0.s8 %v1204
    %v1206 = vlaneseq
    %v1207 = vshrl.u32 %v1206, 7
    %v1208 = vsub.s32 %v1205, %v1207
    %v1209 = vrot.slane %v1201, %v1208
    %v1211 = vunpack.c.l.s4 1966171168
    %v1212 = vunpack.c.0.s8 %v1211
    %v1213 = vlaneseq
    %v1214 = vshrl.u32 %v1213, 7
    %v1215 = vsub.s32 %v1212, %v1214
    %v1216 = vrot.slane %v1202, %v1215
    %v1217 = vcombine.low %v1209, %v1216
    %v1219 = vunpack.c.l.s4 1966171168
    %v1220 = vunpack.c.0.s8 %v1219
    %v1221 = vlaneseq
    %v1222 = vshrl.u32 %v1221, 7
    %v1223 = vsub.s32 %v1220, %v1222
    %v1224 = vrot.slane %v1217, %v1223
    %s1226 = scalar_lea.vmem [#allocation2], 99
    %1227 = vst.msk [vmem:[%s1226] ss:$8 sm:$0xf] %vm219, %v1224
    %1228 = vst.msk [vmem:[%s1226] ss:$8 sm:$0x0] %vm219, %v1224
    %v1229 = vld [vmem:[%s1] sm:$0xff]
    %v1230 = vld [vmem:[#allocation2] sm:$0xff]
    %v1231 = vld [vmem:[#allocation2 + $0x8] sm:$0xff]
    %v1232 = vld [vmem:[#allocation2 + $0x10] sm:$0xff]
    %v1233 = vld [vmem:[#allocation2 + $0x18] sm:$0xff]
    %v1234 = vld [vmem:[#allocation2 + $0x20] sm:$0xff]
    %v1235 = vld [vmem:[#allocation2 + $0x28] sm:$0xff]
    %v1236 = vld [vmem:[#allocation2 + $0x30] sm:$0xff]
    %v1237 = vld [vmem:[#allocation2 + $0x38] sm:$0xff]
    %v1238 = vld [vmem:[#allocation2 + $0x40] sm:$0xff]
    %v1239 = vld [vmem:[#allocation2 + $0x48] sm:$0xff]
    %v1240 = vld [vmem:[#allocation2 + $0x50] sm:$0xff]
    %v1241 = vld [vmem:[#allocation2 + $0x58] sm:$0xff]
    %v1242 = vld [vmem:[#allocation2 + $0x60] sm:$0xff]
    %v1243 = vld [vmem:[#allocation2 + $0x68] sm:$0xff]
    %v1244 = vld [vmem:[#allocation2 + $0x70] sm:$0xff]
    %v1245 = vld [vmem:[#allocation2 + $0x78] sm:$0xff]
    %v1246 = vld [vmem:[#allocation2 + $0x80] sm:$0xff]
    %v1247 = vld [vmem:[#allocation2 + $0x88] sm:$0xff]
    %v1248 = vld [vmem:[#allocation2 + $0x90] sm:$0xff]
    %v1249 = vld [vmem:[#allocation2 + $0x98] sm:$0xff]
    %v1250 = vld [vmem:[#allocation2 + $0xa0] sm:$0xff]
    %v1251 = vld [vmem:[#allocation2 + $0xa8] sm:$0xff]
    %v1252 = vld [vmem:[#allocation2 + $0xb0] sm:$0xff]
    %v1253 = vld [vmem:[#allocation2 + $0xb8] sm:$0xff]
    %v1254 = vld [vmem:[#allocation2 + $0xc0] sm:$0xff]
    %v1255 = vld [vmem:[#allocation2 + $0xc8] sm:$0xff]
    %v1256 = vld [vmem:[#allocation2 + $0xd0] sm:$0xff]
    %v1257 = vld [vmem:[#allocation2 + $0xd8] sm:$0xff]
    %v1258 = vld [vmem:[#allocation2 + $0xe0] sm:$0xff]
    %v1259 = vld [vmem:[#allocation2 + $0xe8] sm:$0xff]
    %v1260 = vld [vmem:[#allocation2 + $0xf0] sm:$0xff]
    %v1261 = vld [vmem:[#allocation2 + $0xf8] sm:$0xff]
    %v1262 = vld [vmem:[#allocation2 + $0x100] sm:$0xff]
    %v1263 = vld [vmem:[#allocation2 + $0x108] sm:$0xff]
    %v1264 = vld [vmem:[#allocation2 + $0x110] sm:$0xff]
    %v1265 = vld [vmem:[#allocation2 + $0x118] sm:$0xff]
    %v1266 = vld [vmem:[#allocation2 + $0x120] sm:$0xff]
    %v1267 = vld [vmem:[#allocation2 + $0x128] sm:$0xff]
    %v1268 = vld [vmem:[#allocation2 + $0x130] sm:$0xff]
    %v1269 = vld [vmem:[#allocation2 + $0x138] sm:$0xff]
    %v1270 = vld [vmem:[#allocation2 + $0x140] sm:$0xff]
    %v1271 = vld [vmem:[#allocation2 + $0x148] sm:$0xff]
    %v1272 = vld [vmem:[#allocation2 + $0x150] sm:$0xff]
    %v1273 = vld [vmem:[#allocation2 + $0x158] sm:$0xff]
    %v1274 = vld [vmem:[#allocation2 + $0x160] sm:$0xff]
    %v1275 = vld [vmem:[#allocation2 + $0x168] sm:$0xff]
    %v1276 = vld [vmem:[#allocation2 + $0x170] sm:$0xff]
    %v1277 = vld [vmem:[#allocation2 + $0x178] sm:$0xff]
    %v1278 = vld [vmem:[#allocation2 + $0x180] sm:$0xff]
    %v1279 = vld [vmem:[#allocation2 + $0x188] sm:$0xff]
    %v1280 = vld [vmem:[#allocation2 + $0x190] sm:$0xff]
    %v1281 = vld [vmem:[#allocation2 + $0x198] sm:$0xff]
    %v1282 = vld [vmem:[#allocation2 + $0x1a0] sm:$0xff]
    %v1283 = vld [vmem:[#allocation2 + $0x1a8] sm:$0xff]
    %v1284 = vld [vmem:[#allocation2 + $0x1b0] sm:$0xff]
    %v1285 = vld [vmem:[#allocation2 + $0x1b8] sm:$0xff]
    %v1286 = vld [vmem:[#allocation2 + $0x1c0] sm:$0xff]
    %v1287 = vld [vmem:[#allocation2 + $0x1c8] sm:$0xff]
    %v1288 = vld [vmem:[#allocation2 + $0x1d0] sm:$0xff]
    %v1289 = vld [vmem:[#allocation2 + $0x1d8] sm:$0xff]
    %v1290 = vld [vmem:[#allocation2 + $0x1e0] sm:$0xff]
    %v1291 = vld [vmem:[#allocation2 + $0x1e8] sm:$0xff]
    %v1292 = vld [vmem:[#allocation2 + $0x1f0] sm:$0xff]
    %v1293 = vld [vmem:[#allocation2 + $0x1f8] sm:$0xff]
    %1294 = vmatprep.subr.mxu0 %v1291
    %1295 = vmatpush1.msra.mxu0 %v1290
    %1296 = vmatprep.subr.mxu0 %v1287
    %1297 = vmatpush1.msra.mxu0 %v1286
    %1298 = vmatprep.subr.mxu0 %v1283
    %1299 = vmatpush1.msra.mxu0 %v1282
    %1300 = vmatprep.subr.mxu0 %v1279
    %1301 = vmatpush1.msra.mxu0 %v1278
    %1302 = vmatprep.subr.mxu0 %v1275
    %1303 = vmatpush1.msra.mxu0 %v1274
    %1304 = vmatprep.subr.mxu0 %v1271
    %1305 = vmatpush1.msra.mxu0 %v1270
    %1306 = vmatprep.subr.mxu0 %v1267
    %1307 = vmatpush1.msra.mxu0 %v1266
    %1308 = vmatprep.subr.mxu0 %v1263
    %1309 = vmatpush1.msra.mxu0 %v1262
    %1310 = vmatprep.subr.mxu0 %v1259
    %1311 = vmatpush1.msra.mxu0 %v1258
    %1312 = vmatprep.subr.mxu0 %v1255
    %1313 = vmatpush1.msra.mxu0 %v1254
    %1314 = vmatprep.subr.mxu0 %v1251
    %1315 = vmatpush1.msra.mxu0 %v1250
    %1316 = vmatprep.subr.mxu0 %v1247
    %1317 = vmatpush1.msra.mxu0 %v1246
    %1318 = vmatprep.subr.mxu0 %v1243
    %1319 = vmatpush1.msra.mxu0 %v1242
    %1320 = vmatprep.subr.mxu0 %v1239
    %1321 = vmatpush1.msra.mxu0 %v1238
    %1322 = vmatprep.subr.mxu0 %v1235
    %1323 = vmatpush1.msra.mxu0 %v1234
    %1324 = vmatprep.subr.mxu0 %v1231
    %1325 = vmatpush1.msra.mxu0 %v1230
    %1326 = vmatprep.subr.mxu0 0.0
    %1327 = vmatpush2.msra.mxu0 0.0
    %1328 = vmatprep.subr.mxu0 0.0
    %1329 = vmatpush2.msra.mxu0 0.0
    %1330 = vmatprep.subr.mxu0 0.0
    %1331 = vmatpush2.msra.mxu0 0.0
    %1332 = vmatprep.subr.mxu0 0.0
    %1333 = vmatpush2.msra.mxu0 0.0
    %1334 = vmatprep.subr.mxu0 0.0
    %1335 = vmatpush2.msra.mxu0 0.0
    %1336 = vmatprep.subr.mxu0 0.0
    %1337 = vmatpush2.msra.mxu0 0.0
    %1338 = vmatprep.subr.mxu0 0.0
    %1339 = vmatpush2.msra.mxu0 0.0
    %1340 = vmatprep.subr.mxu0 0.0
    %1341 = vmatpush2.msra.mxu0 0.0
    %1342 = vmatprep.subr.mxu0 0.0
    %1343 = vmatpush2.msra.mxu0 0.0
    %1344 = vmatprep.subr.mxu0 0.0
    %1345 = vmatpush2.msra.mxu0 0.0
    %1346 = vmatprep.subr.mxu0 0.0
    %1347 = vmatpush2.msra.mxu0 0.0
    %1348 = vmatprep.subr.mxu0 0.0
    %1349 = vmatpush2.msra.mxu0 0.0
    %1350 = vmatprep.subr.mxu0 0.0
    %1351 = vmatpush2.msra.mxu0 0.0
    %1352 = vmatprep.subr.mxu0 0.0
    %1353 = vmatpush2.msra.mxu0 0.0
    %1354 = vmatprep.subr.mxu0 0.0
    %1355 = vmatpush2.msra.mxu0 0.0
    %1356 = vmatprep.subr.mxu0 0.0
    %1357 = vmatpush2.msra.mxu0 0.0
    %1358 = vmatprep.mubr.f32.mxu0 0.0
    %1359 = vmatmul.mubr.f32.gmra.mxu0 %v1229
    %v1360 = vpop.f32.mrf.mxu0
    %v1361 = vadd.f32 0.0, %v1360
    %v1362 = vpop.f32.mrf.mxu0
    %v1363 = vadd.f32 0.0, %v1362
    %1364 = vdwg.mxu0
    %1365 = vmatprep.subr.mxu0 %v1293
    %1366 = vmatpush1.msra.mxu0 %v1292
    %1367 = vmatprep.subr.mxu0 %v1289
    %1368 = vmatpush1.msra.mxu0 %v1288
    %1369 = vmatprep.subr.mxu0 %v1285
    %1370 = vmatpush1.msra.mxu0 %v1284
    %1371 = vmatprep.subr.mxu0 %v1281
    %1372 = vmatpush1.msra.mxu0 %v1280
    %1373 = vmatprep.subr.mxu0 %v1277
    %1374 = vmatpush1.msra.mxu0 %v1276
    %1375 = vmatprep.subr.mxu0 %v1273
    %1376 = vmatpush1.msra.mxu0 %v1272
    %1377 = vmatprep.subr.mxu0 %v1269
    %1378 = vmatpush1.msra.mxu0 %v1268
    %1379 = vmatprep.subr.mxu0 %v1265
    %1380 = vmatpush1.msra.mxu0 %v1264
    %1381 = vmatprep.subr.mxu0 %v1261
    %1382 = vmatpush1.msra.mxu0 %v1260
    %1383 = vmatprep.subr.mxu0 %v1257
    %1384 = vmatpush1.msra.mxu0 %v1256
    %1385 = vmatprep.subr.mxu0 %v1253
    %1386 = vmatpush1.msra.mxu0 %v1252
    %1387 = vmatprep.subr.mxu0 %v1249
    %1388 = vmatpush1.msra.mxu0 %v1248
    %1389 = vmatprep.subr.mxu0 %v1245
    %1390 = vmatpush1.msra.mxu0 %v1244
    %1391 = vmatprep.subr.mxu0 %v1241
    %1392 = vmatpush1.msra.mxu0 %v1240
    %1393 = vmatprep.subr.mxu0 %v1237
    %1394 = vmatpush1.msra.mxu0 %v1236
    %1395 = vmatprep.subr.mxu0 %v1233
    %1396 = vmatpush1.msra.mxu0 %v1232
    %1397 = vmatprep.subr.mxu0 0.0
    %1398 = vmatpush2.msra.mxu0 0.0
    %1399 = vmatprep.subr.mxu0 0.0
    %1400 = vmatpush2.msra.mxu0 0.0
    %1401 = vmatprep.subr.mxu0 0.0
    %1402 = vmatpush2.msra.mxu0 0.0
    %1403 = vmatprep.subr.mxu0 0.0
    %1404 = vmatpush2.msra.mxu0 0.0
    %1405 = vmatprep.subr.mxu0 0.0
    %1406 = vmatpush2.msra.mxu0 0.0
    %1407 = vmatprep.subr.mxu0 0.0
    %1408 = vmatpush2.msra.mxu0 0.0
    %1409 = vmatprep.subr.mxu0 0.0
    %1410 = vmatpush2.msra.mxu0 0.0
    %1411 = vmatprep.subr.mxu0 0.0
    %1412 = vmatpush2.msra.mxu0 0.0
    %1413 = vmatprep.subr.mxu0 0.0
    %1414 = vmatpush2.msra.mxu0 0.0
    %1415 = vmatprep.subr.mxu0 0.0
    %1416 = vmatpush2.msra.mxu0 0.0
    %1417 = vmatprep.subr.mxu0 0.0
    %1418 = vmatpush2.msra.mxu0 0.0
    %1419 = vmatprep.subr.mxu0 0.0
    %1420 = vmatpush2.msra.mxu0 0.0
    %1421 = vmatprep.subr.mxu0 0.0
    %1422 = vmatpush2.msra.mxu0 0.0
    %1423 = vmatprep.subr.mxu0 0.0
    %1424 = vmatpush2.msra.mxu0 0.0
    %1425 = vmatprep.subr.mxu0 0.0
    %1426 = vmatpush2.msra.mxu0 0.0
    %1427 = vmatprep.subr.mxu0 0.0
    %1428 = vmatpush2.msra.mxu0 0.0
    %1429 = vmatprep.mubr.f32.mxu0 0.0
    %1430 = vmatmul.mubr.f32.gmra.mxu0 %v1229
    %v1431 = vpop.f32.mrf.mxu0
    %v1432 = vadd.f32 0.0, %v1431
    %v1433 = vpop.f32.mrf.mxu0
    %v1434 = vadd.f32 0.0, %v1433
    %1435 = vdwg.mxu0
    %v1436 = vround.ne.pseudo %v1361
    %v1437 = vround.ne.pseudo %v1363
    %v1438 = vround.ne.pseudo %v1432
    %v1439 = vround.ne.pseudo %v1434
    %v1440 = vmul.f32 %v1436, %v84
    %v1441 = vmul.f32 %v1437, %v85
    %v1442 = vmul.f32 %v1438, %v86
    %v1443 = vmul.f32 %v1439, %v87
    %1444 = vrot.lane.b32.xlu0 %v1440, 73
    %v1445 = vpop.permute.xlu0 %1444
    %1446 = vrot.lane.b32.xlu0 %v1441, 73
    %v1447 = vpop.permute.xlu0 %1446
    %1448 = vrot.lane.b32.xlu0 %v1442, 73
    %v1449 = vpop.permute.xlu0 %1448
    %1450 = vrot.lane.b32.xlu0 %v1443, 73
    %v1451 = vpop.permute.xlu0 %1450
    %v1452 = vsel %vm182, %v1449, %v1451
    %v1453 = vsel %vm182, %v1447, %v1449
    %v1454 = vsel %vm182, %v1445, %v1447
    %v1455 = vsel %vm182, %v1451, %v1445
    %1456 = vst [vmem:[#allocation2] sm:$0xf] %v1455
    %1457 = vst [vmem:[#allocation2 + $0x8] sm:$0xf] %v1454
    %1458 = vst [vmem:[#allocation2 + $0x10] sm:$0xf] %v1453
    %1459 = vst [vmem:[#allocation2 + $0x18] sm:$0xf] %v1452
    %1460 = vrot.lane.b32.xlu0 %v1440, 72
    %v1461 = vpop.permute.xlu0 %1460
    %1462 = vrot.lane.b32.xlu0 %v1441, 72
    %v1463 = vpop.permute.xlu0 %1462
    %1464 = vrot.lane.b32.xlu0 %v1442, 72
    %v1465 = vpop.permute.xlu0 %1464
    %1466 = vrot.lane.b32.xlu0 %v1443, 72
    %v1467 = vpop.permute.xlu0 %1466
    %v1468 = vsel %vm230, %v1465, %v1467
    %v1469 = vsel %vm230, %v1463, %v1465
    %v1470 = vsel %vm230, %v1461, %v1463
    %v1471 = vsel %vm230, %v1467, %v1461
    %v1476 = vrot.slane %v1471, 4
    %v1477 = vrot.slane %v1470, 4
    %v1478 = vrot.slane %v1469, 4
    %v1479 = vrot.slane %v1468, 4
    %1484 = vst [vmem:[#allocation2] sm:$0xf0] %v1476
    %1485 = vst [vmem:[#allocation2 + $0x8] sm:$0xf0] %v1477
    %1486 = vst [vmem:[#allocation2 + $0x10] sm:$0xf0] %v1478
    %1487 = vst [vmem:[#allocation2 + $0x18] sm:$0xf0] %v1479
    %1488 = vrot.lane.b32.xlu0 %v1440, 71
    %v1489 = vpop.permute.xlu0 %1488
    %1490 = vrot.lane.b32.xlu0 %v1441, 71
    %v1491 = vpop.permute.xlu0 %1490
    %1492 = vrot.lane.b32.xlu0 %v1442, 71
    %v1493 = vpop.permute.xlu0 %1492
    %1494 = vrot.lane.b32.xlu0 %v1443, 71
    %v1495 = vpop.permute.xlu0 %1494
    %v1496 = vsel %vm275, %v1493, %v1495
    %v1497 = vsel %vm275, %v1491, %v1493
    %v1498 = vsel %vm275, %v1489, %v1491
    %v1499 = vsel %vm275, %v1495, %v1489
    %1500 = vst [vmem:[#allocation2 + $0x20] sm:$0xf] %v1499
    %1501 = vst [vmem:[#allocation2 + $0x28] sm:$0xf] %v1498
    %1502 = vst [vmem:[#allocation2 + $0x30] sm:$0xf] %v1497
    %1503 = vst [vmem:[#allocation2 + $0x38] sm:$0xf] %v1496
    %1504 = vrot.lane.b32.xlu0 %v1440, 65
    %v1505 = vpop.permute.xlu0 %1504
    %1506 = vrot.lane.b32.xlu0 %v1441, 65
    %v1507 = vpop.permute.xlu0 %1506
    %1508 = vrot.lane.b32.xlu0 %v1442, 65
    %v1509 = vpop.permute.xlu0 %1508
    %1510 = vrot.lane.b32.xlu0 %v1443, 65
    %v1511 = vpop.permute.xlu0 %1510
    %v1512 = vsel %vm320, %v1509, %v1511
    %v1513 = vsel %vm320, %v1507, %v1509
    %v1514 = vsel %vm320, %v1505, %v1507
    %v1515 = vsel %vm320, %v1511, %v1505
    %v1520 = vrot.slane %v1515, 4
    %v1521 = vrot.slane %v1514, 4
    %v1522 = vrot.slane %v1513, 4
    %v1523 = vrot.slane %v1512, 4
    %1528 = vst [vmem:[#allocation2 + $0x20] sm:$0xf0] %v1520
    %1529 = vst [vmem:[#allocation2 + $0x28] sm:$0xf0] %v1521
    %1530 = vst [vmem:[#allocation2 + $0x30] sm:$0xf0] %v1522
    %1531 = vst [vmem:[#allocation2 + $0x38] sm:$0xf0] %v1523
    %1532 = vrot.lane.b32.xlu0 %v1440, 64
    %v1533 = vpop.permute.xlu0 %1532
    %1534 = vrot.lane.b32.xlu0 %v1441, 64
    %v1535 = vpop.permute.xlu0 %1534
    %1536 = vrot.lane.b32.xlu0 %v1442, 64
    %v1537 = vpop.permute.xlu0 %1536
    %1538 = vrot.lane.b32.xlu0 %v1443, 64
    %v1539 = vpop.permute.xlu0 %1538
    %v1540 = vsel %vm365, %v1537, %v1539
    %v1541 = vsel %vm365, %v1535, %v1537
    %v1542 = vsel %vm365, %v1533, %v1535
    %v1543 = vsel %vm365, %v1539, %v1533
    %1544 = vst [vmem:[#allocation2 + $0x40] sm:$0xf] %v1543
    %1545 = vst [vmem:[#allocation2 + $0x48] sm:$0xf] %v1542
    %1546 = vst [vmem:[#allocation2 + $0x50] sm:$0xf] %v1541
    %1547 = vst [vmem:[#allocation2 + $0x58] sm:$0xf] %v1540
    %1548 = vrot.lane.b32.xlu0 %v1440, 63
    %v1549 = vpop.permute.xlu0 %1548
    %1550 = vrot.lane.b32.xlu0 %v1441, 63
    %v1551 = vpop.permute.xlu0 %1550
    %1552 = vrot.lane.b32.xlu0 %v1442, 63
    %v1553 = vpop.permute.xlu0 %1552
    %1554 = vrot.lane.b32.xlu0 %v1443, 63
    %v1555 = vpop.permute.xlu0 %1554
    %v1556 = vsel %vm410, %v1553, %v1555
    %v1557 = vsel %vm410, %v1551, %v1553
    %v1558 = vsel %vm410, %v1549, %v1551
    %v1559 = vsel %vm410, %v1555, %v1549
    %v1564 = vrot.slane %v1559, 4
    %v1565 = vrot.slane %v1558, 4
    %v1566 = vrot.slane %v1557, 4
    %v1567 = vrot.slane %v1556, 4
    %1572 = vst [vmem:[#allocation2 + $0x40] sm:$0xf0] %v1564
    %1573 = vst [vmem:[#allocation2 + $0x48] sm:$0xf0] %v1565
    %1574 = vst [vmem:[#allocation2 + $0x50] sm:$0xf0] %v1566
    %1575 = vst [vmem:[#allocation2 + $0x58] sm:$0xf0] %v1567
    %1576 = vrot.lane.b32.xlu0 %v1440, 57
    %v1577 = vpop.permute.xlu0 %1576
    %1578 = vrot.lane.b32.xlu0 %v1441, 57
    %v1579 = vpop.permute.xlu0 %1578
    %1580 = vrot.lane.b32.xlu0 %v1442, 57
    %v1581 = vpop.permute.xlu0 %1580
    %1582 = vrot.lane.b32.xlu0 %v1443, 57
    %v1583 = vpop.permute.xlu0 %1582
    %v1584 = vsel %vm455, %v1581, %v1583
    %v1585 = vsel %vm455, %v1579, %v1581
    %v1586 = vsel %vm455, %v1577, %v1579
    %v1587 = vsel %vm455, %v1583, %v1577
    %1588 = vst [vmem:[#allocation2 + $0x60] sm:$0xf] %v1587
    %1589 = vst [vmem:[#allocation2 + $0x68] sm:$0xf] %v1586
    %1590 = vst [vmem:[#allocation2 + $0x70] sm:$0xf] %v1585
    %1591 = vst [vmem:[#allocation2 + $0x78] sm:$0xf] %v1584
    %1592 = vrot.lane.b32.xlu0 %v1440, 56
    %v1593 = vpop.permute.xlu0 %1592
    %1594 = vrot.lane.b32.xlu0 %v1441, 56
    %v1595 = vpop.permute.xlu0 %1594
    %1596 = vrot.lane.b32.xlu0 %v1442, 56
    %v1597 = vpop.permute.xlu0 %1596
    %1598 = vrot.lane.b32.xlu0 %v1443, 56
    %v1599 = vpop.permute.xlu0 %1598
    %v1600 = vsel %vm500, %v1597, %v1599
    %v1601 = vsel %vm500, %v1595, %v1597
    %v1602 = vsel %vm500, %v1593, %v1595
    %v1603 = vsel %vm500, %v1599, %v1593
    %v1608 = vrot.slane %v1603, 4
    %v1609 = vrot.slane %v1602, 4
    %v1610 = vrot.slane %v1601, 4
    %v1611 = vrot.slane %v1600, 4
    %1616 = vst [vmem:[#allocation2 + $0x60] sm:$0xf0] %v1608
    %1617 = vst [vmem:[#allocation2 + $0x68] sm:$0xf0] %v1609
    %1618 = vst [vmem:[#allocation2 + $0x70] sm:$0xf0] %v1610
    %1619 = vst [vmem:[#allocation2 + $0x78] sm:$0xf0] %v1611
    %1620 = vrot.lane.b32.xlu0 %v1440, 55
    %v1621 = vpop.permute.xlu0 %1620
    %1622 = vrot.lane.b32.xlu0 %v1441, 55
    %v1623 = vpop.permute.xlu0 %1622
    %1624 = vrot.lane.b32.xlu0 %v1442, 55
    %v1625 = vpop.permute.xlu0 %1624
    %1626 = vrot.lane.b32.xlu0 %v1443, 55
    %v1627 = vpop.permute.xlu0 %1626
    %v1628 = vsel %vm545, %v1625, %v1627
    %v1629 = vsel %vm545, %v1623, %v1625
    %v1630 = vsel %vm545, %v1621, %v1623
    %v1631 = vsel %vm545, %v1627, %v1621
    %1632 = vst [vmem:[#allocation2 + $0x80] sm:$0xf] %v1631
    %1633 = vst [vmem:[#allocation2 + $0x88] sm:$0xf] %v1630
    %1634 = vst [vmem:[#allocation2 + $0x90] sm:$0xf] %v1629
    %1635 = vst [vmem:[#allocation2 + $0x98] sm:$0xf] %v1628
    %1636 = vrot.lane.b32.xlu0 %v1440, 9
    %v1637 = vpop.permute.xlu0 %1636
    %1638 = vrot.lane.b32.xlu0 %v1441, 9
    %v1639 = vpop.permute.xlu0 %1638
    %1640 = vrot.lane.b32.xlu0 %v1442, 9
    %v1641 = vpop.permute.xlu0 %1640
    %1642 = vrot.lane.b32.xlu0 %v1443, 9
    %v1643 = vpop.permute.xlu0 %1642
    %v1644 = vsel %vm590, %v1641, %v1643
    %v1645 = vsel %vm590, %v1639, %v1641
    %v1646 = vsel %vm590, %v1637, %v1639
    %v1647 = vsel %vm590, %v1643, %v1637
    %v1652 = vrot.slane %v1647, 4
    %v1653 = vrot.slane %v1646, 4
    %v1654 = vrot.slane %v1645, 4
    %v1655 = vrot.slane %v1644, 4
    %1660 = vst [vmem:[#allocation2 + $0x80] sm:$0xf0] %v1652
    %1661 = vst [vmem:[#allocation2 + $0x88] sm:$0xf0] %v1653
    %1662 = vst [vmem:[#allocation2 + $0x90] sm:$0xf0] %v1654
    %1663 = vst [vmem:[#allocation2 + $0x98] sm:$0xf0] %v1655
    %1664 = vrot.lane.b32.xlu0 %v1440, 8
    %v1665 = vpop.permute.xlu0 %1664
    %1666 = vrot.lane.b32.xlu0 %v1441, 8
    %v1667 = vpop.permute.xlu0 %1666
    %1668 = vrot.lane.b32.xlu0 %v1442, 8
    %v1669 = vpop.permute.xlu0 %1668
    %1670 = vrot.lane.b32.xlu0 %v1443, 8
    %v1671 = vpop.permute.xlu0 %1670
    %v1672 = vsel %vm635, %v1669, %v1671
    %v1673 = vsel %vm635, %v1667, %v1669
    %v1674 = vsel %vm635, %v1665, %v1667
    %v1675 = vsel %vm635, %v1671, %v1665
    %1676 = vst [vmem:[#allocation2 + $0xa0] sm:$0xf] %v1675
    %1677 = vst [vmem:[#allocation2 + $0xa8] sm:$0xf] %v1674
    %1678 = vst [vmem:[#allocation2 + $0xb0] sm:$0xf] %v1673
    %1679 = vst [vmem:[#allocation2 + $0xb8] sm:$0xf] %v1672
    %1680 = vrot.lane.b32.xlu0 %v1440, 7
    %v1681 = vpop.permute.xlu0 %1680
    %1682 = vrot.lane.b32.xlu0 %v1441, 7
    %v1683 = vpop.permute.xlu0 %1682
    %1684 = vrot.lane.b32.xlu0 %v1442, 7
    %v1685 = vpop.permute.xlu0 %1684
    %1686 = vrot.lane.b32.xlu0 %v1443, 7
    %v1687 = vpop.permute.xlu0 %1686
    %v1688 = vsel %vm680, %v1685, %v1687
    %v1689 = vsel %vm680, %v1683, %v1685
    %v1690 = vsel %vm680, %v1681, %v1683
    %v1691 = vsel %vm680, %v1687, %v1681
    %v1696 = vrot.slane %v1691, 4
    %v1697 = vrot.slane %v1690, 4
    %v1698 = vrot.slane %v1689, 4
    %v1699 = vrot.slane %v1688, 4
    %1704 = vst [vmem:[#allocation2 + $0xa0] sm:$0xf0] %v1696
    %1705 = vst [vmem:[#allocation2 + $0xa8] sm:$0xf0] %v1697
    %1706 = vst [vmem:[#allocation2 + $0xb0] sm:$0xf0] %v1698
    %1707 = vst [vmem:[#allocation2 + $0xb8] sm:$0xf0] %v1699
    %1708 = vrot.lane.b32.xlu0 %v1440, 1
    %v1709 = vpop.permute.xlu0 %1708
    %1710 = vrot.lane.b32.xlu0 %v1441, 1
    %v1711 = vpop.permute.xlu0 %1710
    %1712 = vrot.lane.b32.xlu0 %v1442, 1
    %v1713 = vpop.permute.xlu0 %1712
    %1714 = vrot.lane.b32.xlu0 %v1443, 1
    %v1715 = vpop.permute.xlu0 %1714
    %v1716 = vsel %vm725, %v1713, %v1715
    %v1717 = vsel %vm725, %v1711, %v1713
    %v1718 = vsel %vm725, %v1709, %v1711
    %v1719 = vsel %vm725, %v1715, %v1709
    %1720 = vst [vmem:[#allocation2 + $0xc0] sm:$0xf] %v1719
    %1721 = vst [vmem:[#allocation2 + $0xc8] sm:$0xf] %v1718
    %1722 = vst [vmem:[#allocation2 + $0xd0] sm:$0xf] %v1717
    %1723 = vst [vmem:[#allocation2 + $0xd8] sm:$0xf] %v1716
    %v1728 = vrot.slane %v1440, 4
    %v1729 = vrot.slane %v1441, 4
    %v1730 = vrot.slane %v1442, 4
    %v1731 = vrot.slane %v1443, 4
    %1736 = vst [vmem:[#allocation2 + $0xc0] sm:$0xf0] %v1728
    %1737 = vst [vmem:[#allocation2 + $0xc8] sm:$0xf0] %v1729
    %1738 = vst [vmem:[#allocation2 + $0xd0] sm:$0xf0] %v1730
    %1739 = vst [vmem:[#allocation2 + $0xd8] sm:$0xf0] %v1731
    %1740 = vrot.lane.b32.xlu0 %v1440, 127
    %v1741 = vpop.permute.xlu0 %1740
    %1742 = vrot.lane.b32.xlu0 %v1441, 127
    %v1743 = vpop.permute.xlu0 %1742
    %1744 = vrot.lane.b32.xlu0 %v1442, 127
    %v1745 = vpop.permute.xlu0 %1744
    %1746 = vrot.lane.b32.xlu0 %v1443, 127
    %v1747 = vpop.permute.xlu0 %1746
    %v1748 = vsel %vm773, %v1745, %v1747
    %v1749 = vsel %vm773, %v1743, %v1745
    %v1750 = vsel %vm773, %v1741, %v1743
    %v1751 = vsel %vm773, %v1747, %v1741
    %1752 = vst [vmem:[#allocation2 + $0xe0] sm:$0xf] %v1750
    %1753 = vst [vmem:[#allocation2 + $0xe8] sm:$0xf] %v1749
    %1754 = vst [vmem:[#allocation2 + $0xf0] sm:$0xf] %v1748
    %1755 = vst [vmem:[#allocation2 + $0xf8] sm:$0xf] %v1751
    %1756 = vrot.lane.b32.xlu0 %v1440, 121
    %v1757 = vpop.permute.xlu0 %1756
    %1758 = vrot.lane.b32.xlu0 %v1441, 121
    %v1759 = vpop.permute.xlu0 %1758
    %1760 = vrot.lane.b32.xlu0 %v1442, 121
    %v1761 = vpop.permute.xlu0 %1760
    %1762 = vrot.lane.b32.xlu0 %v1443, 121
    %v1763 = vpop.permute.xlu0 %1762
    %v1764 = vsel %vm818, %v1761, %v1763
    %v1765 = vsel %vm818, %v1759, %v1761
    %v1766 = vsel %vm818, %v1757, %v1759
    %v1767 = vsel %vm818, %v1763, %v1757
    %v1772 = vrot.slane %v1766, 4
    %v1773 = vrot.slane %v1765, 4
    %v1774 = vrot.slane %v1764, 4
    %v1775 = vrot.slane %v1767, 4
    %1780 = vst [vmem:[#allocation2 + $0xe0] sm:$0xf0] %v1772
    %1781 = vst [vmem:[#allocation2 + $0xe8] sm:$0xf0] %v1773
    %1782 = vst [vmem:[#allocation2 + $0xf0] sm:$0xf0] %v1774
    %1783 = vst [vmem:[#allocation2 + $0xf8] sm:$0xf0] %v1775
    %1784 = vrot.lane.b32.xlu0 %v1440, 120
    %v1785 = vpop.permute.xlu0 %1784
    %1786 = vrot.lane.b32.xlu0 %v1441, 120
    %v1787 = vpop.permute.xlu0 %1786
    %1788 = vrot.lane.b32.xlu0 %v1442, 120
    %v1789 = vpop.permute.xlu0 %1788
    %1790 = vrot.lane.b32.xlu0 %v1443, 120
    %v1791 = vpop.permute.xlu0 %1790
    %v1792 = vsel %vm863, %v1789, %v1791
    %v1793 = vsel %vm863, %v1787, %v1789
    %v1794 = vsel %vm863, %v1785, %v1787
    %v1795 = vsel %vm863, %v1791, %v1785
    %1796 = vst [vmem:[#allocation2 + $0x100] sm:$0xf] %v1794
    %1797 = vst [vmem:[#allocation2 + $0x108] sm:$0xf] %v1793
    %1798 = vst [vmem:[#allocation2 + $0x110] sm:$0xf] %v1792
    %1799 = vst [vmem:[#allocation2 + $0x118] sm:$0xf] %v1795
    %1800 = vrot.lane.b32.xlu0 %v1440, 119
    %v1801 = vpop.permute.xlu0 %1800
    %1802 = vrot.lane.b32.xlu0 %v1441, 119
    %v1803 = vpop.permute.xlu0 %1802
    %1804 = vrot.lane.b32.xlu0 %v1442, 119
    %v1805 = vpop.permute.xlu0 %1804
    %1806 = vrot.lane.b32.xlu0 %v1443, 119
    %v1807 = vpop.permute.xlu0 %1806
    %v1808 = vsel %vm908, %v1805, %v1807
    %v1809 = vsel %vm908, %v1803, %v1805
    %v1810 = vsel %vm908, %v1801, %v1803
    %v1811 = vsel %vm908, %v1807, %v1801
    %v1816 = vrot.slane %v1810, 4
    %v1817 = vrot.slane %v1809, 4
    %v1818 = vrot.slane %v1808, 4
    %v1819 = vrot.slane %v1811, 4
    %1824 = vst [vmem:[#allocation2 + $0x100] sm:$0xf0] %v1816
    %1825 = vst [vmem:[#allocation2 + $0x108] sm:$0xf0] %v1817
    %1826 = vst [vmem:[#allocation2 + $0x110] sm:$0xf0] %v1818
    %1827 = vst [vmem:[#allocation2 + $0x118] sm:$0xf0] %v1819
    %1828 = vst [vmem:[#allocation2 + $0x120] sm:$0xf] %v1454
    %1829 = vst [vmem:[#allocation2 + $0x128] sm:$0xf] %v1453
    %1830 = vst [vmem:[#allocation2 + $0x130] sm:$0xf] %v1452
    %1831 = vst [vmem:[#allocation2 + $0x138] sm:$0xf] %v1455
    %1832 = vst [vmem:[#allocation2 + $0x120] sm:$0xf0] %v1477
    %1833 = vst [vmem:[#allocation2 + $0x128] sm:$0xf0] %v1478
    %1834 = vst [vmem:[#allocation2 + $0x130] sm:$0xf0] %v1479
    %1835 = vst [vmem:[#allocation2 + $0x138] sm:$0xf0] %v1476
    %1836 = vst [vmem:[#allocation2 + $0x140] sm:$0xf] %v1498
    %1837 = vst [vmem:[#allocation2 + $0x148] sm:$0xf] %v1497
    %1838 = vst [vmem:[#allocation2 + $0x150] sm:$0xf] %v1496
    %1839 = vst [vmem:[#allocation2 + $0x158] sm:$0xf] %v1499
    %1840 = vst [vmem:[#allocation2 + $0x140] sm:$0xf0] %v1521
    %1841 = vst [vmem:[#allocation2 + $0x148] sm:$0xf0] %v1522
    %1842 = vst [vmem:[#allocation2 + $0x150] sm:$0xf0] %v1523
    %1843 = vst [vmem:[#allocation2 + $0x158] sm:$0xf0] %v1520
    %1844 = vst [vmem:[#allocation2 + $0x160] sm:$0xf] %v1542
    %1845 = vst [vmem:[#allocation2 + $0x168] sm:$0xf] %v1541
    %1846 = vst [vmem:[#allocation2 + $0x170] sm:$0xf] %v1540
    %1847 = vst [vmem:[#allocation2 + $0x178] sm:$0xf] %v1543
    %1848 = vst [vmem:[#allocation2 + $0x160] sm:$0xf0] %v1565
    %1849 = vst [vmem:[#allocation2 + $0x168] sm:$0xf0] %v1566
    %1850 = vst [vmem:[#allocation2 + $0x170] sm:$0xf0] %v1567
    %1851 = vst [vmem:[#allocation2 + $0x178] sm:$0xf0] %v1564
    %1852 = vst [vmem:[#allocation2 + $0x180] sm:$0xf] %v1586
    %1853 = vst [vmem:[#allocation2 + $0x188] sm:$0xf] %v1585
    %1854 = vst [vmem:[#allocation2 + $0x190] sm:$0xf] %v1584
    %1855 = vst [vmem:[#allocation2 + $0x198] sm:$0xf] %v1587
    %1856 = vst [vmem:[#allocation2 + $0x180] sm:$0xf0] %v1609
    %1857 = vst [vmem:[#allocation2 + $0x188] sm:$0xf0] %v1610
    %1858 = vst [vmem:[#allocation2 + $0x190] sm:$0xf0] %v1611
    %1859 = vst [vmem:[#allocation2 + $0x198] sm:$0xf0] %v1608
    %1860 = vst [vmem:[#allocation2 + $0x1a0] sm:$0xf] %v1630
    %1861 = vst [vmem:[#allocation2 + $0x1a8] sm:$0xf] %v1629
    %1862 = vst [vmem:[#allocation2 + $0x1b0] sm:$0xf] %v1628
    %1863 = vst [vmem:[#allocation2 + $0x1b8] sm:$0xf] %v1631
    %s1864 = scalar_lea.vmem [#allocation2], 420
    %1865 = vst.msk [vmem:[%s1864] ss:$8 sm:$0xf] %vm219, %v1224
    %1866 = vst.msk [vmem:[%s1864] ss:$8 sm:$0x0] %vm219, %v1224
    %v1867 = vld [vmem:[%s1 + $0x8] sm:$0xff]
    %v1868 = vld [vmem:[#allocation2] sm:$0xff]
    %v1869 = vld [vmem:[#allocation2 + $0x8] sm:$0xff]
    %v1870 = vld [vmem:[#allocation2 + $0x10] sm:$0xff]
    %v1871 = vld [vmem:[#allocation2 + $0x18] sm:$0xff]
    %v1872 = vld [vmem:[#allocation2 + $0x20] sm:$0xff]
    %v1873 = vld [vmem:[#allocation2 + $0x28] sm:$0xff]
    %v1874 = vld [vmem:[#allocation2 + $0x30] sm:$0xff]
    %v1875 = vld [vmem:[#allocation2 + $0x38] sm:$0xff]
    %v1876 = vld [vmem:[#allocation2 + $0x40] sm:$0xff]
    %v1877 = vld [vmem:[#allocation2 + $0x48] sm:$0xff]
    %v1878 = vld [vmem:[#allocation2 + $0x50] sm:$0xff]
    %v1879 = vld [vmem:[#allocation2 + $0x58] sm:$0xff]
    %v1880 = vld [vmem:[#allocation2 + $0x60] sm:$0xff]
    %v1881 = vld [vmem:[#allocation2 + $0x68] sm:$0xff]
    %v1882 = vld [vmem:[#allocation2 + $0x70] sm:$0xff]
    %v1883 = vld [vmem:[#allocation2 + $0x78] sm:$0xff]
    %v1884 = vld [vmem:[#allocation2 + $0x80] sm:$0xff]
    %v1885 = vld [vmem:[#allocation2 + $0x88] sm:$0xff]
    %v1886 = vld [vmem:[#allocation2 + $0x90] sm:$0xff]
    %v1887 = vld [vmem:[#allocation2 + $0x98] sm:$0xff]
    %v1888 = vld [vmem:[#allocation2 + $0xa0] sm:$0xff]
    %v1889 = vld [vmem:[#allocation2 + $0xa8] sm:$0xff]
    %v1890 = vld [vmem:[#allocation2 + $0xb0] sm:$0xff]
    %v1891 = vld [vmem:[#allocation2 + $0xb8] sm:$0xff]
    %v1892 = vld [vmem:[#allocation2 + $0xc0] sm:$0xff]
    %v1893 = vld [vmem:[#allocation2 + $0xc8] sm:$0xff]
    %v1894 = vld [vmem:[#allocation2 + $0xd0] sm:$0xff]
    %v1895 = vld [vmem:[#allocation2 + $0xd8] sm:$0xff]
    %v1896 = vld [vmem:[#allocation2 + $0xe0] sm:$0xff]
    %v1897 = vld [vmem:[#allocation2 + $0xe8] sm:$0xff]
    %v1898 = vld [vmem:[#allocation2 + $0xf0] sm:$0xff]
    %v1899 = vld [vmem:[#allocation2 + $0xf8] sm:$0xff]
    %v1900 = vld [vmem:[#allocation2 + $0x100] sm:$0xff]
    %v1901 = vld [vmem:[#allocation2 + $0x108] sm:$0xff]
    %v1902 = vld [vmem:[#allocation2 + $0x110] sm:$0xff]
    %v1903 = vld [vmem:[#allocation2 + $0x118] sm:$0xff]
    %v1904 = vld [vmem:[#allocation2 + $0x120] sm:$0xff]
    %v1905 = vld [vmem:[#allocation2 + $0x128] sm:$0xff]
    %v1906 = vld [vmem:[#allocation2 + $0x130] sm:$0xff]
    %v1907 = vld [vmem:[#allocation2 + $0x138] sm:$0xff]
    %v1908 = vld [vmem:[#allocation2 + $0x140] sm:$0xff]
    %v1909 = vld [vmem:[#allocation2 + $0x148] sm:$0xff]
    %v1910 = vld [vmem:[#allocation2 + $0x150] sm:$0xff]
    %v1911 = vld [vmem:[#allocation2 + $0x158] sm:$0xff]
    %v1912 = vld [vmem:[#allocation2 + $0x160] sm:$0xff]
    %v1913 = vld [vmem:[#allocation2 + $0x168] sm:$0xff]
    %v1914 = vld [vmem:[#allocation2 + $0x170] sm:$0xff]
    %v1915 = vld [vmem:[#allocation2 + $0x178] sm:$0xff]
    %v1916 = vld [vmem:[#allocation2 + $0x180] sm:$0xff]
    %v1917 = vld [vmem:[#allocation2 + $0x188] sm:$0xff]
    %v1918 = vld [vmem:[#allocation2 + $0x190] sm:$0xff]
    %v1919 = vld [vmem:[#allocation2 + $0x198] sm:$0xff]
    %v1920 = vld [vmem:[#allocation2 + $0x1a0] sm:$0xff]
    %v1921 = vld [vmem:[#allocation2 + $0x1a8] sm:$0xff]
    %v1922 = vld [vmem:[#allocation2 + $0x1b0] sm:$0xff]
    %v1923 = vld [vmem:[#allocation2 + $0x1b8] sm:$0xff]
    %v1924 = vld [vmem:[#allocation2 + $0x1c0] sm:$0xff]
    %v1925 = vld [vmem:[#allocation2 + $0x1c8] sm:$0xff]
    %v1926 = vld [vmem:[#allocation2 + $0x1d0] sm:$0xff]
    %v1927 = vld [vmem:[#allocation2 + $0x1d8] sm:$0xff]
    %v1928 = vld [vmem:[#allocation2 + $0x1e0] sm:$0xff]
    %v1929 = vld [vmem:[#allocation2 + $0x1e8] sm:$0xff]
    %v1930 = vld [vmem:[#allocation2 + $0x1f0] sm:$0xff]
    %v1931 = vld [vmem:[#allocation2 + $0x1f8] sm:$0xff]
    %1932 = vmatprep.subr.mxu0 %v1929
    %1933 = vmatpush1.msra.mxu0 %v1928
    %1934 = vmatprep.subr.mxu0 %v1925
    %1935 = vmatpush1.msra.mxu0 %v1924
    %1936 = vmatprep.subr.mxu0 %v1921
    %1937 = vmatpush1.msra.mxu0 %v1920
    %1938 = vmatprep.subr.mxu0 %v1917
    %1939 = vmatpush1.msra.mxu0 %v1916
    %1940 = vmatprep.subr.mxu0 %v1913
    %1941 = vmatpush1.msra.mxu0 %v1912
    %1942 = vmatprep.subr.mxu0 %v1909
    %1943 = vmatpush1.msra.mxu0 %v1908
    %1944 = vmatprep.subr.mxu0 %v1905
    %1945 = vmatpush1.msra.mxu0 %v1904
    %1946 = vmatprep.subr.mxu0 %v1901
    %1947 = vmatpush1.msra.mxu0 %v1900
    %1948 = vmatprep.subr.mxu0 %v1897
    %1949 = vmatpush1.msra.mxu0 %v1896
    %1950 = vmatprep.subr.mxu0 %v1893
    %1951 = vmatpush1.msra.mxu0 %v1892
    %1952 = vmatprep.subr.mxu0 %v1889
    %1953 = vmatpush1.msra.mxu0 %v1888
    %1954 = vmatprep.subr.mxu0 %v1885
    %1955 = vmatpush1.msra.mxu0 %v1884
    %1956 = vmatprep.subr.mxu0 %v1881
    %1957 = vmatpush1.msra.mxu0 %v1880
    %1958 = vmatprep.subr.mxu0 %v1877
    %1959 = vmatpush1.msra.mxu0 %v1876
    %1960 = vmatprep.subr.mxu0 %v1873
    %1961 = vmatpush1.msra.mxu0 %v1872
    %1962 = vmatprep.subr.mxu0 %v1869
    %1963 = vmatpush1.msra.mxu0 %v1868
    %1964 = vmatprep.subr.mxu0 0.0
    %1965 = vmatpush2.msra.mxu0 0.0
    %1966 = vmatprep.subr.mxu0 0.0
    %1967 = vmatpush2.msra.mxu0 0.0
    %1968 = vmatprep.subr.mxu0 0.0
    %1969 = vmatpush2.msra.mxu0 0.0
    %1970 = vmatprep.subr.mxu0 0.0
    %1971 = vmatpush2.msra.mxu0 0.0
    %1972 = vmatprep.subr.mxu0 0.0
    %1973 = vmatpush2.msra.mxu0 0.0
    %1974 = vmatprep.subr.mxu0 0.0
    %1975 = vmatpush2.msra.mxu0 0.0
    %1976 = vmatprep.subr.mxu0 0.0
    %1977 = vmatpush2.msra.mxu0 0.0
    %1978 = vmatprep.subr.mxu0 0.0
    %1979 = vmatpush2.msra.mxu0 0.0
    %1980 = vmatprep.subr.mxu0 0.0
    %1981 = vmatpush2.msra.mxu0 0.0
    %1982 = vmatprep.subr.mxu0 0.0
    %1983 = vmatpush2.msra.mxu0 0.0
    %1984 = vmatprep.subr.mxu0 0.0
    %1985 = vmatpush2.msra.mxu0 0.0
    %1986 = vmatprep.subr.mxu0 0.0
    %1987 = vmatpush2.msra.mxu0 0.0
    %1988 = vmatprep.subr.mxu0 0.0
    %1989 = vmatpush2.msra.mxu0 0.0
    %1990 = vmatprep.subr.mxu0 0.0
    %1991 = vmatpush2.msra.mxu0 0.0
    %1992 = vmatprep.subr.mxu0 0.0
    %1993 = vmatpush2.msra.mxu0 0.0
    %1994 = vmatprep.subr.mxu0 0.0
    %1995 = vmatpush2.msra.mxu0 0.0
    %1996 = vmatprep.mubr.f32.mxu0 0.0
    %1997 = vmatmul.mubr.f32.gmra.mxu0 %v1867
    %v1998 = vpop.f32.mrf.mxu0
    %v1999 = vadd.f32 0.0, %v1998
    %v2000 = vpop.f32.mrf.mxu0
    %v2001 = vadd.f32 0.0, %v2000
    %2002 = vdwg.mxu0
    %2003 = vmatprep.subr.mxu0 %v1931
    %2004 = vmatpush1.msra.mxu0 %v1930
    %2005 = vmatprep.subr.mxu0 %v1927
    %2006 = vmatpush1.msra.mxu0 %v1926
    %2007 = vmatprep.subr.mxu0 %v1923
    %2008 = vmatpush1.msra.mxu0 %v1922
    %2009 = vmatprep.subr.mxu0 %v1919
    %2010 = vmatpush1.msra.mxu0 %v1918
    %2011 = vmatprep.subr.mxu0 %v1915
    %2012 = vmatpush1.msra.mxu0 %v1914
    %2013 = vmatprep.subr.mxu0 %v1911
    %2014 = vmatpush1.msra.mxu0 %v1910
    %2015 = vmatprep.subr.mxu0 %v1907
    %2016 = vmatpush1.msra.mxu0 %v1906
    %2017 = vmatprep.subr.mxu0 %v1903
    %2018 = vmatpush1.msra.mxu0 %v1902
    %2019 = vmatprep.subr.mxu0 %v1899
    %2020 = vmatpush1.msra.mxu0 %v1898
    %2021 = vmatprep.subr.mxu0 %v1895
    %2022 = vmatpush1.msra.mxu0 %v1894
    %2023 = vmatprep.subr.mxu0 %v1891
    %2024 = vmatpush1.msra.mxu0 %v1890
    %2025 = vmatprep.subr.mxu0 %v1887
    %2026 = vmatpush1.msra.mxu0 %v1886
    %2027 = vmatprep.subr.mxu0 %v1883
    %2028 = vmatpush1.msra.mxu0 %v1882
    %2029 = vmatprep.subr.mxu0 %v1879
    %2030 = vmatpush1.msra.mxu0 %v1878
    %2031 = vmatprep.subr.mxu0 %v1875
    %2032 = vmatpush1.msra.mxu0 %v1874
    %2033 = vmatprep.subr.mxu0 %v1871
    %2034 = vmatpush1.msra.mxu0 %v1870
    %2035 = vmatprep.subr.mxu0 0.0
    %2036 = vmatpush2.msra.mxu0 0.0
    %2037 = vmatprep.subr.mxu0 0.0
    %2038 = vmatpush2.msra.mxu0 0.0
    %2039 = vmatprep.subr.mxu0 0.0
    %2040 = vmatpush2.msra.mxu0 0.0
    %2041 = vmatprep.subr.mxu0 0.0
    %2042 = vmatpush2.msra.mxu0 0.0
    %2043 = vmatprep.subr.mxu0 0.0
    %2044 = vmatpush2.msra.mxu0 0.0
    %2045 = vmatprep.subr.mxu0 0.0
    %2046 = vmatpush2.msra.mxu0 0.0
    %2047 = vmatprep.subr.mxu0 0.0
    %2048 = vmatpush2.msra.mxu0 0.0
    %2049 = vmatprep.subr.mxu0 0.0
    %2050 = vmatpush2.msra.mxu0 0.0
    %2051 = vmatprep.subr.mxu0 0.0
    %2052 = vmatpush2.msra.mxu0 0.0
    %2053 = vmatprep.subr.mxu0 0.0
    %2054 = vmatpush2.msra.mxu0 0.0
    %2055 = vmatprep.subr.mxu0 0.0
    %2056 = vmatpush2.msra.mxu0 0.0
    %2057 = vmatprep.subr.mxu0 0.0
    %2058 = vmatpush2.msra.mxu0 0.0
    %2059 = vmatprep.subr.mxu0 0.0
    %2060 = vmatpush2.msra.mxu0 0.0
    %2061 = vmatprep.subr.mxu0 0.0
    %2062 = vmatpush2.msra.mxu0 0.0
    %2063 = vmatprep.subr.mxu0 0.0
    %2064 = vmatpush2.msra.mxu0 0.0
    %2065 = vmatprep.subr.mxu0 0.0
    %2066 = vmatpush2.msra.mxu0 0.0
    %2067 = vmatprep.mubr.f32.mxu0 0.0
    %2068 = vmatmul.mubr.f32.gmra.mxu0 %v1867
    %v2069 = vpop.f32.mrf.mxu0
    %v2070 = vadd.f32 0.0, %v2069
    %v2071 = vpop.f32.mrf.mxu0
    %v2072 = vadd.f32 0.0, %v2071
    %2073 = vdwg.mxu0
    %v2074 = vmax.f32 %v1999, 0.0
    %v2075 = vmax.f32 %v2001, 0.0
    %v2076 = vmax.f32 %v2070, 0.0
    %v2077 = vmax.f32 %v2072, 0.0
    %v2078 = vmul.f32 %v2074, %v84
    %v2079 = vmul.f32 %v2075, %v85
    %v2080 = vmul.f32 %v2076, %v86
    %v2081 = vmul.f32 %v2077, %v87
    %2082 = vrot.lane.b32.xlu0 %v2078, 73
    %v2083 = vpop.permute.xlu0 %2082
    %2084 = vrot.lane.b32.xlu0 %v2079, 73
    %v2085 = vpop.permute.xlu0 %2084
    %2086 = vrot.lane.b32.xlu0 %v2080, 73
    %v2087 = vpop.permute.xlu0 %2086
    %2088 = vrot.lane.b32.xlu0 %v2081, 73
    %v2089 = vpop.permute.xlu0 %2088
    %v2090 = vsel %vm182, %v2087, %v2089
    %v2091 = vsel %vm182, %v2085, %v2087
    %v2092 = vsel %vm182, %v2083, %v2085
    %v2093 = vsel %vm182, %v2089, %v2083
    %2094 = vst [vmem:[#allocation2] sm:$0xf] %v2093
    %2095 = vst [vmem:[#allocation2 + $0x8] sm:$0xf] %v2092
    %2096 = vst [vmem:[#allocation2 + $0x10] sm:$0xf] %v2091
    %2097 = vst [vmem:[#allocation2 + $0x18] sm:$0xf] %v2090
    %2098 = vrot.lane.b32.xlu0 %v2078, 72
    %v2099 = vpop.permute.xlu0 %2098
    %2100 = vrot.lane.b32.xlu0 %v2079, 72
    %v2101 = vpop.permute.xlu0 %2100
    %2102 = vrot.lane.b32.xlu0 %v2080, 72
    %v2103 = vpop.permute.xlu0 %2102
    %2104 = vrot.lane.b32.xlu0 %v2081, 72
    %v2105 = vpop.permute.xlu0 %2104
    %v2106 = vsel %vm230, %v2103, %v2105
    %v2107 = vsel %vm230, %v2101, %v2103
    %v2108 = vsel %vm230, %v2099, %v2101
    %v2109 = vsel %vm230, %v2105, %v2099
    %v2114 = vrot.slane %v2109, 4
    %v2115 = vrot.slane %v2108, 4
    %v2116 = vrot.slane %v2107, 4
    %v2117 = vrot.slane %v2106, 4
    %2122 = vst [vmem:[#allocation2] sm:$0xf0] %v2114
    %2123 = vst [vmem:[#allocation2 + $0x8] sm:$0xf0] %v2115
    %2124 = vst [vmem:[#allocation2 + $0x10] sm:$0xf0] %v2116
    %2125 = vst [vmem:[#allocation2 + $0x18] sm:$0xf0] %v2117
    %2126 = vrot.lane.b32.xlu0 %v2078, 71
    %v2127 = vpop.permute.xlu0 %2126
    %2128 = vrot.lane.b32.xlu0 %v2079, 71
    %v2129 = vpop.permute.xlu0 %2128
    %2130 = vrot.lane.b32.xlu0 %v2080, 71
    %v2131 = vpop.permute.xlu0 %2130
    %2132 = vrot.lane.b32.xlu0 %v2081, 71
    %v2133 = vpop.permute.xlu0 %2132
    %v2134 = vsel %vm275, %v2131, %v2133
    %v2135 = vsel %vm275, %v2129, %v2131
    %v2136 = vsel %vm275, %v2127, %v2129
    %v2137 = vsel %vm275, %v2133, %v2127
    %2138 = vst [vmem:[#allocation2 + $0x20] sm:$0xf] %v2137
    %2139 = vst [vmem:[#allocation2 + $0x28] sm:$0xf] %v2136
    %2140 = vst [vmem:[#allocation2 + $0x30] sm:$0xf] %v2135
    %2141 = vst [vmem:[#allocation2 + $0x38] sm:$0xf] %v2134
    %2142 = vrot.lane.b32.xlu0 %v2078, 65
    %v2143 = vpop.permute.xlu0 %2142
    %2144 = vrot.lane.b32.xlu0 %v2079, 65
    %v2145 = vpop.permute.xlu0 %2144
    %2146 = vrot.lane.b32.xlu0 %v2080, 65
    %v2147 = vpop.permute.xlu0 %2146
    %2148 = vrot.lane.b32.xlu0 %v2081, 65
    %v2149 = vpop.permute.xlu0 %2148
    %v2150 = vsel %vm320, %v2147, %v2149
    %v2151 = vsel %vm320, %v2145, %v2147
    %v2152 = vsel %vm320, %v2143, %v2145
    %v2153 = vsel %vm320, %v2149, %v2143
    %v2158 = vrot.slane %v2153, 4
    %v2159 = vrot.slane %v2152, 4
    %v2160 = vrot.slane %v2151, 4
    %v2161 = vrot.slane %v2150, 4
    %2166 = vst [vmem:[#allocation2 + $0x20] sm:$0xf0] %v2158
    %2167 = vst [vmem:[#allocation2 + $0x28] sm:$0xf0] %v2159
    %2168 = vst [vmem:[#allocation2 + $0x30] sm:$0xf0] %v2160
    %2169 = vst [vmem:[#allocation2 + $0x38] sm:$0xf0] %v2161
    %2170 = vrot.lane.b32.xlu0 %v2078, 64
    %v2171 = vpop.permute.xlu0 %2170
    %2172 = vrot.lane.b32.xlu0 %v2079, 64
    %v2173 = vpop.permute.xlu0 %2172
    %2174 = vrot.lane.b32.xlu0 %v2080, 64
    %v2175 = vpop.permute.xlu0 %2174
    %2176 = vrot.lane.b32.xlu0 %v2081, 64
    %v2177 = vpop.permute.xlu0 %2176
    %v2178 = vsel %vm365, %v2175, %v2177
    %v2179 = vsel %vm365, %v2173, %v2175
    %v2180 = vsel %vm365, %v2171, %v2173
    %v2181 = vsel %vm365, %v2177, %v2171
    %2182 = vst [vmem:[#allocation2 + $0x40] sm:$0xf] %v2181
    %2183 = vst [vmem:[#allocation2 + $0x48] sm:$0xf] %v2180
    %2184 = vst [vmem:[#allocation2 + $0x50] sm:$0xf] %v2179
    %2185 = vst [vmem:[#allocation2 + $0x58] sm:$0xf] %v2178
    %2186 = vrot.lane.b32.xlu0 %v2078, 63
    %v2187 = vpop.permute.xlu0 %2186
    %2188 = vrot.lane.b32.xlu0 %v2079, 63
    %v2189 = vpop.permute.xlu0 %2188
    %2190 = vrot.lane.b32.xlu0 %v2080, 63
    %v2191 = vpop.permute.xlu0 %2190
    %2192 = vrot.lane.b32.xlu0 %v2081, 63
    %v2193 = vpop.permute.xlu0 %2192
    %v2194 = vsel %vm410, %v2191, %v2193
    %v2195 = vsel %vm410, %v2189, %v2191
    %v2196 = vsel %vm410, %v2187, %v2189
    %v2197 = vsel %vm410, %v2193, %v2187
    %v2202 = vrot.slane %v2197, 4
    %v2203 = vrot.slane %v2196, 4
    %v2204 = vrot.slane %v2195, 4
    %v2205 = vrot.slane %v2194, 4
    %2210 = vst [vmem:[#allocation2 + $0x40] sm:$0xf0] %v2202
    %2211 = vst [vmem:[#allocation2 + $0x48] sm:$0xf0] %v2203
    %2212 = vst [vmem:[#allocation2 + $0x50] sm:$0xf0] %v2204
    %2213 = vst [vmem:[#allocation2 + $0x58] sm:$0xf0] %v2205
    %2214 = vrot.lane.b32.xlu0 %v2078, 57
    %v2215 = vpop.permute.xlu0 %2214
    %2216 = vrot.lane.b32.xlu0 %v2079, 57
    %v2217 = vpop.permute.xlu0 %2216
    %2218 = vrot.lane.b32.xlu0 %v2080, 57
    %v2219 = vpop.permute.xlu0 %2218
    %2220 = vrot.lane.b32.xlu0 %v2081, 57
    %v2221 = vpop.permute.xlu0 %2220
    %v2222 = vsel %vm455, %v2219, %v2221
    %v2223 = vsel %vm455, %v2217, %v2219
    %v2224 = vsel %vm455, %v2215, %v2217
    %v2225 = vsel %vm455, %v2221, %v2215
    %2226 = vst [vmem:[#allocation2 + $0x60] sm:$0xf] %v2225
    %2227 = vst [vmem:[#allocation2 + $0x68] sm:$0xf] %v2224
    %2228 = vst [vmem:[#allocation2 + $0x70] sm:$0xf] %v2223
    %2229 = vst [vmem:[#allocation2 + $0x78] sm:$0xf] %v2222
    %2230 = vrot.lane.b32.xlu0 %v2078, 56
    %v2231 = vpop.permute.xlu0 %2230
    %2232 = vrot.lane.b32.xlu0 %v2079, 56
    %v2233 = vpop.permute.xlu0 %2232
    %2234 = vrot.lane.b32.xlu0 %v2080, 56
    %v2235 = vpop.permute.xlu0 %2234
    %2236 = vrot.lane.b32.xlu0 %v2081, 56
    %v2237 = vpop.permute.xlu0 %2236
    %v2238 = vsel %vm500, %v2235, %v2237
    %v2239 = vsel %vm500, %v2233, %v2235
    %v2240 = vsel %vm500, %v2231, %v2233
    %v2241 = vsel %vm500, %v2237, %v2231
    %v2246 = vrot.slane %v2241, 4
    %v2247 = vrot.slane %v2240, 4
    %v2248 = vrot.slane %v2239, 4
    %v2249 = vrot.slane %v2238, 4
    %2254 = vst [vmem:[#allocation2 + $0x60] sm:$0xf0] %v2246
    %2255 = vst [vmem:[#allocation2 + $0x68] sm:$0xf0] %v2247
    %2256 = vst [vmem:[#allocation2 + $0x70] sm:$0xf0] %v2248
    %2257 = vst [vmem:[#allocation2 + $0x78] sm:$0xf0] %v2249
    %2258 = vrot.lane.b32.xlu0 %v2078, 55
    %v2259 = vpop.permute.xlu0 %2258
    %2260 = vrot.lane.b32.xlu0 %v2079, 55
    %v2261 = vpop.permute.xlu0 %2260
    %2262 = vrot.lane.b32.xlu0 %v2080, 55
    %v2263 = vpop.permute.xlu0 %2262
    %2264 = vrot.lane.b32.xlu0 %v2081, 55
    %v2265 = vpop.permute.xlu0 %2264
    %v2266 = vsel %vm545, %v2263, %v2265
    %v2267 = vsel %vm545, %v2261, %v2263
    %v2268 = vsel %vm545, %v2259, %v2261
    %v2269 = vsel %vm545, %v2265, %v2259
    %2270 = vst [vmem:[#allocation2 + $0x80] sm:$0xf] %v2269
    %2271 = vst [vmem:[#allocation2 + $0x88] sm:$0xf] %v2268
    %2272 = vst [vmem:[#allocation2 + $0x90] sm:$0xf] %v2267
    %2273 = vst [vmem:[#allocation2 + $0x98] sm:$0xf] %v2266
    %2274 = vrot.lane.b32.xlu0 %v2078, 9
    %v2275 = vpop.permute.xlu0 %2274
    %2276 = vrot.lane.b32.xlu0 %v2079, 9
    %v2277 = vpop.permute.xlu0 %2276
    %2278 = vrot.lane.b32.xlu0 %v2080, 9
    %v2279 = vpop.permute.xlu0 %2278
    %2280 = vrot.lane.b32.xlu0 %v2081, 9
    %v2281 = vpop.permute.xlu0 %2280
    %v2282 = vsel %vm590, %v2279, %v2281
    %v2283 = vsel %vm590, %v2277, %v2279
    %v2284 = vsel %vm590, %v2275, %v2277
    %v2285 = vsel %vm590, %v2281, %v2275
    %v2290 = vrot.slane %v2285, 4
    %v2291 = vrot.slane %v2284, 4
    %v2292 = vrot.slane %v2283, 4
    %v2293 = vrot.slane %v2282, 4
    %2298 = vst [vmem:[#allocation2 + $0x80] sm:$0xf0] %v2290
    %2299 = vst [vmem:[#allocation2 + $0x88] sm:$0xf0] %v2291
    %2300 = vst [vmem:[#allocation2 + $0x90] sm:$0xf0] %v2292
    %2301 = vst [vmem:[#allocation2 + $0x98] sm:$0xf0] %v2293
    %2302 = vrot.lane.b32.xlu0 %v2078, 8
    %v2303 = vpop.permute.xlu0 %2302
    %2304 = vrot.lane.b32.xlu0 %v2079, 8
    %v2305 = vpop.permute.xlu0 %2304
    %2306 = vrot.lane.b32.xlu0 %v2080, 8
    %v2307 = vpop.permute.xlu0 %2306
    %2308 = vrot.lane.b32.xlu0 %v2081, 8
    %v2309 = vpop.permute.xlu0 %2308
    %v2310 = vsel %vm635, %v2307, %v2309
    %v2311 = vsel %vm635, %v2305, %v2307
    %v2312 = vsel %vm635, %v2303, %v2305
    %v2313 = vsel %vm635, %v2309, %v2303
    %2314 = vst [vmem:[#allocation2 + $0xa0] sm:$0xf] %v2313
    %2315 = vst [vmem:[#allocation2 + $0xa8] sm:$0xf] %v2312
    %2316 = vst [vmem:[#allocation2 + $0xb0] sm:$0xf] %v2311
    %2317 = vst [vmem:[#allocation2 + $0xb8] sm:$0xf] %v2310
    %2318 = vrot.lane.b32.xlu0 %v2078, 7
    %v2319 = vpop.permute.xlu0 %2318
    %2320 = vrot.lane.b32.xlu0 %v2079, 7
    %v2321 = vpop.permute.xlu0 %2320
    %2322 = vrot.lane.b32.xlu0 %v2080, 7
    %v2323 = vpop.permute.xlu0 %2322
    %2324 = vrot.lane.b32.xlu0 %v2081, 7
    %v2325 = vpop.permute.xlu0 %2324
    %v2326 = vsel %vm680, %v2323, %v2325
    %v2327 = vsel %vm680, %v2321, %v2323
    %v2328 = vsel %vm680, %v2319, %v2321
    %v2329 = vsel %vm680, %v2325, %v2319
    %v2334 = vrot.slane %v2329, 4
    %v2335 = vrot.slane %v2328, 4
    %v2336 = vrot.slane %v2327, 4
    %v2337 = vrot.slane %v2326, 4
    %2342 = vst [vmem:[#allocation2 + $0xa0] sm:$0xf0] %v2334
    %2343 = vst [vmem:[#allocation2 + $0xa8] sm:$0xf0] %v2335
    %2344 = vst [vmem:[#allocation2 + $0xb0] sm:$0xf0] %v2336
    %2345 = vst [vmem:[#allocation2 + $0xb8] sm:$0xf0] %v2337
    %2346 = vrot.lane.b32.xlu0 %v2078, 1
    %v2347 = vpop.permute.xlu0 %2346
    %2348 = vrot.lane.b32.xlu0 %v2079, 1
    %v2349 = vpop.permute.xlu0 %2348
    %2350 = vrot.lane.b32.xlu0 %v2080, 1
    %v2351 = vpop.permute.xlu0 %2350
    %2352 = vrot.lane.b32.xlu0 %v2081, 1
    %v2353 = vpop.permute.xlu0 %2352
    %v2354 = vsel %vm725, %v2351, %v2353
    %v2355 = vsel %vm725, %v2349, %v2351
    %v2356 = vsel %vm725, %v2347, %v2349
    %v2357 = vsel %vm725, %v2353, %v2347
    %2358 = vst [vmem:[#allocation2 + $0xc0] sm:$0xf] %v2357
    %2359 = vst [vmem:[#allocation2 + $0xc8] sm:$0xf] %v2356
    %2360 = vst [vmem:[#allocation2 + $0xd0] sm:$0xf] %v2355
    %2361 = vst [vmem:[#allocation2 + $0xd8] sm:$0xf] %v2354
    %v2366 = vrot.slane %v2078, 4
    %v2367 = vrot.slane %v2079, 4
    %v2368 = vrot.slane %v2080, 4
    %v2369 = vrot.slane %v2081, 4
    %2374 = vst [vmem:[#allocation2 + $0xc0] sm:$0xf0] %v2366
    %2375 = vst [vmem:[#allocation2 + $0xc8] sm:$0xf0] %v2367
    %2376 = vst [vmem:[#allocation2 + $0xd0] sm:$0xf0] %v2368
    %2377 = vst [vmem:[#allocation2 + $0xd8] sm:$0xf0] %v2369
    %2378 = vrot.lane.b32.xlu0 %v2078, 127
    %v2379 = vpop.permute.xlu0 %2378
    %2380 = vrot.lane.b32.xlu0 %v2079, 127
    %v2381 = vpop.permute.xlu0 %2380
    %2382 = vrot.lane.b32.xlu0 %v2080, 127
    %v2383 = vpop.permute.xlu0 %2382
    %2384 = vrot.lane.b32.xlu0 %v2081, 127
    %v2385 = vpop.permute.xlu0 %2384
    %v2386 = vsel %vm773, %v2383, %v2385
    %v2387 = vsel %vm773, %v2381, %v2383
    %v2388 = vsel %vm773, %v2379, %v2381
    %v2389 = vsel %vm773, %v2385, %v2379
    %2390 = vst [vmem:[#allocation2 + $0xe0] sm:$0xf] %v2388
    %2391 = vst [vmem:[#allocation2 + $0xe8] sm:$0xf] %v2387
    %2392 = vst [vmem:[#allocation2 + $0xf0] sm:$0xf] %v2386
    %2393 = vst [vmem:[#allocation2 + $0xf8] sm:$0xf] %v2389
    %2394 = vrot.lane.b32.xlu0 %v2078, 121
    %v2395 = vpop.permute.xlu0 %2394
    %2396 = vrot.lane.b32.xlu0 %v2079, 121
    %v2397 = vpop.permute.xlu0 %2396
    %2398 = vrot.lane.b32.xlu0 %v2080, 121
    %v2399 = vpop.permute.xlu0 %2398
    %2400 = vrot.lane.b32.xlu0 %v2081, 121
    %v2401 = vpop.permute.xlu0 %2400
    %v2402 = vsel %vm818, %v2399, %v2401
    %v2403 = vsel %vm818, %v2397, %v2399
    %v2404 = vsel %vm818, %v2395, %v2397
    %v2405 = vsel %vm818, %v2401, %v2395
    %v2410 = vrot.slane %v2404, 4
    %v2411 = vrot.slane %v2403, 4
    %v2412 = vrot.slane %v2402, 4
    %v2413 = vrot.slane %v2405, 4
    %2418 = vst [vmem:[#allocation2 + $0xe0] sm:$0xf0] %v2410
    %2419 = vst [vmem:[#allocation2 + $0xe8] sm:$0xf0] %v2411
    %2420 = vst [vmem:[#allocation2 + $0xf0] sm:$0xf0] %v2412
    %2421 = vst [vmem:[#allocation2 + $0xf8] sm:$0xf0] %v2413
    %2422 = vrot.lane.b32.xlu0 %v2078, 120
    %v2423 = vpop.permute.xlu0 %2422
    %2424 = vrot.lane.b32.xlu0 %v2079, 120
    %v2425 = vpop.permute.xlu0 %2424
    %2426 = vrot.lane.b32.xlu0 %v2080, 120
    %v2427 = vpop.permute.xlu0 %2426
    %2428 = vrot.lane.b32.xlu0 %v2081, 120
    %v2429 = vpop.permute.xlu0 %2428
    %v2430 = vsel %vm863, %v2427, %v2429
    %v2431 = vsel %vm863, %v2425, %v2427
    %v2432 = vsel %vm863, %v2423, %v2425
    %v2433 = vsel %vm863, %v2429, %v2423
    %2434 = vst [vmem:[#allocation2 + $0x100] sm:$0xf] %v2432
    %2435 = vst [vmem:[#allocation2 + $0x108] sm:$0xf] %v2431
    %2436 = vst [vmem:[#allocation2 + $0x110] sm:$0xf] %v2430
    %2437 = vst [vmem:[#allocation2 + $0x118] sm:$0xf] %v2433
    %2438 = vrot.lane.b32.xlu0 %v2078, 119
    %v2439 = vpop.permute.xlu0 %2438
    %2440 = vrot.lane.b32.xlu0 %v2079, 119
    %v2441 = vpop.permute.xlu0 %2440
    %2442 = vrot.lane.b32.xlu0 %v2080, 119
    %v2443 = vpop.permute.xlu0 %2442
    %2444 = vrot.lane.b32.xlu0 %v2081, 119
    %v2445 = vpop.permute.xlu0 %2444
    %v2446 = vsel %vm908, %v2443, %v2445
    %v2447 = vsel %vm908, %v2441, %v2443
    %v2448 = vsel %vm908, %v2439, %v2441
    %v2449 = vsel %vm908, %v2445, %v2439
    %v2454 = vrot.slane %v2448, 4
    %v2455 = vrot.slane %v2447, 4
    %v2456 = vrot.slane %v2446, 4
    %v2457 = vrot.slane %v2449, 4
    %2462 = vst [vmem:[#allocation2 + $0x100] sm:$0xf0] %v2454
    %2463 = vst [vmem:[#allocation2 + $0x108] sm:$0xf0] %v2455
    %2464 = vst [vmem:[#allocation2 + $0x110] sm:$0xf0] %v2456
    %2465 = vst [vmem:[#allocation2 + $0x118] sm:$0xf0] %v2457
    %2466 = vst [vmem:[#allocation2 + $0x120] sm:$0xf] %v2092
    %2467 = vst [vmem:[#allocation2 + $0x128] sm:$0xf] %v2091
    %2468 = vst [vmem:[#allocation2 + $0x130] sm:$0xf] %v2090
    %2469 = vst [vmem:[#allocation2 + $0x138] sm:$0xf] %v2093
    %2470 = vst [vmem:[#allocation2 + $0x120] sm:$0xf0] %v2115
    %2471 = vst [vmem:[#allocation2 + $0x128] sm:$0xf0] %v2116
    %2472 = vst [vmem:[#allocation2 + $0x130] sm:$0xf0] %v2117
    %2473 = vst [vmem:[#allocation2 + $0x138] sm:$0xf0] %v2114
    %2474 = vst [vmem:[#allocation2 + $0x140] sm:$0xf] %v2136
    %2475 = vst [vmem:[#allocation2 + $0x148] sm:$0xf] %v2135
    %2476 = vst [vmem:[#allocation2 + $0x150] sm:$0xf] %v2134
    %2477 = vst [vmem:[#allocation2 + $0x158] sm:$0xf] %v2137
    %2478 = vst [vmem:[#allocation2 + $0x140] sm:$0xf0] %v2159
    %2479 = vst [vmem:[#allocation2 + $0x148] sm:$0xf0] %v2160
    %2480 = vst [vmem:[#allocation2 + $0x150] sm:$0xf0] %v2161
    %2481 = vst [vmem:[#allocation2 + $0x158] sm:$0xf0] %v2158
    %2482 = vst [vmem:[#allocation2 + $0x160] sm:$0xf] %v2180
    %2483 = vst [vmem:[#allocation2 + $0x168] sm:$0xf] %v2179
    %2484 = vst [vmem:[#allocation2 + $0x170] sm:$0xf] %v2178
    %2485 = vst [vmem:[#allocation2 + $0x178] sm:$0xf] %v2181
    %2486 = vst [vmem:[#allocation2 + $0x160] sm:$0xf0] %v2203
    %2487 = vst [vmem:[#allocation2 + $0x168] sm:$0xf0] %v2204
    %2488 = vst [vmem:[#allocation2 + $0x170] sm:$0xf0] %v2205
    %2489 = vst [vmem:[#allocation2 + $0x178] sm:$0xf0] %v2202
    %2490 = vst [vmem:[#allocation2 + $0x180] sm:$0xf] %v2224
    %2491 = vst [vmem:[#allocation2 + $0x188] sm:$0xf] %v2223
    %2492 = vst [vmem:[#allocation2 + $0x190] sm:$0xf] %v2222
    %2493 = vst [vmem:[#allocation2 + $0x198] sm:$0xf] %v2225
    %2494 = vst [vmem:[#allocation2 + $0x180] sm:$0xf0] %v2247
    %2495 = vst [vmem:[#allocation2 + $0x188] sm:$0xf0] %v2248
    %2496 = vst [vmem:[#allocation2 + $0x190] sm:$0xf0] %v2249
    %2497 = vst [vmem:[#allocation2 + $0x198] sm:$0xf0] %v2246
    %2498 = vst [vmem:[#allocation2 + $0x1a0] sm:$0xf] %v2268
    %2499 = vst [vmem:[#allocation2 + $0x1a8] sm:$0xf] %v2267
    %2500 = vst [vmem:[#allocation2 + $0x1b0] sm:$0xf] %v2266
    %2501 = vst [vmem:[#allocation2 + $0x1b8] sm:$0xf] %v2269
    %2502 = vst.msk [vmem:[%s1864] ss:$8 sm:$0xf] %vm219, %v1224
    %2503 = vst.msk [vmem:[%s1864] ss:$8 sm:$0x0] %vm219, %v1224
    %v2504 = vld [vmem:[%s1 + $0x10] sm:$0xff]
    %v2505 = vld [vmem:[#allocation2] sm:$0xff]
    %v2506 = vld [vmem:[#allocation2 + $0x8] sm:$0xff]
    %v2507 = vld [vmem:[#allocation2 + $0x10] sm:$0xff]
    %v2508 = vld [vmem:[#allocation2 + $0x18] sm:$0xff]
    %v2509 = vld [vmem:[#allocation2 + $0x20] sm:$0xff]
    %v2510 = vld [vmem:[#allocation2 + $0x28] sm:$0xff]
    %v2511 = vld [vmem:[#allocation2 + $0x30] sm:$0xff]
    %v2512 = vld [vmem:[#allocation2 + $0x38] sm:$0xff]
    %v2513 = vld [vmem:[#allocation2 + $0x40] sm:$0xff]
    %v2514 = vld [vmem:[#allocation2 + $0x48] sm:$0xff]
    %v2515 = vld [vmem:[#allocation2 + $0x50] sm:$0xff]
    %v2516 = vld [vmem:[#allocation2 + $0x58] sm:$0xff]
    %v2517 = vld [vmem:[#allocation2 + $0x60] sm:$0xff]
    %v2518 = vld [vmem:[#allocation2 + $0x68] sm:$0xff]
    %v2519 = vld [vmem:[#allocation2 + $0x70] sm:$0xff]
    %v2520 = vld [vmem:[#allocation2 + $0x78] sm:$0xff]
    %v2521 = vld [vmem:[#allocation2 + $0x80] sm:$0xff]
    %v2522 = vld [vmem:[#allocation2 + $0x88] sm:$0xff]
    %v2523 = vld [vmem:[#allocation2 + $0x90] sm:$0xff]
    %v2524 = vld [vmem:[#allocation2 + $0x98] sm:$0xff]
    %v2525 = vld [vmem:[#allocation2 + $0xa0] sm:$0xff]
    %v2526 = vld [vmem:[#allocation2 + $0xa8] sm:$0xff]
    %v2527 = vld [vmem:[#allocation2 + $0xb0] sm:$0xff]
    %v2528 = vld [vmem:[#allocation2 + $0xb8] sm:$0xff]
    %v2529 = vld [vmem:[#allocation2 + $0xc0] sm:$0xff]
    %v2530 = vld [vmem:[#allocation2 + $0xc8] sm:$0xff]
    %v2531 = vld [vmem:[#allocation2 + $0xd0] sm:$0xff]
    %v2532 = vld [vmem:[#allocation2 + $0xd8] sm:$0xff]
    %v2533 = vld [vmem:[#allocation2 + $0xe0] sm:$0xff]
    %v2534 = vld [vmem:[#allocation2 + $0xe8] sm:$0xff]
    %v2535 = vld [vmem:[#allocation2 + $0xf0] sm:$0xff]
    %v2536 = vld [vmem:[#allocation2 + $0xf8] sm:$0xff]
    %v2537 = vld [vmem:[#allocation2 + $0x100] sm:$0xff]
    %v2538 = vld [vmem:[#allocation2 + $0x108] sm:$0xff]
    %v2539 = vld [vmem:[#allocation2 + $0x110] sm:$0xff]
    %v2540 = vld [vmem:[#allocation2 + $0x118] sm:$0xff]
    %v2541 = vld [vmem:[#allocation2 + $0x120] sm:$0xff]
    %v2542 = vld [vmem:[#allocation2 + $0x128] sm:$0xff]
    %v2543 = vld [vmem:[#allocation2 + $0x130] sm:$0xff]
    %v2544 = vld [vmem:[#allocation2 + $0x138] sm:$0xff]
    %v2545 = vld [vmem:[#allocation2 + $0x140] sm:$0xff]
    %v2546 = vld [vmem:[#allocation2 + $0x148] sm:$0xff]
    %v2547 = vld [vmem:[#allocation2 + $0x150] sm:$0xff]
    %v2548 = vld [vmem:[#allocation2 + $0x158] sm:$0xff]
    %v2549 = vld [vmem:[#allocation2 + $0x160] sm:$0xff]
    %v2550 = vld [vmem:[#allocation2 + $0x168] sm:$0xff]
    %v2551 = vld [vmem:[#allocation2 + $0x170] sm:$0xff]
    %v2552 = vld [vmem:[#allocation2 + $0x178] sm:$0xff]
    %v2553 = vld [vmem:[#allocation2 + $0x180] sm:$0xff]
    %v2554 = vld [vmem:[#allocation2 + $0x188] sm:$0xff]
    %v2555 = vld [vmem:[#allocation2 + $0x190] sm:$0xff]
    %v2556 = vld [vmem:[#allocation2 + $0x198] sm:$0xff]
    %v2557 = vld [vmem:[#allocation2 + $0x1a0] sm:$0xff]
    %v2558 = vld [vmem:[#allocation2 + $0x1a8] sm:$0xff]
    %v2559 = vld [vmem:[#allocation2 + $0x1b0] sm:$0xff]
    %v2560 = vld [vmem:[#allocation2 + $0x1b8] sm:$0xff]
    %v2561 = vld [vmem:[#allocation2 + $0x1c0] sm:$0xff]
    %v2562 = vld [vmem:[#allocation2 + $0x1c8] sm:$0xff]
    %v2563 = vld [vmem:[#allocation2 + $0x1d0] sm:$0xff]
    %v2564 = vld [vmem:[#allocation2 + $0x1d8] sm:$0xff]
    %v2565 = vld [vmem:[#allocation2 + $0x1e0] sm:$0xff]
    %v2566 = vld [vmem:[#allocation2 + $0x1e8] sm:$0xff]
    %v2567 = vld [vmem:[#allocation2 + $0x1f0] sm:$0xff]
    %v2568 = vld [vmem:[#allocation2 + $0x1f8] sm:$0xff]
    %2569 = vmatprep.subr.mxu0 %v2566
    %2570 = vmatpush1.msra.mxu0 %v2565
    %2571 = vmatprep.subr.mxu0 %v2562
    %2572 = vmatpush1.msra.mxu0 %v2561
    %2573 = vmatprep.subr.mxu0 %v2558
    %2574 = vmatpush1.msra.mxu0 %v2557
    %2575 = vmatprep.subr.mxu0 %v2554
    %2576 = vmatpush1.msra.mxu0 %v2553
    %2577 = vmatprep.subr.mxu0 %v2550
    %2578 = vmatpush1.msra.mxu0 %v2549
    %2579 = vmatprep.subr.mxu0 %v2546
    %2580 = vmatpush1.msra.mxu0 %v2545
    %2581 = vmatprep.subr.mxu0 %v2542
    %2582 = vmatpush1.msra.mxu0 %v2541
    %2583 = vmatprep.subr.mxu0 %v2538
    %2584 = vmatpush1.msra.mxu0 %v2537
    %2585 = vmatprep.subr.mxu0 %v2534
    %2586 = vmatpush1.msra.mxu0 %v2533
    %2587 = vmatprep.subr.mxu0 %v2530
    %2588 = vmatpush1.msra.mxu0 %v2529
    %2589 = vmatprep.subr.mxu0 %v2526
    %2590 = vmatpush1.msra.mxu0 %v2525
    %2591 = vmatprep.subr.mxu0 %v2522
    %2592 = vmatpush1.msra.mxu0 %v2521
    %2593 = vmatprep.subr.mxu0 %v2518
    %2594 = vmatpush1.msra.mxu0 %v2517
    %2595 = vmatprep.subr.mxu0 %v2514
    %2596 = vmatpush1.msra.mxu0 %v2513
    %2597 = vmatprep.subr.mxu0 %v2510
    %2598 = vmatpush1.msra.mxu0 %v2509
    %2599 = vmatprep.subr.mxu0 %v2506
    %2600 = vmatpush1.msra.mxu0 %v2505
    %2601 = vmatprep.subr.mxu0 0.0
    %2602 = vmatpush2.msra.mxu0 0.0
    %2603 = vmatprep.subr.mxu0 0.0
    %2604 = vmatpush2.msra.mxu0 0.0
    %2605 = vmatprep.subr.mxu0 0.0
    %2606 = vmatpush2.msra.mxu0 0.0
    %2607 = vmatprep.subr.mxu0 0.0
    %2608 = vmatpush2.msra.mxu0 0.0
    %2609 = vmatprep.subr.mxu0 0.0
    %2610 = vmatpush2.msra.mxu0 0.0
    %2611 = vmatprep.subr.mxu0 0.0
    %2612 = vmatpush2.msra.mxu0 0.0
    %2613 = vmatprep.subr.mxu0 0.0
    %2614 = vmatpush2.msra.mxu0 0.0
    %2615 = vmatprep.subr.mxu0 0.0
    %2616 = vmatpush2.msra.mxu0 0.0
    %2617 = vmatprep.subr.mxu0 0.0
    %2618 = vmatpush2.msra.mxu0 0.0
    %2619 = vmatprep.subr.mxu0 0.0
    %2620 = vmatpush2.msra.mxu0 0.0
    %2621 = vmatprep.subr.mxu0 0.0
    %2622 = vmatpush2.msra.mxu0 0.0
    %2623 = vmatprep.subr.mxu0 0.0
    %2624 = vmatpush2.msra.mxu0 0.0
    %2625 = vmatprep.subr.mxu0 0.0
    %2626 = vmatpush2.msra.mxu0 0.0
    %2627 = vmatprep.subr.mxu0 0.0
    %2628 = vmatpush2.msra.mxu0 0.0
    %2629 = vmatprep.subr.mxu0 0.0
    %2630 = vmatpush2.msra.mxu0 0.0
    %2631 = vmatprep.subr.mxu0 0.0
    %2632 = vmatpush2.msra.mxu0 0.0
    %2633 = vmatprep.mubr.f32.mxu0 0.0
    %2634 = vmatmul.mubr.f32.gmra.mxu0 %v2504
    %v2635 = vpop.f32.mrf.mxu0
    %v2636 = vadd.f32 0.0, %v2635
    %v2637 = vpop.f32.mrf.mxu0
    %v2638 = vadd.f32 0.0, %v2637
    %2639 = vdwg.mxu0
    %2640 = vmatprep.subr.mxu0 %v2568
    %2641 = vmatpush1.msra.mxu0 %v2567
    %2642 = vmatprep.subr.mxu0 %v2564
    %2643 = vmatpush1.msra.mxu0 %v2563
    %2644 = vmatprep.subr.mxu0 %v2560
    %2645 = vmatpush1.msra.mxu0 %v2559
    %2646 = vmatprep.subr.mxu0 %v2556
    %2647 = vmatpush1.msra.mxu0 %v2555
    %2648 = vmatprep.subr.mxu0 %v2552
    %2649 = vmatpush1.msra.mxu0 %v2551
    %2650 = vmatprep.subr.mxu0 %v2548
    %2651 = vmatpush1.msra.mxu0 %v2547
    %2652 = vmatprep.subr.mxu0 %v2544
    %2653 = vmatpush1.msra.mxu0 %v2543
    %2654 = vmatprep.subr.mxu0 %v2540
    %2655 = vmatpush1.msra.mxu0 %v2539
    %2656 = vmatprep.subr.mxu0 %v2536
    %2657 = vmatpush1.msra.mxu0 %v2535
    %2658 = vmatprep.subr.mxu0 %v2532
    %2659 = vmatpush1.msra.mxu0 %v2531
    %2660 = vmatprep.subr.mxu0 %v2528
    %2661 = vmatpush1.msra.mxu0 %v2527
    %2662 = vmatprep.subr.mxu0 %v2524
    %2663 = vmatpush1.msra.mxu0 %v2523
    %2664 = vmatprep.subr.mxu0 %v2520
    %2665 = vmatpush1.msra.mxu0 %v2519
    %2666 = vmatprep.subr.mxu0 %v2516
    %2667 = vmatpush1.msra.mxu0 %v2515
    %2668 = vmatprep.subr.mxu0 %v2512
    %2669 = vmatpush1.msra.mxu0 %v2511
    %2670 = vmatprep.subr.mxu0 %v2508
    %2671 = vmatpush1.msra.mxu0 %v2507
    %2672 = vmatprep.subr.mxu0 0.0
    %2673 = vmatpush2.msra.mxu0 0.0
    %2674 = vmatprep.subr.mxu0 0.0
    %2675 = vmatpush2.msra.mxu0 0.0
    %2676 = vmatprep.subr.mxu0 0.0
    %2677 = vmatpush2.msra.mxu0 0.0
    %2678 = vmatprep.subr.mxu0 0.0
    %2679 = vmatpush2.msra.mxu0 0.0
    %2680 = vmatprep.subr.mxu0 0.0
    %2681 = vmatpush2.msra.mxu0 0.0
    %2682 = vmatprep.subr.mxu0 0.0
    %2683 = vmatpush2.msra.mxu0 0.0
    %2684 = vmatprep.subr.mxu0 0.0
    %2685 = vmatpush2.msra.mxu0 0.0
    %2686 = vmatprep.subr.mxu0 0.0
    %2687 = vmatpush2.msra.mxu0 0.0
    %2688 = vmatprep.subr.mxu0 0.0
    %2689 = vmatpush2.msra.mxu0 0.0
    %2690 = vmatprep.subr.mxu0 0.0
    %2691 = vmatpush2.msra.mxu0 0.0
    %2692 = vmatprep.subr.mxu0 0.0
    %2693 = vmatpush2.msra.mxu0 0.0
    %2694 = vmatprep.subr.mxu0 0.0
    %2695 = vmatpush2.msra.mxu0 0.0
    %2696 = vmatprep.subr.mxu0 0.0
    %2697 = vmatpush2.msra.mxu0 0.0
    %2698 = vmatprep.subr.mxu0 0.0
    %2699 = vmatpush2.msra.mxu0 0.0
    %2700 = vmatprep.subr.mxu0 0.0
    %2701 = vmatpush2.msra.mxu0 0.0
    %2702 = vmatprep.subr.mxu0 0.0
    %2703 = vmatpush2.msra.mxu0 0.0
    %2704 = vmatprep.mubr.f32.mxu0 0.0
    %2705 = vmatmul.mubr.f32.gmra.mxu0 %v2504
    %v2706 = vpop.f32.mrf.mxu0
    %v2707 = vadd.f32 0.0, %v2706
    %v2708 = vpop.f32.mrf.mxu0
    %v2709 = vadd.f32 0.0, %v2708
    %2710 = vdwg.mxu0
    %v2711 = vmul.f32 %v2636, %v84
    %v2712 = vmul.f32 %v2638, %v85
    %v2713 = vmul.f32 %v2707, %v86
    %v2714 = vmul.f32 %v2709, %v87
    %v2715 = vmax.f32 %v2711, 0.0
    %v2716 = vmax.f32 %v2712, 0.0
    %v2717 = vmax.f32 %v2713, 0.0
    %v2718 = vmax.f32 %v2714, 0.0
    %v2719 = vand.u32 2147483647, %v2711
    %v2720 = vand.u32 2147483647, %v2712
    %v2721 = vand.u32 2147483647, %v2713
    %v2722 = vand.u32 2147483647, %v2714
    %v2723 = vsub.f32 0.0, %v2719
    %v2724 = vsub.f32 0.0, %v2720
    %v2725 = vsub.f32 0.0, %v2721
    %v2726 = vsub.f32 0.0, %v2722
    %v2727 = vmul.f32 %v2723, 1.442695
    %v2728 = vpow.pop %v2727
    %v2729 = vmul.f32 %v2724, 1.442695
    %v2730 = vpow.pop %v2729
    %v2731 = vmul.f32 %v2725, 1.442695
    %v2732 = vpow.pop %v2731
    %v2733 = vmul.f32 %v2726, 1.442695
    %v2734 = vpow.pop %v2733
    %v2735 = vadd.f32 %v2728, 1.0
    %v2736 = vadd.f32 %v2730, 1.0
    %v2737 = vadd.f32 %v2732, 1.0
    %v2738 = vadd.f32 %v2734, 1.0
    %v2739 = vlog2.pop %v2735
    %v2740 = vmul.f32 %v2739, 0.6931472
    %v2741 = vlog2.pop %v2736
    %v2742 = vmul.f32 %v2741, 0.6931472
    %v2743 = vlog2.pop %v2737
    %v2744 = vmul.f32 %v2743, 0.6931472
    %v2745 = vlog2.pop %v2738
    %v2746 = vmul.f32 %v2745, 0.6931472
    %v2747 = vadd.f32 %v2715, %v2740
    %v2748 = vadd.f32 %v2716, %v2742
    %v2749 = vadd.f32 %v2717, %v2744
    %v2750 = vadd.f32 %v2718, %v2746
    %v2751 = vsub.f32 %v2747, %v2711
    %v2752 = vsub.f32 %v2748, %v2712
    %v2753 = vsub.f32 %v2749, %v2713
    %v2754 = vsub.f32 %v2750, %v2714
    %v2759 = vcombine.low %v2751, %v2752
    %v2760 = vcombine.low %v2753, %v2754
    %v2762 = vunpack.c.l.s4 1966171168
    %v2763 = vunpack.c.0.s8 %v2762
    %v2764 = vlaneseq
    %v2765 = vshrl.u32 %v2764, 7
    %v2766 = vsub.s32 %v2763, %v2765
    %v2767 = vrot.slane %v2759, %v2766
    %v2769 = vunpack.c.l.s4 1966171168
    %v2770 = vunpack.c.0.s8 %v2769
    %v2771 = vlaneseq
    %v2772 = vshrl.u32 %v2771, 7
    %v2773 = vsub.s32 %v2770, %v2772
    %v2774 = vrot.slane %v2760, %v2773
    %v2775 = vcombine.low %v2767, %v2774
    %v2777 = vunpack.c.l.s4 1966171168
    %v2778 = vunpack.c.0.s8 %v2777
    %v2779 = vlaneseq
    %v2780 = vshrl.u32 %v2779, 7
    %v2781 = vsub.s32 %v2778, %v2780
    %v2782 = vrot.slane %v2775, %v2781
    %v2784 = vmul.f32 %v152, %v2782
    %v2785 = vsub.f32 1.0, %v152
    %v2790 = vcombine.low %v2747, %v2748
    %v2791 = vcombine.low %v2749, %v2750
    %v2793 = vunpack.c.l.s4 1966171168
    %v2794 = vunpack.c.0.s8 %v2793
    %v2795 = vlaneseq
    %v2796 = vshrl.u32 %v2795, 7
    %v2797 = vsub.s32 %v2794, %v2796
    %v2798 = vrot.slane %v2790, %v2797
    %v2800 = vunpack.c.l.s4 1966171168
    %v2801 = vunpack.c.0.s8 %v2800
    %v2802 = vlaneseq
    %v2803 = vshrl.u32 %v2802, 7
    %v2804 = vsub.s32 %v2801, %v2803
    %v2805 = vrot.slane %v2791, %v2804
    %v2806 = vcombine.low %v2798, %v2805
    %v2808 = vunpack.c.l.s4 1966171168
    %v2809 = vunpack.c.0.s8 %v2808
    %v2810 = vlaneseq
    %v2811 = vshrl.u32 %v2810, 7
    %v2812 = vsub.s32 %v2809, %v2811
    %v2813 = vrot.slane %v2806, %v2812
    %v2815 = vmul.f32 %v2785, %v2813
    %v2816 = vadd.f32 %v2784, %v2815
    %v2817 = vmul.f32 %v2816, %v1224
    %v2819 = vlaneseq
    %v2820 = vshrl.u32 %v2819, 7
    %v2821 = vsub.s32 0, %v2820
    %v2822 = vrot.slane %v2817, %v2821
    %v2823 = vlaneseq
    %v2824 = vshrl.u32 %v2823, 7
    %v2825 = vsub.s32 1, %v2824
    %v2826 = vrot.slane %v2817, %v2825
    %v2827 = vlaneseq
    %v2828 = vshrl.u32 %v2827, 7
    %v2829 = vsub.s32 2, %v2828
    %v2830 = vrot.slane %v2817, %v2829
    %v2831 = vlaneseq
    %v2832 = vshrl.u32 %v2831, 7
    %v2833 = vsub.s32 3, %v2832
    %v2834 = vrot.slane %v2817, %v2833
    %vm2839 = vcmask 1040384
    %v2840 = vsel %vm2839, %v2822, 0.0
    %v2841 = vsel %vm2839, %v2826, 0.0
    %v2842 = vadd.f32 %v2840, %v2841
    %v2843 = vsel %vm2839, %v2830, 0.0
    %v2844 = vadd.f32 %v2842, %v2843
    %v2845 = vsel %vm2839, %v2834, 0.0
    %v2846 = vadd.f32 %v2844, %v2845
    %2847 = vadd.xlane.f32.xlu0 %v2846
    %v2848 = vpop.xlane.xlu0 %2847
    %v2849 = vrot.slane %v2848, 4
    %v2850 = vadd.f32 %v2848, %v2849
    %v2851 = vrot.slane %v2850, 2
    %v2852 = vadd.f32 %v2850, %v2851
    %v2853 = vrot.slane %v2852, 1
    %v2854 = vadd.f32 %v2852, %v2853
    %s2855 = vtos %v2854
    %s2856 = smul.f32 %s2855, 1.442695
    %s2857 = scalar_lea.smem [#allocation3], 0
    %2858 = sst [smem:[%s2857]] %s2856
    %v2859 = vcombine.low %v1440, %v1441
    %v2860 = vcombine.low %v1442, %v1443
    %2863 = vst [vmem:[%s3] sm:$0xff] %v2859
    %2864 = vst [vmem:[%s3 + $0x8] sm:$0xff] %v2860
    %v2869 = vcombine.low %v2711, %v2712
    %v2870 = vcombine.low %v2713, %v2714
    %v2872 = vunpack.c.l.s4 1966171168
    %v2873 = vunpack.c.0.s8 %v2872
    %v2874 = vlaneseq
    %v2875 = vshrl.u32 %v2874, 7
    %v2876 = vsub.s32 %v2873, %v2875
    %v2877 = vrot.slane %v2869, %v2876
    %v2879 = vunpack.c.l.s4 1966171168
    %v2880 = vunpack.c.0.s8 %v2879
    %v2881 = vlaneseq
    %v2882 = vshrl.u32 %v2881, 7
    %v2883 = vsub.s32 %v2880, %v2882
    %v2884 = vrot.slane %v2870, %v2883
    %v2885 = vcombine.low %v2877, %v2884
    %v2887 = vunpack.c.l.s4 1966171168
    %v2888 = vunpack.c.0.s8 %v2887
    %v2889 = vlaneseq
    %v2890 = vshrl.u32 %v2889, 7
    %v2891 = vsub.s32 %v2888, %v2890
    %v2892 = vrot.slane %v2885, %v2891
    %2894 = vst.msk [vmem:[%s4] sm:$0xf] %vm219, %v2892
    // Predicated region
    $region10: #{a_call__.1} parent=1 // pred_check
      _
    $region11: #{a_call__.1} parent=1 // pred_check_branch
      %2896 = sbr.rel (0) target = $region13
    $region12: #{a_call__.1} parent=1 // pred_region
      %s2898 = ssub.s32 16, 16
      %2899 = vsyncadd [#allocation4], %s2898
      %2902 = dma.smem_to_hbm [#allocation3], 16, %s2, [#allocation4]
    $region13: #{a_call__.1} parent=1 // pred_fallthru
      _
    // Predicated region
    $region14: #{a_call__.1} parent=1 // pred_check
      _
    $region15: #{a_call__.1} parent=1 // pred_check_branch
      %2904 = sbr.rel (0) target = $region17
    $region16: #{a_call__.1} parent=1 // pred_region
      _
    $region17: #{a_call__.1} parent=1 // pred_fallthru
      _
    // Predicated region
    $region18: #{a_call__.1} parent=1 // pred_check
      _
    $region19: #{a_call__.1} parent=1 // pred_check_branch
      %2906 = sbr.rel (0) target = $region21
    $region20: #{a_call__.1} parent=1 // pred_region
      _
    $region21: #{a_call__.1} parent=1 // pred_fallthru
      _
    // Predicated region
    $region22: #{a_call__.1} parent=1 // pred_check
      _
    $region23: #{a_call__.1} parent=1 // pred_check_branch
      %2908 = sbr.rel (0) target = $region25
    $region24: #{a_call__.1} parent=1 // pred_region
      %2909 = dma.done [#allocation4], 16
    $region25: #{a_call__.1} parent=1 // pred_fallthru
      _
    // Predicated region
    $region26: #{a_call__.1} parent=1 // pred_check
      _
    $region27: #{a_call__.1} parent=1 // pred_check_branch
      %2911 = sbr.rel (0) target = $region29
    $region28: #{a_call__.1} parent=1 // pred_region
      _
    $region29: #{a_call__.1} parent=1 // pred_fallthru
      _
    // Predicated region
    $region30: #{a_call__.1} parent=1 // pred_check
      _
    $region31: #{a_call__.1} parent=1 // pred_check_branch
      %2913 = sbr.rel (0) target = $region33
    $region32: #{a_call__.1} parent=1 // pred_region
      _
    $region33: #{a_call__.1} parent=1 // pred_fallthru
      _
    %2914 = sfence
    %2915 = vsyncpa [#allocation4], 1

</llo_original>
